<compile_context>
chip_gen: v7x
topology: tpu7x:2x2x1
jax: 0.10.0
libtpu: 0.0.40
codegen_flags: <defaults>
</compile_context>

<pallas_src>
import math
import functools

import jax
import jax.numpy as jnp
from jax import lax
from jax.experimental import pallas as pl
from jax.experimental.pallas import tpu as pltpu

# ----------------------------- config --------------------------------------
N_HEAD = 6
N_EMBD = 48                      # must be divisible by N_HEAD
HEAD_SIZE = N_EMBD // N_HEAD     # 8
BATCH = 2
SEQ = 8
EPS = 1e-5                       # nn.LayerNorm default eps
NEG_BIAS = -1e30                 # additive causal-mask bias (exp underflows to 0)


# ----------------------------- kernel helpers -------------------------------
def _layernorm_nobias(x, w):
    # x: (M, C), w: (1, C) -> (M, C)   (LayerNorm(bias=False): scale only)
    mu = jnp.mean(x, axis=-1, keepdims=True)
    xc = x - mu
    var = jnp.mean(xc * xc, axis=-1, keepdims=True)
    return xc * lax.rsqrt(var + EPS) * w


def _gelu_exact(x):
    # nn.GELU() default (approximate='none'): 0.5*x*(1+erf(x/sqrt(2)))
    return 0.5 * x * (1.0 + lax.erf(x * (1.0 / math.sqrt(2.0))))


# ----------------------------- kernel ---------------------------------------
def block_kernel(x_ref, ln1w_ref, ln2w_ref,
                 wqkv_ref, wproj_ref, bproj_ref,
                 w1_ref, w2_ref,
                 o_ref,
                 *, n_head: int, seq_len: int):
    x = x_ref[...]                       # (M, C) with M = batches_per_step * T
    M, C = x.shape
    T = seq_len
    n_batch = M // T                     # 1 or 2 (static)
    hs = C // n_head
    scale = 1.0 / math.sqrt(hs)          # SDPA default scale = 1/sqrt(head_dim)

    ln1w = ln1w_ref[...]                 # (1, C)
    ln2w = ln2w_ref[...]                 # (1, C)
    wqkv = wqkv_ref[...]                 # (3H, C, hs)  per-head Wq/Wk/Wv stacks
    wproj = wproj_ref[...]               # (H, hs, C)   head-major rows of Wproj^T

    # Causal additive bias, built ONCE (hoisted out of head/batch loops).
    row = lax.broadcasted_iota(jnp.int32, (T, T), 0)
    col = lax.broadcasted_iota(jnp.int32, (T, T), 1)
    bias = jnp.where(row >= col, 0.0, NEG_BIAS).astype(jnp.float32)   # (T, T)

    # ---- self-attention branch ----
    h1 = _layernorm_nobias(x, ln1w)                                   # (M, C)

    # Head-batched QKV projection: (3H, M, C) x (3H, C, hs) -> (3H, M, hs).
    # Heads live on the leading (batch/loop) axis, never on lanes.
    h1b = jnp.broadcast_to(h1[None], (3 * n_head, M, C))
    qkv = lax.dot_general(h1b, wqkv,
                          dimension_numbers=(((2,), (1,)), ((0,), (0,))),
                          preferred_element_type=jnp.float32)         # (3H, M, hs)

    sa_rows = []
    for b in range(n_batch):             # static, 1 or 2 iterations (unrolled)
        r0, r1 = b * T, (b + 1) * T      # sublane-aligned row slices (T == 8)
        q3 = qkv[0 * n_head:1 * n_head, r0:r1, :]                     # (H, T, hs)
        k3 = qkv[1 * n_head:2 * n_head, r0:r1, :]
        v3 = qkv[2 * n_head:3 * n_head, r0:r1, :]

        s = lax.dot_general(q3, k3,
                            dimension_numbers=(((2,), (2,)), ((0,), (0,))),
                            preferred_element_type=jnp.float32)       # (H, T, T)
        s = s * scale + bias[None]
        s = s - jnp.max(s, axis=-1, keepdims=True)                    # stable softmax
        p = jnp.exp(s)
        p = p / jnp.sum(p, axis=-1, keepdims=True)

        att3 = lax.dot_general(p, v3,
                               dimension_numbers=(((2,), (1,)), ((0,), (0,))),
                               preferred_element_type=jnp.float32)    # (H, T, hs)

        # Per-head accumulation straight into the output projection:
        # sum_h att_h @ Wproj_T[h*hs:(h+1)*hs, :]  -- no lane concat anywhere.
        sa_h = lax.dot_general(att3, wproj,
                               dimension_numbers=(((2,), (1,)), ((0,), (0,))),
                               preferred_element_type=jnp.float32)    # (H, T, C)
        sa_rows.append(jnp.sum(sa_h, axis=0))                         # (T, C)

    sa = sa_rows[0] if n_batch == 1 else jnp.concatenate(sa_rows, axis=0)
    x2 = x + sa + bproj_ref[...]                                      # residual 1

    # ---- feed-forward branch (runs on the full (M, C) slab) ----
    h2 = _layernorm_nobias(x2, ln2w)
    f1 = _gelu_exact(jnp.dot(h2, w1_ref[...],
                             preferred_element_type=jnp.float32))     # (M, 4C)
    ff = jnp.dot(f1, w2_ref[...], preferred_element_type=jnp.float32) # (M, C)

    o_ref[...] = (x2 + ff).astype(o_ref.dtype)                        # residual 2


# ----------------------------- wrapper ---------------------------------------
def _tensorcores_per_chip():
    # v7x has 2 TensorCores per chip; v5e/v6e have 1. Fallback: 1.
    try:
        kind = jax.devices()[0].device_kind.lower()
    except Exception:
        return 1
    return 2 if "v7" in kind else 1


def transformer_block(x, params):
    """x: (B, T, C) float32. params: dict of pre-arranged weights (see main)."""
    B, T, C = x.shape
    H = N_HEAD
    hs = C // H
    M = B * T

    # Grid choice: on a 1-TC chip the grid is a serial loop, so do the whole
    # batch in one step (halves pipeline overhead, doubles M per matmul).
    # On v7x keep one batch element per grid step so both TCs are used.
    n_steps = _tensorcores_per_chip()
    if B % n_steps != 0:
        n_steps = 1
    rows = M // n_steps

    xf = x.reshape(M, C)   # lane layout unchanged; merges (B, T) on sublanes

    def full(shape):
        return pl.BlockSpec(shape, lambda i, _s=len(shape): (0,) * _s)

    kernel = functools.partial(block_kernel, n_head=H, seq_len=T)
    out = pl.pallas_call(
        kernel,
        out_shape=jax.ShapeDtypeStruct((M, C), x.dtype),
        grid_spec=pltpu.PrefetchScalarGridSpec(
            num_scalar_prefetch=0,
            grid=(n_steps,),
            in_specs=[
                pl.BlockSpec((rows, C), lambda i: (i, 0)),  # x rows
                full((1, C)),                                # ln1 weight
                full((1, C)),                                # ln2 weight
                full((3 * H, C, hs)),                        # per-head Wq/Wk/Wv
                full((H, hs, C)),                            # Wproj^T, head-major
                full((1, C)),                                # proj bias
                full((C, 4 * C)),                            # W1^T  (C -> 4C)
                full((4 * C, C)),                            # W2^T  (4C -> C)
            ],
            out_specs=pl.BlockSpec((rows, C), lambda i: (i, 0)),
        ),
        compiler_params=pltpu.CompilerParams(
            dimension_semantics=("parallel",)),
    )(xf,
      params["ln1_w"], params["ln2_w"],
      params["wqkv3"], params["wproj3"], params["bproj"],
      params["w1_t"], params["w2_t"])
    return out.reshape(B, T, C)


# ----------------------------- reference (pure JAX) --------------------------
def reference_block(x, p):
    B, T, C = x.shape
    H = N_HEAD
    hs = C // H

    def ln(h, w):
        mu = jnp.mean(h, axis=-1, keepdims=True)
        var = jnp.mean((h - mu) ** 2, axis=-1, keepdims=True)
        return (h - mu) / jnp.sqrt(var + EPS) * w[0]

    h1 = ln(x, p["ln1_w"])
    wq, wk, wv = (p["wqkv3"][0:H], p["wqkv3"][H:2 * H], p["wqkv3"][2 * H:3 * H])
    q = jnp.einsum("btc,hcd->bhtd", h1, wq)
    k = jnp.einsum("btc,hcd->bhtd", h1, wk)
    v = jnp.einsum("btc,hcd->bhtd", h1, wv)
    s = jnp.einsum("bhtd,bhsd->bhts", q, k) / math.sqrt(hs)
    mask = jnp.tril(jnp.ones((T, T), bool))
    s = jnp.where(mask, s, -jnp.inf)
    p_att = jax.nn.softmax(s, axis=-1)
    att = jnp.einsum("bhts,bhsd->bhtd", p_att, v)
    att = att.transpose(0, 2, 1, 3).reshape(B, T, C)
    wproj_t = p["wproj3"].reshape(C, C)
    sa = att @ wproj_t + p["bproj"][0]
    x2 = x + sa
    h2 = ln(x2, p["ln2_w"])
    pre = h2 @ p["w1_t"]
    ff = (0.5 * pre * (1.0 + lax.erf(pre / math.sqrt(2.0)))) @ p["w2_t"]
    return x2 + ff


# ----------------------------- main ------------------------------------------
if __name__ == "__main__":
    key = jax.random.PRNGKey(0)
    ks = jax.random.split(key, 8)
    C, C4, H, hs = N_EMBD, 4 * N_EMBD, N_HEAD, HEAD_SIZE

    def init(k, shape, fan_in):
        bound = 1.0 / math.sqrt(fan_in)
        return jax.random.uniform(k, shape, jnp.float32, -bound, bound)

    # Per-head Q/K/V weights stacked head-major: (3H, C, hs) — transposed
    # nn.Linear weights (x @ W). Wproj^T is stored head-major as (H, hs, C)
    # so the kernel accumulates head outputs directly into the projection.
    # LayerNorm weights perturbed from 1.0 so the scale actually gets exercised.
    params = {
        "ln1_w": 1.0 + 0.1 * jax.random.normal(ks[6], (1, C), jnp.float32),
        "ln2_w": 1.0 + 0.1 * jax.random.normal(ks[7], (1, C), jnp.float32),
        "wqkv3": init(ks[0], (3 * H, C, hs), C),
        "wproj3": init(ks[1], (H, hs, C), C),
        "bproj": init(ks[2], (1, C), C),
        "w1_t": init(ks[3], (C, C4), C),
        "w2_t": init(ks[4], (C4, C), C4),
    }

    x = jax.random.normal(ks[5], (BATCH, SEQ, C), jnp.float32)

    out = jax.block_until_ready(transformer_block(x, params))
    ref = reference_block(x, params)

    assert out.shape == (BATCH, SEQ, C)
    assert jnp.allclose(out, ref, atol=1e-4, rtol=1e-4), \
        f"max err {jnp.max(jnp.abs(out - ref))}"

    print("KERNEL_OK")
</pallas_src>

<mosaic_0001>
module attributes {stable_mosaic.version = 11 : i64} {
  func.func @block_kernel(%arg0: i32, %arg1: memref<16x48xf32, #tpu.memory_space<vmem>>, %arg2: memref<1x48xf32, #tpu.memory_space<vmem>>, %arg3: memref<1x48xf32, #tpu.memory_space<vmem>>, %arg4: memref<18x48x8xf32, #tpu.memory_space<vmem>>, %arg5: memref<6x8x48xf32, #tpu.memory_space<vmem>>, %arg6: memref<1x48xf32, #tpu.memory_space<vmem>>, %arg7: memref<48x192xf32, #tpu.memory_space<vmem>>, %arg8: memref<192x48xf32, #tpu.memory_space<vmem>>, %arg9: memref<16x48xf32, #tpu.memory_space<vmem>>) attributes {dimension_semantics = [#tpu.dimension_semantics<parallel>], iteration_bounds = array<i64: 1>, scalar_prefetch = 0 : i64, scratch_operands = 0 : i64, tpu.core_type = #tpu.core_type<tc>, window_params = [{transform_indices = @transform_0, window_bounds = array<i64: 16, 48>}, {pipeline_mode = #tpu.pipeline_mode<synchronous>, transform_indices = @transform_1, window_bounds = array<i64: 1, 48>}, {pipeline_mode = #tpu.pipeline_mode<synchronous>, transform_indices = @transform_2, window_bounds = array<i64: 1, 48>}, {pipeline_mode = #tpu.pipeline_mode<synchronous>, transform_indices = @transform_3, window_bounds = array<i64: 18, 48, 8>}, {pipeline_mode = #tpu.pipeline_mode<synchronous>, transform_indices = @transform_4, window_bounds = array<i64: 6, 8, 48>}, {pipeline_mode = #tpu.pipeline_mode<synchronous>, transform_indices = @transform_5, window_bounds = array<i64: 1, 48>}, {pipeline_mode = #tpu.pipeline_mode<synchronous>, transform_indices = @transform_6, window_bounds = array<i64: 48, 192>}, {pipeline_mode = #tpu.pipeline_mode<synchronous>, transform_indices = @transform_7, window_bounds = array<i64: 192, 48>}, {transform_indices = @transform_8, window_bounds = array<i64: 16, 48>}]} {
    %c0 = arith.constant 0 : index
    %c0_0 = arith.constant 0 : index
    %0 = vector.load %arg1[%c0, %c0_0] : memref<16x48xf32, #tpu.memory_space<vmem>>, vector<16x48xf32>
    %c0_1 = arith.constant 0 : index
    %c0_2 = arith.constant 0 : index
    %1 = vector.load %arg2[%c0_1, %c0_2] : memref<1x48xf32, #tpu.memory_space<vmem>>, vector<1x48xf32>
    %c0_3 = arith.constant 0 : index
    %c0_4 = arith.constant 0 : index
    %2 = vector.load %arg3[%c0_3, %c0_4] : memref<1x48xf32, #tpu.memory_space<vmem>>, vector<1x48xf32>
    %c0_5 = arith.constant 0 : index
    %c0_6 = arith.constant 0 : index
    %c0_7 = arith.constant 0 : index
    %3 = vector.load %arg4[%c0_5, %c0_6, %c0_7] : memref<18x48x8xf32, #tpu.memory_space<vmem>>, vector<18x48x8xf32>
    %c0_8 = arith.constant 0 : index
    %c0_9 = arith.constant 0 : index
    %c0_10 = arith.constant 0 : index
    %4 = vector.load %arg5[%c0_8, %c0_9, %c0_10] : memref<6x8x48xf32, #tpu.memory_space<vmem>>, vector<6x8x48xf32>
    %5 = tpu.iota {dimensions = array<i32: 0>} : vector<8x8xi32>
    %6 = tpu.iota {dimensions = array<i32: 1>} : vector<8x8xi32>
    %7 = arith.cmpi sge, %5, %6 : vector<8x8xi32>
    %cst = arith.constant 0.000000e+00 : f32
    %cst_11 = arith.constant -1.000000e+30 : f32
    %8 = vector.broadcast %cst : f32 to vector<8x8xf32>
    %9 = vector.broadcast %cst_11 : f32 to vector<8x8xf32>
    %10 = arith.select %7, %8, %9 : vector<8x8xi1>, vector<8x8xf32>
    %cst_12 = arith.constant dense<0.000000e+00> : vector<16xf32>
    %11 = vector.multi_reduction <add>, %0, %cst_12 [1] : vector<16x48xf32> to vector<16xf32>
    %12 = vector.shape_cast %11 : vector<16xf32> to vector<16x1xf32>
    %cst_13 = arith.constant 4.800000e+01 : f32
    %13 = vector.broadcast %cst_13 : f32 to vector<16x1xf32>
    %14 = arith.divf %12, %13 : vector<16x1xf32>
    %15 = vector.broadcast %14 : vector<16x1xf32> to vector<16x48xf32>
    %16 = arith.subf %0, %15 : vector<16x48xf32>
    %17 = arith.mulf %16, %16 : vector<16x48xf32>
    %cst_14 = arith.constant dense<0.000000e+00> : vector<16xf32>
    %18 = vector.multi_reduction <add>, %17, %cst_14 [1] : vector<16x48xf32> to vector<16xf32>
    %19 = vector.shape_cast %18 : vector<16xf32> to vector<16x1xf32>
    %cst_15 = arith.constant 4.800000e+01 : f32
    %20 = vector.broadcast %cst_15 : f32 to vector<16x1xf32>
    %21 = arith.divf %19, %20 : vector<16x1xf32>
    %cst_16 = arith.constant 9.99999974E-6 : f32
    %22 = vector.broadcast %cst_16 : f32 to vector<16x1xf32>
    %23 = arith.addf %21, %22 : vector<16x1xf32>
    %24 = math.rsqrt %23 : vector<16x1xf32>
    %25 = vector.broadcast %24 : vector<16x1xf32> to vector<16x48xf32>
    %26 = arith.mulf %16, %25 : vector<16x48xf32>
    %27 = vector.broadcast %1 : vector<1x48xf32> to vector<16x48xf32>
    %28 = arith.mulf %26, %27 : vector<16x48xf32>
    %29 = vector.shape_cast %28 : vector<16x48xf32> to vector<1x16x48xf32>
    %30 = vector.shape_cast %29 : vector<1x16x48xf32> to vector<1x16x48xf32>
    %31 = vector.broadcast %30 : vector<1x16x48xf32> to vector<18x16x48xf32>
    %cst_17 = arith.constant dense<0.000000e+00> : vector<18x16x8xf32>
    %32 = tpu.matmul %31, %3, %cst_17 {dimension_numbers = #tpu.dot_dimension_numbers<[2], [1], [1], [2], [0, 0, 0, 1, 1, 2], [0], [0]>} : vector<18x16x48xf32>, vector<18x48x8xf32>, vector<18x16x8xf32> -> vector<18x16x8xf32>
    %33 = vector.extract_strided_slice %32 {offsets = [0, 0, 0], sizes = [6, 8, 8], strides = [1, 1, 1]} : vector<18x16x8xf32> to vector<6x8x8xf32>
    %34 = vector.extract_strided_slice %32 {offsets = [6, 0, 0], sizes = [6, 8, 8], strides = [1, 1, 1]} : vector<18x16x8xf32> to vector<6x8x8xf32>
    %35 = vector.extract_strided_slice %32 {offsets = [12, 0, 0], sizes = [6, 8, 8], strides = [1, 1, 1]} : vector<18x16x8xf32> to vector<6x8x8xf32>
    %cst_18 = arith.constant dense<0.000000e+00> : vector<6x8x8xf32>
    %36 = tpu.matmul %33, %34, %cst_18 {dimension_numbers = #tpu.dot_dimension_numbers<[2], [2], [1], [1], [0, 0, 0, 1, 1, 1], [0], [0]>} : vector<6x8x8xf32>, vector<6x8x8xf32>, vector<6x8x8xf32> -> vector<6x8x8xf32>
    %cst_19 = arith.constant 0.353553385 : f32
    %37 = vector.broadcast %cst_19 : f32 to vector<6x8x8xf32>
    %38 = arith.mulf %36, %37 : vector<6x8x8xf32>
    %39 = vector.shape_cast %10 : vector<8x8xf32> to vector<1x8x8xf32>
    %40 = vector.broadcast %39 : vector<1x8x8xf32> to vector<6x8x8xf32>
    %41 = arith.addf %38, %40 : vector<6x8x8xf32>
    %cst_20 = arith.constant dense<0xFF800000> : vector<6x8xf32>
    %42 = vector.multi_reduction <maximumf>, %41, %cst_20 [2] : vector<6x8x8xf32> to vector<6x8xf32>
    %43 = vector.shape_cast %42 : vector<6x8xf32> to vector<6x8x1xf32>
    %44 = vector.broadcast %43 : vector<6x8x1xf32> to vector<6x8x8xf32>
    %45 = arith.subf %41, %44 : vector<6x8x8xf32>
    %46 = math.exp %45 : vector<6x8x8xf32>
    %cst_21 = arith.constant dense<0.000000e+00> : vector<6x8xf32>
    %47 = vector.multi_reduction <add>, %46, %cst_21 [2] : vector<6x8x8xf32> to vector<6x8xf32>
    %48 = vector.shape_cast %47 : vector<6x8xf32> to vector<6x8x1xf32>
    %49 = vector.broadcast %48 : vector<6x8x1xf32> to vector<6x8x8xf32>
    %50 = arith.divf %46, %49 : vector<6x8x8xf32>
    %cst_22 = arith.constant dense<0.000000e+00> : vector<6x8x8xf32>
    %51 = tpu.matmul %50, %35, %cst_22 {dimension_numbers = #tpu.dot_dimension_numbers<[2], [1], [1], [2], [0, 0, 0, 1, 1, 2], [0], [0]>} : vector<6x8x8xf32>, vector<6x8x8xf32>, vector<6x8x8xf32> -> vector<6x8x8xf32>
    %cst_23 = arith.constant dense<0.000000e+00> : vector<6x8x48xf32>
    %52 = tpu.matmul %51, %4, %cst_23 {dimension_numbers = #tpu.dot_dimension_numbers<[2], [1], [1], [2], [0, 0, 0, 1, 1, 2], [0], [0]>} : vector<6x8x8xf32>, vector<6x8x48xf32>, vector<6x8x48xf32> -> vector<6x8x48xf32>
    %cst_24 = arith.constant dense<0.000000e+00> : vector<8x48xf32>
    %53 = vector.multi_reduction <add>, %52, %cst_24 [0] : vector<6x8x48xf32> to vector<8x48xf32>
    %54 = vector.extract_strided_slice %32 {offsets = [0, 8, 0], sizes = [6, 8, 8], strides = [1, 1, 1]} : vector<18x16x8xf32> to vector<6x8x8xf32>
    %55 = vector.extract_strided_slice %32 {offsets = [6, 8, 0], sizes = [6, 8, 8], strides = [1, 1, 1]} : vector<18x16x8xf32> to vector<6x8x8xf32>
    %56 = vector.extract_strided_slice %32 {offsets = [12, 8, 0], sizes = [6, 8, 8], strides = [1, 1, 1]} : vector<18x16x8xf32> to vector<6x8x8xf32>
    %cst_25 = arith.constant dense<0.000000e+00> : vector<6x8x8xf32>
    %57 = tpu.matmul %54, %55, %cst_25 {dimension_numbers = #tpu.dot_dimension_numbers<[2], [2], [1], [1], [0, 0, 0, 1, 1, 1], [0], [0]>} : vector<6x8x8xf32>, vector<6x8x8xf32>, vector<6x8x8xf32> -> vector<6x8x8xf32>
    %cst_26 = arith.constant 0.353553385 : f32
    %58 = vector.broadcast %cst_26 : f32 to vector<6x8x8xf32>
    %59 = arith.mulf %57, %58 : vector<6x8x8xf32>
    %60 = vector.shape_cast %10 : vector<8x8xf32> to vector<1x8x8xf32>
    %61 = vector.broadcast %60 : vector<1x8x8xf32> to vector<6x8x8xf32>
    %62 = arith.addf %59, %61 : vector<6x8x8xf32>
    %cst_27 = arith.constant dense<0xFF800000> : vector<6x8xf32>
    %63 = vector.multi_reduction <maximumf>, %62, %cst_27 [2] : vector<6x8x8xf32> to vector<6x8xf32>
    %64 = vector.shape_cast %63 : vector<6x8xf32> to vector<6x8x1xf32>
    %65 = vector.broadcast %64 : vector<6x8x1xf32> to vector<6x8x8xf32>
    %66 = arith.subf %62, %65 : vector<6x8x8xf32>
    %67 = math.exp %66 : vector<6x8x8xf32>
    %cst_28 = arith.constant dense<0.000000e+00> : vector<6x8xf32>
    %68 = vector.multi_reduction <add>, %67, %cst_28 [2] : vector<6x8x8xf32> to vector<6x8xf32>
    %69 = vector.shape_cast %68 : vector<6x8xf32> to vector<6x8x1xf32>
    %70 = vector.broadcast %69 : vector<6x8x1xf32> to vector<6x8x8xf32>
    %71 = arith.divf %67, %70 : vector<6x8x8xf32>
    %cst_29 = arith.constant dense<0.000000e+00> : vector<6x8x8xf32>
    %72 = tpu.matmul %71, %56, %cst_29 {dimension_numbers = #tpu.dot_dimension_numbers<[2], [1], [1], [2], [0, 0, 0, 1, 1, 2], [0], [0]>} : vector<6x8x8xf32>, vector<6x8x8xf32>, vector<6x8x8xf32> -> vector<6x8x8xf32>
    %cst_30 = arith.constant dense<0.000000e+00> : vector<6x8x48xf32>
    %73 = tpu.matmul %72, %4, %cst_30 {dimension_numbers = #tpu.dot_dimension_numbers<[2], [1], [1], [2], [0, 0, 0, 1, 1, 2], [0], [0]>} : vector<6x8x8xf32>, vector<6x8x48xf32>, vector<6x8x48xf32> -> vector<6x8x48xf32>
    %cst_31 = arith.constant dense<0.000000e+00> : vector<8x48xf32>
    %74 = vector.multi_reduction <add>, %73, %cst_31 [0] : vector<6x8x48xf32> to vector<8x48xf32>
    %75 = tpu.concatenate %53, %74 in 0 : vector<8x48xf32>, vector<8x48xf32> -> vector<16x48xf32>
    %76 = arith.addf %0, %75 : vector<16x48xf32>
    %c0_32 = arith.constant 0 : index
    %c0_33 = arith.constant 0 : index
    %77 = vector.load %arg6[%c0_32, %c0_33] : memref<1x48xf32, #tpu.memory_space<vmem>>, vector<1x48xf32>
    %78 = vector.broadcast %77 : vector<1x48xf32> to vector<16x48xf32>
    %79 = arith.addf %76, %78 : vector<16x48xf32>
    %cst_34 = arith.constant dense<0.000000e+00> : vector<16xf32>
    %80 = vector.multi_reduction <add>, %79, %cst_34 [1] : vector<16x48xf32> to vector<16xf32>
    %81 = vector.shape_cast %80 : vector<16xf32> to vector<16x1xf32>
    %cst_35 = arith.constant 4.800000e+01 : f32
    %82 = vector.broadcast %cst_35 : f32 to vector<16x1xf32>
    %83 = arith.divf %81, %82 : vector<16x1xf32>
    %84 = vector.broadcast %83 : vector<16x1xf32> to vector<16x48xf32>
    %85 = arith.subf %79, %84 : vector<16x48xf32>
    %86 = arith.mulf %85, %85 : vector<16x48xf32>
    %cst_36 = arith.constant dense<0.000000e+00> : vector<16xf32>
    %87 = vector.multi_reduction <add>, %86, %cst_36 [1] : vector<16x48xf32> to vector<16xf32>
    %88 = vector.shape_cast %87 : vector<16xf32> to vector<16x1xf32>
    %cst_37 = arith.constant 4.800000e+01 : f32
    %89 = vector.broadcast %cst_37 : f32 to vector<16x1xf32>
    %90 = arith.divf %88, %89 : vector<16x1xf32>
    %cst_38 = arith.constant 9.99999974E-6 : f32
    %91 = vector.broadcast %cst_38 : f32 to vector<16x1xf32>
    %92 = arith.addf %90, %91 : vector<16x1xf32>
    %93 = math.rsqrt %92 : vector<16x1xf32>
    %94 = vector.broadcast %93 : vector<16x1xf32> to vector<16x48xf32>
    %95 = arith.mulf %85, %94 : vector<16x48xf32>
    %96 = vector.broadcast %2 : vector<1x48xf32> to vector<16x48xf32>
    %97 = arith.mulf %95, %96 : vector<16x48xf32>
    %c0_39 = arith.constant 0 : index
    %c0_40 = arith.constant 0 : index
    %98 = vector.load %arg7[%c0_39, %c0_40] : memref<48x192xf32, #tpu.memory_space<vmem>>, vector<48x192xf32>
    %cst_41 = arith.constant dense<0.000000e+00> : vector<16x192xf32>
    %99 = tpu.matmul %97, %98, %cst_41 {dimension_numbers = #tpu.dot_dimension_numbers<[1], [0], [0], [1], [0, 0, 1, 1], [], []>} : vector<16x48xf32>, vector<48x192xf32>, vector<16x192xf32> -> vector<16x192xf32>
    %cst_42 = arith.constant 5.000000e-01 : f32
    %100 = vector.broadcast %cst_42 : f32 to vector<16x192xf32>
    %101 = arith.mulf %100, %99 : vector<16x192xf32>
    %cst_43 = arith.constant 0.707106769 : f32
    %102 = vector.broadcast %cst_43 : f32 to vector<16x192xf32>
    %103 = arith.mulf %99, %102 : vector<16x192xf32>
    %104 = math.erf %103 : vector<16x192xf32>
    %cst_44 = arith.constant 1.000000e+00 : f32
    %105 = vector.broadcast %cst_44 : f32 to vector<16x192xf32>
    %106 = arith.addf %105, %104 : vector<16x192xf32>
    %107 = arith.mulf %101, %106 : vector<16x192xf32>
    %c0_45 = arith.constant 0 : index
    %c0_46 = arith.constant 0 : index
    %108 = vector.load %arg8[%c0_45, %c0_46] : memref<192x48xf32, #tpu.memory_space<vmem>>, vector<192x48xf32>
    %cst_47 = arith.constant dense<0.000000e+00> : vector<16x48xf32>
    %109 = tpu.matmul %107, %108, %cst_47 {dimension_numbers = #tpu.dot_dimension_numbers<[1], [0], [0], [1], [0, 0, 1, 1], [], []>} : vector<16x192xf32>, vector<192x48xf32>, vector<16x48xf32> -> vector<16x48xf32>
    %110 = arith.addf %79, %109 : vector<16x48xf32>
    %c0_48 = arith.constant 0 : index
    %c0_49 = arith.constant 0 : index
    %111 = vector.load %arg9[%c0_48, %c0_49] : memref<16x48xf32, #tpu.memory_space<vmem>>, vector<16x48xf32>
    tpu.vector_store %arg9[%c0_48, %c0_49], %110 {strides = array<i32>} : memref<16x48xf32, #tpu.memory_space<vmem>>, vector<16x48xf32>,
    return
  }
  func.func @transform_0(%arg0: i32) -> (i32, i32) {
    %c0_i32 = arith.constant 0 : i32
    %c0_i32_0 = arith.constant 0 : i32
    return %arg0, %c0_i32 : i32, i32
  }
  func.func @transform_1(%arg0: i32) -> (i32, i32) {
    %c0_i32 = arith.constant 0 : i32
    %c0_i32_0 = arith.constant 0 : i32
    %c0_i32_1 = arith.constant 0 : i32
    return %c0_i32, %c0_i32_0 : i32, i32
  }
  func.func @transform_2(%arg0: i32) -> (i32, i32) {
    %c0_i32 = arith.constant 0 : i32
    %c0_i32_0 = arith.constant 0 : i32
    %c0_i32_1 = arith.constant 0 : i32
    return %c0_i32, %c0_i32_0 : i32, i32
  }
  func.func @transform_3(%arg0: i32) -> (i32, i32, i32) {
    %c0_i32 = arith.constant 0 : i32
    %c0_i32_0 = arith.constant 0 : i32
    %c0_i32_1 = arith.constant 0 : i32
    %c0_i32_2 = arith.constant 0 : i32
    return %c0_i32, %c0_i32_0, %c0_i32_1 : i32, i32, i32
  }
  func.func @transform_4(%arg0: i32) -> (i32, i32, i32) {
    %c0_i32 = arith.constant 0 : i32
    %c0_i32_0 = arith.constant 0 : i32
    %c0_i32_1 = arith.constant 0 : i32
    %c0_i32_2 = arith.constant 0 : i32
    return %c0_i32, %c0_i32_0, %c0_i32_1 : i32, i32, i32
  }
  func.func @transform_5(%arg0: i32) -> (i32, i32) {
    %c0_i32 = arith.constant 0 : i32
    %c0_i32_0 = arith.constant 0 : i32
    %c0_i32_1 = arith.constant 0 : i32
    return %c0_i32, %c0_i32_0 : i32, i32
  }
  func.func @transform_6(%arg0: i32) -> (i32, i32) {
    %c0_i32 = arith.constant 0 : i32
    %c0_i32_0 = arith.constant 0 : i32
    %c0_i32_1 = arith.constant 0 : i32
    return %c0_i32, %c0_i32_0 : i32, i32
  }
  func.func @transform_7(%arg0: i32) -> (i32, i32) {
    %c0_i32 = arith.constant 0 : i32
    %c0_i32_0 = arith.constant 0 : i32
    %c0_i32_1 = arith.constant 0 : i32
    return %c0_i32, %c0_i32_0 : i32, i32
  }
  func.func @transform_8(%arg0: i32) -> (i32, i32) {
    %c0_i32 = arith.constant 0 : i32
    %c0_i32_0 = arith.constant 0 : i32
    return %arg0, %c0_i32 : i32, i32
  }
}

</mosaic_0001>

<llo_original>
// kernel: tpu_custom_call.1
$region0: #{tpu_custom_call.1}
  #allocation0 [shape = 'u32[]', space=smem, size = 0x4, offset = 0x4, fixed_abs, tag = 'smem constant byte address 0x4 - core index']
  #allocation1 [shape = 'u32[144,128]{1,0:T(1,128)}', space=vmem, size = 0x12000, scoped, tag = 'internal scratch']
  %s0 = inlined_call_operand.vmem [shape: f32[16,48], index: 0, kind: input, shape index: {}]
  %s1 = inlined_call_operand.vmem [shape: f32[1,48], index: 1, kind: input, shape index: {}]
  %s2 = inlined_call_operand.vmem [shape: f32[1,48], index: 2, kind: input, shape index: {}]
  %s3 = inlined_call_operand.vmem [shape: f32[18,48,8], index: 3, kind: input, shape index: {}]
  %s4 = inlined_call_operand.vmem [shape: f32[6,8,48], index: 4, kind: input, shape index: {}]
  %s5 = inlined_call_operand.vmem [shape: f32[1,48], index: 5, kind: input, shape index: {}]
  %s6 = inlined_call_operand.vmem [shape: f32[48,192], index: 6, kind: input, shape index: {}]
  %s7 = inlined_call_operand.vmem [shape: f32[192,48], index: 7, kind: input, shape index: {}]
  %s8 = inlined_call_operand.hbm [shape: f32[16,48], index: 8, kind: output, shape index: {}]
  %s9 = sld [smem:[#allocation0]]
  $region42: #{tpu_custom_call.1} parent=0
    _
  %s11 = ssub.s32 1, %s9
  %s12 = scalar_select 0, %s11, %s9
  $region1: #{tpu_custom_call.1} parent=0
    #allocation2 [shape = 'u8[8192]{0}', space=vmem, size = 0x2000, scoped, tag = 'output window, operand 0, single buffered']
    #allocation3 [shape = 's32[1]{0}', space=sflag, size = 0x4, scoped, tag = 'scoped memory for tpu_custom_call.1']
    %13 = vsyncpa [#allocation3], 0
    // Predicated region
    $region2: #{tpu_custom_call.1} parent=1 // pred_check
      _
    $region3: #{tpu_custom_call.1} parent=1 // pred_check_branch
      %15 = sbr.rel (0) target = $region5
    $region4: #{tpu_custom_call.1} parent=1 // pred_region
      _
    $region5: #{tpu_custom_call.1} parent=1 // pred_fallthru
      _
    // Predicated region
    $region6: #{tpu_custom_call.1} parent=1 // pred_check
      _
    $region7: #{tpu_custom_call.1} parent=1 // pred_check_branch
      %17 = sbr.rel (0) target = $region9
    $region8: #{tpu_custom_call.1} parent=1 // pred_region
      _
    $region9: #{tpu_custom_call.1} parent=1 // pred_fallthru
      _
    // Predicated region
    $region10: #{tpu_custom_call.1} parent=1 // pred_check
      _
    $region11: #{tpu_custom_call.1} parent=1 // pred_check_branch
      %19 = sbr.rel (0) target = $region13
    $region12: #{tpu_custom_call.1} parent=1 // pred_region
      _
    $region13: #{tpu_custom_call.1} parent=1 // pred_fallthru
      _
    // Predicated region
    $region14: #{tpu_custom_call.1} parent=1 // pred_check
      _
    $region15: #{tpu_custom_call.1} parent=1 // pred_check_branch
      %21 = sbr.rel (0) target = $region17
    $region16: #{tpu_custom_call.1} parent=1 // pred_region
      _
    $region17: #{tpu_custom_call.1} parent=1 // pred_fallthru
      _
    // Predicated region
    $region18: #{tpu_custom_call.1} parent=1 // pred_check
      _
    $region19: #{tpu_custom_call.1} parent=1 // pred_check_branch
      %23 = sbr.rel (0) target = $region21
    $region20: #{tpu_custom_call.1} parent=1 // pred_region
      _
    $region21: #{tpu_custom_call.1} parent=1 // pred_fallthru
      _
    // Predicated region
    $region22: #{tpu_custom_call.1} parent=1 // pred_check
      _
    $region23: #{tpu_custom_call.1} parent=1 // pred_check_branch
      %25 = sbr.rel (0) target = $region25
    $region24: #{tpu_custom_call.1} parent=1 // pred_region
      _
    $region25: #{tpu_custom_call.1} parent=1 // pred_fallthru
      _
    // Predicated region
    $region26: #{tpu_custom_call.1} parent=1 // pred_check
      _
    $region27: #{tpu_custom_call.1} parent=1 // pred_check_branch
      %27 = sbr.rel (0) target = $region29
    $region28: #{tpu_custom_call.1} parent=1 // pred_region
      _
    $region29: #{tpu_custom_call.1} parent=1 // pred_fallthru
      _
    // Predicated region
    $region30: #{tpu_custom_call.1} parent=1 // pred_check
      _
    $region31: #{tpu_custom_call.1} parent=1 // pred_check_branch
      %29 = sbr.rel (0) target = $region33
    $region32: #{tpu_custom_call.1} parent=1 // pred_region
      _
    $region33: #{tpu_custom_call.1} parent=1 // pred_fallthru
      _
    %v30 = vld [vmem:[%s0] sm:$0xff]
    %v31 = vld [vmem:[%s0 + $0x8] sm:$0xff]
    %v32 = vld [vmem:[%s1] sm:$0x1]
    %v33 = vld [vmem:[%s2] sm:$0x1]
    %v34 = vld [vmem:[%s3] sm:$0xff]
    %v35 = vld [vmem:[%s3 + $0x8] sm:$0xff]
    %v36 = vld [vmem:[%s3 + $0x10] sm:$0xff]
    %v37 = vld [vmem:[%s3 + $0x18] sm:$0xff]
    %v38 = vld [vmem:[%s3 + $0x20] sm:$0xff]
    %v39 = vld [vmem:[%s3 + $0x28] sm:$0xff]
    %v40 = vld [vmem:[%s3 + $0x30] sm:$0xff]
    %v41 = vld [vmem:[%s3 + $0x38] sm:$0xff]
    %v42 = vld [vmem:[%s3 + $0x40] sm:$0xff]
    %v43 = vld [vmem:[%s3 + $0x48] sm:$0xff]
    %v44 = vld [vmem:[%s3 + $0x50] sm:$0xff]
    %v45 = vld [vmem:[%s3 + $0x58] sm:$0xff]
    %v46 = vld [vmem:[%s3 + $0x60] sm:$0xff]
    %v47 = vld [vmem:[%s3 + $0x68] sm:$0xff]
    %v48 = vld [vmem:[%s3 + $0x70] sm:$0xff]
    %v49 = vld [vmem:[%s3 + $0x78] sm:$0xff]
    %v50 = vld [vmem:[%s3 + $0x80] sm:$0xff]
    %v51 = vld [vmem:[%s3 + $0x88] sm:$0xff]
    %v52 = vld [vmem:[%s3 + $0x90] sm:$0xff]
    %v53 = vld [vmem:[%s3 + $0x98] sm:$0xff]
    %v54 = vld [vmem:[%s3 + $0xa0] sm:$0xff]
    %v55 = vld [vmem:[%s3 + $0xa8] sm:$0xff]
    %v56 = vld [vmem:[%s3 + $0xb0] sm:$0xff]
    %v57 = vld [vmem:[%s3 + $0xb8] sm:$0xff]
    %v58 = vld [vmem:[%s3 + $0xc0] sm:$0xff]
    %v59 = vld [vmem:[%s3 + $0xc8] sm:$0xff]
    %v60 = vld [vmem:[%s3 + $0xd0] sm:$0xff]
    %v61 = vld [vmem:[%s3 + $0xd8] sm:$0xff]
    %v62 = vld [vmem:[%s3 + $0xe0] sm:$0xff]
    %v63 = vld [vmem:[%s3 + $0xe8] sm:$0xff]
    %v64 = vld [vmem:[%s3 + $0xf0] sm:$0xff]
    %v65 = vld [vmem:[%s3 + $0xf8] sm:$0xff]
    %v66 = vld [vmem:[%s3 + $0x100] sm:$0xff]
    %v67 = vld [vmem:[%s3 + $0x108] sm:$0xff]
    %v68 = vld [vmem:[%s3 + $0x110] sm:$0xff]
    %v69 = vld [vmem:[%s3 + $0x118] sm:$0xff]
    %v70 = vld [vmem:[%s3 + $0x120] sm:$0xff]
    %v71 = vld [vmem:[%s3 + $0x128] sm:$0xff]
    %v72 = vld [vmem:[%s3 + $0x130] sm:$0xff]
    %v73 = vld [vmem:[%s3 + $0x138] sm:$0xff]
    %v74 = vld [vmem:[%s3 + $0x140] sm:$0xff]
    %v75 = vld [vmem:[%s3 + $0x148] sm:$0xff]
    %v76 = vld [vmem:[%s3 + $0x150] sm:$0xff]
    %v77 = vld [vmem:[%s3 + $0x158] sm:$0xff]
    %v78 = vld [vmem:[%s3 + $0x160] sm:$0xff]
    %v79 = vld [vmem:[%s3 + $0x168] sm:$0xff]
    %v80 = vld [vmem:[%s3 + $0x170] sm:$0xff]
    %v81 = vld [vmem:[%s3 + $0x178] sm:$0xff]
    %v82 = vld [vmem:[%s3 + $0x180] sm:$0xff]
    %v83 = vld [vmem:[%s3 + $0x188] sm:$0xff]
    %v84 = vld [vmem:[%s3 + $0x190] sm:$0xff]
    %v85 = vld [vmem:[%s3 + $0x198] sm:$0xff]
    %v86 = vld [vmem:[%s3 + $0x1a0] sm:$0xff]
    %v87 = vld [vmem:[%s3 + $0x1a8] sm:$0xff]
    %v88 = vld [vmem:[%s3 + $0x1b0] sm:$0xff]
    %v89 = vld [vmem:[%s3 + $0x1b8] sm:$0xff]
    %v90 = vld [vmem:[%s3 + $0x1c0] sm:$0xff]
    %v91 = vld [vmem:[%s3 + $0x1c8] sm:$0xff]
    %v92 = vld [vmem:[%s3 + $0x1d0] sm:$0xff]
    %v93 = vld [vmem:[%s3 + $0x1d8] sm:$0xff]
    %v94 = vld [vmem:[%s3 + $0x1e0] sm:$0xff]
    %v95 = vld [vmem:[%s3 + $0x1e8] sm:$0xff]
    %v96 = vld [vmem:[%s3 + $0x1f0] sm:$0xff]
    %v97 = vld [vmem:[%s3 + $0x1f8] sm:$0xff]
    %v98 = vld [vmem:[%s3 + $0x200] sm:$0xff]
    %v99 = vld [vmem:[%s3 + $0x208] sm:$0xff]
    %v100 = vld [vmem:[%s3 + $0x210] sm:$0xff]
    %v101 = vld [vmem:[%s3 + $0x218] sm:$0xff]
    %v102 = vld [vmem:[%s3 + $0x220] sm:$0xff]
    %v103 = vld [vmem:[%s3 + $0x228] sm:$0xff]
    %v104 = vld [vmem:[%s3 + $0x230] sm:$0xff]
    %v105 = vld [vmem:[%s3 + $0x238] sm:$0xff]
    %v106 = vld [vmem:[%s3 + $0x240] sm:$0xff]
    %v107 = vld [vmem:[%s3 + $0x248] sm:$0xff]
    %v108 = vld [vmem:[%s3 + $0x250] sm:$0xff]
    %v109 = vld [vmem:[%s3 + $0x258] sm:$0xff]
    %v110 = vld [vmem:[%s3 + $0x260] sm:$0xff]
    %v111 = vld [vmem:[%s3 + $0x268] sm:$0xff]
    %v112 = vld [vmem:[%s3 + $0x270] sm:$0xff]
    %v113 = vld [vmem:[%s3 + $0x278] sm:$0xff]
    %v114 = vld [vmem:[%s3 + $0x280] sm:$0xff]
    %v115 = vld [vmem:[%s3 + $0x288] sm:$0xff]
    %v116 = vld [vmem:[%s3 + $0x290] sm:$0xff]
    %v117 = vld [vmem:[%s3 + $0x298] sm:$0xff]
    %v118 = vld [vmem:[%s3 + $0x2a0] sm:$0xff]
    %v119 = vld [vmem:[%s3 + $0x2a8] sm:$0xff]
    %v120 = vld [vmem:[%s3 + $0x2b0] sm:$0xff]
    %v121 = vld [vmem:[%s3 + $0x2b8] sm:$0xff]
    %v122 = vld [vmem:[%s3 + $0x2c0] sm:$0xff]
    %v123 = vld [vmem:[%s3 + $0x2c8] sm:$0xff]
    %v124 = vld [vmem:[%s3 + $0x2d0] sm:$0xff]
    %v125 = vld [vmem:[%s3 + $0x2d8] sm:$0xff]
    %v126 = vld [vmem:[%s3 + $0x2e0] sm:$0xff]
    %v127 = vld [vmem:[%s3 + $0x2e8] sm:$0xff]
    %v128 = vld [vmem:[%s3 + $0x2f0] sm:$0xff]
    %v129 = vld [vmem:[%s3 + $0x2f8] sm:$0xff]
    %v130 = vld [vmem:[%s3 + $0x300] sm:$0xff]
    %v131 = vld [vmem:[%s3 + $0x308] sm:$0xff]
    %v132 = vld [vmem:[%s3 + $0x310] sm:$0xff]
    %v133 = vld [vmem:[%s3 + $0x318] sm:$0xff]
    %v134 = vld [vmem:[%s3 + $0x320] sm:$0xff]
    %v135 = vld [vmem:[%s3 + $0x328] sm:$0xff]
    %v136 = vld [vmem:[%s3 + $0x330] sm:$0xff]
    %v137 = vld [vmem:[%s3 + $0x338] sm:$0xff]
    %v138 = vld [vmem:[%s3 + $0x340] sm:$0xff]
    %v139 = vld [vmem:[%s3 + $0x348] sm:$0xff]
    %v140 = vld [vmem:[%s3 + $0x350] sm:$0xff]
    %v141 = vld [vmem:[%s3 + $0x358] sm:$0xff]
    %v142 = vld [vmem:[%s4] sm:$0xff]
    %v143 = vld [vmem:[%s4 + $0x8] sm:$0xff]
    %v144 = vld [vmem:[%s4 + $0x10] sm:$0xff]
    %v145 = vld [vmem:[%s4 + $0x18] sm:$0xff]
    %v146 = vld [vmem:[%s4 + $0x20] sm:$0xff]
    %v147 = vld [vmem:[%s4 + $0x28] sm:$0xff]
    %v148 = vlaneseq
    %v149 = vshrl.u32 %v148, 7
    %v150 = vlaneseq
    %v151 = vand.u32 %v150, 127
    %vm152 = vcmp.ge.s32.totalorder %v149, %v151
    %v153 = vsel %vm152, 0.0, -1e+30
    %vm154 = vcmask 392192
    %v155 = vsel %vm154, %v30, 0.0
    %156 = vadd.xlane.f32.xlu0 %v155
    %v157 = vpop.xlane.xlu0 %156
    %v158 = vsel %vm154, %v31, 0.0
    %159 = vadd.xlane.f32.xlu0 %v158
    %v160 = vpop.xlane.xlu0 %159
    %v161 = vrcp.pop 48.0
    %v162 = vmul.f32 %v157, %v161
    %v163 = vmul.f32 %v160, %v161
    %v164 = vsub.f32 %v30, %v162
    %v165 = vsub.f32 %v31, %v163
    %v166 = vmul.f32 %v164, %v164
    %v167 = vmul.f32 %v165, %v165
    %v168 = vsel %vm154, %v166, 0.0
    %169 = vadd.xlane.f32.xlu0 %v168
    %v170 = vpop.xlane.xlu0 %169
    %v171 = vsel %vm154, %v167, 0.0
    %172 = vadd.xlane.f32.xlu0 %v171
    %v173 = vpop.xlane.xlu0 %172
    %v174 = vmul.f32 %v170, %v161
    %v175 = vmul.f32 %v173, %v161
    %v176 = vadd.f32 %v174, 1e-05
    %v177 = vadd.f32 %v175, 1e-05
    %v178 = vrsqrt.pop %v176
    %v179 = vrsqrt.pop %v177
    %v180 = vmul.f32 %v164, %v178
    %v181 = vmul.f32 %v165, %v179
    %v183 = vlaneseq
    %v184 = vshrl.u32 %v183, 7
    %v185 = vsub.s32 0, %v184
    %v186 = vrot.slane %v32, %v185
    %v188 = vmul.f32 %v180, %v186
    %v189 = vmul.f32 %v181, %v186
    %v191 = vsel %vm154, %v188, 0
    %v194 = vsel %vm154, %v189, 0
    %196 = vmatprep.subr.mxu0 0.0
    %197 = vmatpush1.msra.mxu0 %v34
    %198 = vmatprep.subr.mxu0 0.0
    %199 = vmatpush1.msra.mxu0 %v35
    %200 = vmatprep.subr.mxu0 0.0
    %201 = vmatpush1.msra.mxu0 %v36
    %202 = vmatprep.subr.mxu0 0.0
    %203 = vmatpush1.msra.mxu0 %v37
    %204 = vmatprep.subr.mxu0 0.0
    %205 = vmatpush1.msra.mxu0 %v38
    %206 = vmatprep.subr.mxu0 0.0
    %207 = vmatpush1.msra.mxu0 %v39
    %208 = vmatprep.subr.mxu0 0.0
    %209 = vmatpush1.msra.mxu0 0.0
    %210 = vmatprep.subr.mxu0 0.0
    %211 = vmatpush1.msra.mxu0 0.0
    %212 = vmatprep.subr.mxu0 0.0
    %213 = vmatpush1.msra.mxu0 0.0
    %214 = vmatprep.subr.mxu0 0.0
    %215 = vmatpush1.msra.mxu0 0.0
    %216 = vmatprep.subr.mxu0 0.0
    %217 = vmatpush1.msra.mxu0 0.0
    %218 = vmatprep.subr.mxu0 0.0
    %219 = vmatpush1.msra.mxu0 0.0
    %220 = vmatprep.subr.mxu0 0.0
    %221 = vmatpush1.msra.mxu0 0.0
    %222 = vmatprep.subr.mxu0 0.0
    %223 = vmatpush1.msra.mxu0 0.0
    %224 = vmatprep.subr.mxu0 0.0
    %225 = vmatpush1.msra.mxu0 0.0
    %226 = vmatprep.subr.mxu0 0.0
    %227 = vmatpush1.msra.mxu0 0.0
    %228 = vmatprep.subr.mxu0 0.0
    %229 = vmatpush1.msra.mxu0 0.0
    %230 = vmatprep.subr.mxu0 0.0
    %231 = vmatpush1.msra.mxu0 0.0
    %232 = vmatprep.subr.mxu0 0.0
    %233 = vmatpush1.msra.mxu0 0.0
    %234 = vmatprep.subr.mxu0 0.0
    %235 = vmatpush1.msra.mxu0 0.0
    %236 = vmatprep.subr.mxu0 0.0
    %237 = vmatpush1.msra.mxu0 0.0
    %238 = vmatprep.subr.mxu0 0.0
    %239 = vmatpush1.msra.mxu0 0.0
    %240 = vmatprep.subr.mxu0 0.0
    %241 = vmatpush1.msra.mxu0 0.0
    %242 = vmatprep.subr.mxu0 0.0
    %243 = vmatpush1.msra.mxu0 0.0
    %244 = vmatprep.subr.mxu0 0.0
    %245 = vmatpush1.msra.mxu0 0.0
    %246 = vmatprep.subr.mxu0 0.0
    %247 = vmatpush1.msra.mxu0 0.0
    %248 = vmatprep.subr.mxu0 0.0
    %249 = vmatpush1.msra.mxu0 0.0
    %250 = vmatprep.subr.mxu0 0.0
    %251 = vmatpush1.msra.mxu0 0.0
    %252 = vmatprep.subr.mxu0 0.0
    %253 = vmatpush1.msra.mxu0 0.0
    %254 = vmatprep.subr.mxu0 0.0
    %255 = vmatpush1.msra.mxu0 0.0
    %256 = vmatprep.subr.mxu0 0.0
    %257 = vmatpush1.msra.mxu0 0.0
    %258 = vmatprep.subr.mxu0 0.0
    %259 = vmatpush1.msra.mxu0 0.0
    %260 = vmatprep.mubr.f32.mxu0 0.0
    %261 = vmatmul.mubr.f32.gmra.mrb[0].mxu0 %v191
    %v262 = vpop.f32.mrb[0].mxu0
    %v263 = vadd.f32 0.0, %v262
    %v264 = vpop.f32.mrb[0].mxu0
    %265 = vmatprep.mubr.f32.mxu0 0.0
    %266 = vmatmul.mubr.f32.gmra.mrb[0].mxu0 %v194
    %v267 = vpop.f32.mrb[0].mxu0
    %v268 = vadd.f32 0.0, %v267
    %v269 = vpop.f32.mrb[0].mxu0
    %270 = vdwg.mxu0
    %271 = vmatprep.subr.mxu0 0.0
    %272 = vmatpush1.msra.mxu0 %v40
    %273 = vmatprep.subr.mxu0 0.0
    %274 = vmatpush1.msra.mxu0 %v41
    %275 = vmatprep.subr.mxu0 0.0
    %276 = vmatpush1.msra.mxu0 %v42
    %277 = vmatprep.subr.mxu0 0.0
    %278 = vmatpush1.msra.mxu0 %v43
    %279 = vmatprep.subr.mxu0 0.0
    %280 = vmatpush1.msra.mxu0 %v44
    %281 = vmatprep.subr.mxu0 0.0
    %282 = vmatpush1.msra.mxu0 %v45
    %283 = vmatprep.subr.mxu0 0.0
    %284 = vmatpush1.msra.mxu0 0.0
    %285 = vmatprep.subr.mxu0 0.0
    %286 = vmatpush1.msra.mxu0 0.0
    %287 = vmatprep.subr.mxu0 0.0
    %288 = vmatpush1.msra.mxu0 0.0
    %289 = vmatprep.subr.mxu0 0.0
    %290 = vmatpush1.msra.mxu0 0.0
    %291 = vmatprep.subr.mxu0 0.0
    %292 = vmatpush1.msra.mxu0 0.0
    %293 = vmatprep.subr.mxu0 0.0
    %294 = vmatpush1.msra.mxu0 0.0
    %295 = vmatprep.subr.mxu0 0.0
    %296 = vmatpush1.msra.mxu0 0.0
    %297 = vmatprep.subr.mxu0 0.0
    %298 = vmatpush1.msra.mxu0 0.0
    %299 = vmatprep.subr.mxu0 0.0
    %300 = vmatpush1.msra.mxu0 0.0
    %301 = vmatprep.subr.mxu0 0.0
    %302 = vmatpush1.msra.mxu0 0.0
    %303 = vmatprep.subr.mxu0 0.0
    %304 = vmatpush1.msra.mxu0 0.0
    %305 = vmatprep.subr.mxu0 0.0
    %306 = vmatpush1.msra.mxu0 0.0
    %307 = vmatprep.subr.mxu0 0.0
    %308 = vmatpush1.msra.mxu0 0.0
    %309 = vmatprep.subr.mxu0 0.0
    %310 = vmatpush1.msra.mxu0 0.0
    %311 = vmatprep.subr.mxu0 0.0
    %312 = vmatpush1.msra.mxu0 0.0
    %313 = vmatprep.subr.mxu0 0.0
    %314 = vmatpush1.msra.mxu0 0.0
    %315 = vmatprep.subr.mxu0 0.0
    %316 = vmatpush1.msra.mxu0 0.0
    %317 = vmatprep.subr.mxu0 0.0
    %318 = vmatpush1.msra.mxu0 0.0
    %319 = vmatprep.subr.mxu0 0.0
    %320 = vmatpush1.msra.mxu0 0.0
    %321 = vmatprep.subr.mxu0 0.0
    %322 = vmatpush1.msra.mxu0 0.0
    %323 = vmatprep.subr.mxu0 0.0
    %324 = vmatpush1.msra.mxu0 0.0
    %325 = vmatprep.subr.mxu0 0.0
    %326 = vmatpush1.msra.mxu0 0.0
    %327 = vmatprep.subr.mxu0 0.0
    %328 = vmatpush1.msra.mxu0 0.0
    %329 = vmatprep.subr.mxu0 0.0
    %330 = vmatpush1.msra.mxu0 0.0
    %331 = vmatprep.subr.mxu0 0.0
    %332 = vmatpush1.msra.mxu0 0.0
    %333 = vmatprep.subr.mxu0 0.0
    %334 = vmatpush1.msra.mxu0 0.0
    %335 = vmatprep.mubr.f32.mxu0 0.0
    %336 = vmatmul.mubr.f32.gmra.mrb[0].mxu0 %v191
    %v337 = vpop.f32.mrb[0].mxu0
    %v338 = vadd.f32 0.0, %v337
    %v339 = vpop.f32.mrb[0].mxu0
    %340 = vmatprep.mubr.f32.mxu0 0.0
    %341 = vmatmul.mubr.f32.gmra.mrb[0].mxu0 %v194
    %v342 = vpop.f32.mrb[0].mxu0
    %v343 = vadd.f32 0.0, %v342
    %v344 = vpop.f32.mrb[0].mxu0
    %345 = vdwg.mxu0
    %346 = vmatprep.subr.mxu0 0.0
    %347 = vmatpush1.msra.mxu0 %v46
    %348 = vmatprep.subr.mxu0 0.0
    %349 = vmatpush1.msra.mxu0 %v47
    %350 = vmatprep.subr.mxu0 0.0
    %351 = vmatpush1.msra.mxu0 %v48
    %352 = vmatprep.subr.mxu0 0.0
    %353 = vmatpush1.msra.mxu0 %v49
    %354 = vmatprep.subr.mxu0 0.0
    %355 = vmatpush1.msra.mxu0 %v50
    %356 = vmatprep.subr.mxu0 0.0
    %357 = vmatpush1.msra.mxu0 %v51
    %358 = vmatprep.subr.mxu0 0.0
    %359 = vmatpush1.msra.mxu0 0.0
    %360 = vmatprep.subr.mxu0 0.0
    %361 = vmatpush1.msra.mxu0 0.0
    %362 = vmatprep.subr.mxu0 0.0
    %363 = vmatpush1.msra.mxu0 0.0
    %364 = vmatprep.subr.mxu0 0.0
    %365 = vmatpush1.msra.mxu0 0.0
    %366 = vmatprep.subr.mxu0 0.0
    %367 = vmatpush1.msra.mxu0 0.0
    %368 = vmatprep.subr.mxu0 0.0
    %369 = vmatpush1.msra.mxu0 0.0
    %370 = vmatprep.subr.mxu0 0.0
    %371 = vmatpush1.msra.mxu0 0.0
    %372 = vmatprep.subr.mxu0 0.0
    %373 = vmatpush1.msra.mxu0 0.0
    %374 = vmatprep.subr.mxu0 0.0
    %375 = vmatpush1.msra.mxu0 0.0
    %376 = vmatprep.subr.mxu0 0.0
    %377 = vmatpush1.msra.mxu0 0.0
    %378 = vmatprep.subr.mxu0 0.0
    %379 = vmatpush1.msra.mxu0 0.0
    %380 = vmatprep.subr.mxu0 0.0
    %381 = vmatpush1.msra.mxu0 0.0
    %382 = vmatprep.subr.mxu0 0.0
    %383 = vmatpush1.msra.mxu0 0.0
    %384 = vmatprep.subr.mxu0 0.0
    %385 = vmatpush1.msra.mxu0 0.0
    %386 = vmatprep.subr.mxu0 0.0
    %387 = vmatpush1.msra.mxu0 0.0
    %388 = vmatprep.subr.mxu0 0.0
    %389 = vmatpush1.msra.mxu0 0.0
    %390 = vmatprep.subr.mxu0 0.0
    %391 = vmatpush1.msra.mxu0 0.0
    %392 = vmatprep.subr.mxu0 0.0
    %393 = vmatpush1.msra.mxu0 0.0
    %394 = vmatprep.subr.mxu0 0.0
    %395 = vmatpush1.msra.mxu0 0.0
    %396 = vmatprep.subr.mxu0 0.0
    %397 = vmatpush1.msra.mxu0 0.0
    %398 = vmatprep.subr.mxu0 0.0
    %399 = vmatpush1.msra.mxu0 0.0
    %400 = vmatprep.subr.mxu0 0.0
    %401 = vmatpush1.msra.mxu0 0.0
    %402 = vmatprep.subr.mxu0 0.0
    %403 = vmatpush1.msra.mxu0 0.0
    %404 = vmatprep.subr.mxu0 0.0
    %405 = vmatpush1.msra.mxu0 0.0
    %406 = vmatprep.subr.mxu0 0.0
    %407 = vmatpush1.msra.mxu0 0.0
    %408 = vmatprep.subr.mxu0 0.0
    %409 = vmatpush1.msra.mxu0 0.0
    %410 = vmatprep.mubr.f32.mxu0 0.0
    %411 = vmatmul.mubr.f32.gmra.mrb[0].mxu0 %v191
    %v412 = vpop.f32.mrb[0].mxu0
    %v413 = vadd.f32 0.0, %v412
    %v414 = vpop.f32.mrb[0].mxu0
    %415 = vmatprep.mubr.f32.mxu0 0.0
    %416 = vmatmul.mubr.f32.gmra.mrb[0].mxu0 %v194
    %v417 = vpop.f32.mrb[0].mxu0
    %v418 = vadd.f32 0.0, %v417
    %v419 = vpop.f32.mrb[0].mxu0
    %420 = vdwg.mxu0
    %421 = vmatprep.subr.mxu0 0.0
    %422 = vmatpush1.msra.mxu0 %v52
    %423 = vmatprep.subr.mxu0 0.0
    %424 = vmatpush1.msra.mxu0 %v53
    %425 = vmatprep.subr.mxu0 0.0
    %426 = vmatpush1.msra.mxu0 %v54
    %427 = vmatprep.subr.mxu0 0.0
    %428 = vmatpush1.msra.mxu0 %v55
    %429 = vmatprep.subr.mxu0 0.0
    %430 = vmatpush1.msra.mxu0 %v56
    %431 = vmatprep.subr.mxu0 0.0
    %432 = vmatpush1.msra.mxu0 %v57
    %433 = vmatprep.subr.mxu0 0.0
    %434 = vmatpush1.msra.mxu0 0.0
    %435 = vmatprep.subr.mxu0 0.0
    %436 = vmatpush1.msra.mxu0 0.0
    %437 = vmatprep.subr.mxu0 0.0
    %438 = vmatpush1.msra.mxu0 0.0
    %439 = vmatprep.subr.mxu0 0.0
    %440 = vmatpush1.msra.mxu0 0.0
    %441 = vmatprep.subr.mxu0 0.0
    %442 = vmatpush1.msra.mxu0 0.0
    %443 = vmatprep.subr.mxu0 0.0
    %444 = vmatpush1.msra.mxu0 0.0
    %445 = vmatprep.subr.mxu0 0.0
    %446 = vmatpush1.msra.mxu0 0.0
    %447 = vmatprep.subr.mxu0 0.0
    %448 = vmatpush1.msra.mxu0 0.0
    %449 = vmatprep.subr.mxu0 0.0
    %450 = vmatpush1.msra.mxu0 0.0
    %451 = vmatprep.subr.mxu0 0.0
    %452 = vmatpush1.msra.mxu0 0.0
    %453 = vmatprep.subr.mxu0 0.0
    %454 = vmatpush1.msra.mxu0 0.0
    %455 = vmatprep.subr.mxu0 0.0
    %456 = vmatpush1.msra.mxu0 0.0
    %457 = vmatprep.subr.mxu0 0.0
    %458 = vmatpush1.msra.mxu0 0.0
    %459 = vmatprep.subr.mxu0 0.0
    %460 = vmatpush1.msra.mxu0 0.0
    %461 = vmatprep.subr.mxu0 0.0
    %462 = vmatpush1.msra.mxu0 0.0
    %463 = vmatprep.subr.mxu0 0.0
    %464 = vmatpush1.msra.mxu0 0.0
    %465 = vmatprep.subr.mxu0 0.0
    %466 = vmatpush1.msra.mxu0 0.0
    %467 = vmatprep.subr.mxu0 0.0
    %468 = vmatpush1.msra.mxu0 0.0
    %469 = vmatprep.subr.mxu0 0.0
    %470 = vmatpush1.msra.mxu0 0.0
    %471 = vmatprep.subr.mxu0 0.0
    %472 = vmatpush1.msra.mxu0 0.0
    %473 = vmatprep.subr.mxu0 0.0
    %474 = vmatpush1.msra.mxu0 0.0
    %475 = vmatprep.subr.mxu0 0.0
    %476 = vmatpush1.msra.mxu0 0.0
    %477 = vmatprep.subr.mxu0 0.0
    %478 = vmatpush1.msra.mxu0 0.0
    %479 = vmatprep.subr.mxu0 0.0
    %480 = vmatpush1.msra.mxu0 0.0
    %481 = vmatprep.subr.mxu0 0.0
    %482 = vmatpush1.msra.mxu0 0.0
    %483 = vmatprep.subr.mxu0 0.0
    %484 = vmatpush1.msra.mxu0 0.0
    %485 = vmatprep.mubr.f32.mxu0 0.0
    %486 = vmatmul.mubr.f32.gmra.mrb[0].mxu0 %v191
    %v487 = vpop.f32.mrb[0].mxu0
    %v488 = vadd.f32 0.0, %v487
    %v489 = vpop.f32.mrb[0].mxu0
    %490 = vmatprep.mubr.f32.mxu0 0.0
    %491 = vmatmul.mubr.f32.gmra.mrb[0].mxu0 %v194
    %v492 = vpop.f32.mrb[0].mxu0
    %v493 = vadd.f32 0.0, %v492
    %v494 = vpop.f32.mrb[0].mxu0
    %495 = vdwg.mxu0
    %496 = vmatprep.subr.mxu0 0.0
    %497 = vmatpush1.msra.mxu0 %v58
    %498 = vmatprep.subr.mxu0 0.0
    %499 = vmatpush1.msra.mxu0 %v59
    %500 = vmatprep.subr.mxu0 0.0
    %501 = vmatpush1.msra.mxu0 %v60
    %502 = vmatprep.subr.mxu0 0.0
    %503 = vmatpush1.msra.mxu0 %v61
    %504 = vmatprep.subr.mxu0 0.0
    %505 = vmatpush1.msra.mxu0 %v62
    %506 = vmatprep.subr.mxu0 0.0
    %507 = vmatpush1.msra.mxu0 %v63
    %508 = vmatprep.subr.mxu0 0.0
    %509 = vmatpush1.msra.mxu0 0.0
    %510 = vmatprep.subr.mxu0 0.0
    %511 = vmatpush1.msra.mxu0 0.0
    %512 = vmatprep.subr.mxu0 0.0
    %513 = vmatpush1.msra.mxu0 0.0
    %514 = vmatprep.subr.mxu0 0.0
    %515 = vmatpush1.msra.mxu0 0.0
    %516 = vmatprep.subr.mxu0 0.0
    %517 = vmatpush1.msra.mxu0 0.0
    %518 = vmatprep.subr.mxu0 0.0
    %519 = vmatpush1.msra.mxu0 0.0
    %520 = vmatprep.subr.mxu0 0.0
    %521 = vmatpush1.msra.mxu0 0.0
    %522 = vmatprep.subr.mxu0 0.0
    %523 = vmatpush1.msra.mxu0 0.0
    %524 = vmatprep.subr.mxu0 0.0
    %525 = vmatpush1.msra.mxu0 0.0
    %526 = vmatprep.subr.mxu0 0.0
    %527 = vmatpush1.msra.mxu0 0.0
    %528 = vmatprep.subr.mxu0 0.0
    %529 = vmatpush1.msra.mxu0 0.0
    %530 = vmatprep.subr.mxu0 0.0
    %531 = vmatpush1.msra.mxu0 0.0
    %532 = vmatprep.subr.mxu0 0.0
    %533 = vmatpush1.msra.mxu0 0.0
    %534 = vmatprep.subr.mxu0 0.0
    %535 = vmatpush1.msra.mxu0 0.0
    %536 = vmatprep.subr.mxu0 0.0
    %537 = vmatpush1.msra.mxu0 0.0
    %538 = vmatprep.subr.mxu0 0.0
    %539 = vmatpush1.msra.mxu0 0.0
    %540 = vmatprep.subr.mxu0 0.0
    %541 = vmatpush1.msra.mxu0 0.0
    %542 = vmatprep.subr.mxu0 0.0
    %543 = vmatpush1.msra.mxu0 0.0
    %544 = vmatprep.subr.mxu0 0.0
    %545 = vmatpush1.msra.mxu0 0.0
    %546 = vmatprep.subr.mxu0 0.0
    %547 = vmatpush1.msra.mxu0 0.0
    %548 = vmatprep.subr.mxu0 0.0
    %549 = vmatpush1.msra.mxu0 0.0
    %550 = vmatprep.subr.mxu0 0.0
    %551 = vmatpush1.msra.mxu0 0.0
    %552 = vmatprep.subr.mxu0 0.0
    %553 = vmatpush1.msra.mxu0 0.0
    %554 = vmatprep.subr.mxu0 0.0
    %555 = vmatpush1.msra.mxu0 0.0
    %556 = vmatprep.subr.mxu0 0.0
    %557 = vmatpush1.msra.mxu0 0.0
    %558 = vmatprep.subr.mxu0 0.0
    %559 = vmatpush1.msra.mxu0 0.0
    %560 = vmatprep.mubr.f32.mxu0 0.0
    %561 = vmatmul.mubr.f32.gmra.mrb[0].mxu0 %v191
    %v562 = vpop.f32.mrb[0].mxu0
    %v563 = vadd.f32 0.0, %v562
    %v564 = vpop.f32.mrb[0].mxu0
    %565 = vmatprep.mubr.f32.mxu0 0.0
    %566 = vmatmul.mubr.f32.gmra.mrb[0].mxu0 %v194
    %v567 = vpop.f32.mrb[0].mxu0
    %v568 = vadd.f32 0.0, %v567
    %v569 = vpop.f32.mrb[0].mxu0
    %570 = vdwg.mxu0
    %571 = vmatprep.subr.mxu0 0.0
    %572 = vmatpush1.msra.mxu0 %v64
    %573 = vmatprep.subr.mxu0 0.0
    %574 = vmatpush1.msra.mxu0 %v65
    %575 = vmatprep.subr.mxu0 0.0
    %576 = vmatpush1.msra.mxu0 %v66
    %577 = vmatprep.subr.mxu0 0.0
    %578 = vmatpush1.msra.mxu0 %v67
    %579 = vmatprep.subr.mxu0 0.0
    %580 = vmatpush1.msra.mxu0 %v68
    %581 = vmatprep.subr.mxu0 0.0
    %582 = vmatpush1.msra.mxu0 %v69
    %583 = vmatprep.subr.mxu0 0.0
    %584 = vmatpush1.msra.mxu0 0.0
    %585 = vmatprep.subr.mxu0 0.0
    %586 = vmatpush1.msra.mxu0 0.0
    %587 = vmatprep.subr.mxu0 0.0
    %588 = vmatpush1.msra.mxu0 0.0
    %589 = vmatprep.subr.mxu0 0.0
    %590 = vmatpush1.msra.mxu0 0.0
    %591 = vmatprep.subr.mxu0 0.0
    %592 = vmatpush1.msra.mxu0 0.0
    %593 = vmatprep.subr.mxu0 0.0
    %594 = vmatpush1.msra.mxu0 0.0
    %595 = vmatprep.subr.mxu0 0.0
    %596 = vmatpush1.msra.mxu0 0.0
    %597 = vmatprep.subr.mxu0 0.0
    %598 = vmatpush1.msra.mxu0 0.0
    %599 = vmatprep.subr.mxu0 0.0
    %600 = vmatpush1.msra.mxu0 0.0
    %601 = vmatprep.subr.mxu0 0.0
    %602 = vmatpush1.msra.mxu0 0.0
    %603 = vmatprep.subr.mxu0 0.0
    %604 = vmatpush1.msra.mxu0 0.0
    %605 = vmatprep.subr.mxu0 0.0
    %606 = vmatpush1.msra.mxu0 0.0
    %607 = vmatprep.subr.mxu0 0.0
    %608 = vmatpush1.msra.mxu0 0.0
    %609 = vmatprep.subr.mxu0 0.0
    %610 = vmatpush1.msra.mxu0 0.0
    %611 = vmatprep.subr.mxu0 0.0
    %612 = vmatpush1.msra.mxu0 0.0
    %613 = vmatprep.subr.mxu0 0.0
    %614 = vmatpush1.msra.mxu0 0.0
    %615 = vmatprep.subr.mxu0 0.0
    %616 = vmatpush1.msra.mxu0 0.0
    %617 = vmatprep.subr.mxu0 0.0
    %618 = vmatpush1.msra.mxu0 0.0
    %619 = vmatprep.subr.mxu0 0.0
    %620 = vmatpush1.msra.mxu0 0.0
    %621 = vmatprep.subr.mxu0 0.0
    %622 = vmatpush1.msra.mxu0 0.0
    %623 = vmatprep.subr.mxu0 0.0
    %624 = vmatpush1.msra.mxu0 0.0
    %625 = vmatprep.subr.mxu0 0.0
    %626 = vmatpush1.msra.mxu0 0.0
    %627 = vmatprep.subr.mxu0 0.0
    %628 = vmatpush1.msra.mxu0 0.0
    %629 = vmatprep.subr.mxu0 0.0
    %630 = vmatpush1.msra.mxu0 0.0
    %631 = vmatprep.subr.mxu0 0.0
    %632 = vmatpush1.msra.mxu0 0.0
    %633 = vmatprep.subr.mxu0 0.0
    %634 = vmatpush1.msra.mxu0 0.0
    %635 = vmatprep.mubr.f32.mxu0 0.0
    %636 = vmatmul.mubr.f32.gmra.mrb[0].mxu0 %v191
    %v637 = vpop.f32.mrb[0].mxu0
    %v638 = vadd.f32 0.0, %v637
    %v639 = vpop.f32.mrb[0].mxu0
    %640 = vmatprep.mubr.f32.mxu0 0.0
    %641 = vmatmul.mubr.f32.gmra.mrb[0].mxu0 %v194
    %v642 = vpop.f32.mrb[0].mxu0
    %v643 = vadd.f32 0.0, %v642
    %v644 = vpop.f32.mrb[0].mxu0
    %645 = vdwg.mxu0
    %646 = vmatprep.subr.mxu0 0.0
    %647 = vmatpush1.msra.mxu0 %v70
    %648 = vmatprep.subr.mxu0 0.0
    %649 = vmatpush1.msra.mxu0 %v71
    %650 = vmatprep.subr.mxu0 0.0
    %651 = vmatpush1.msra.mxu0 %v72
    %652 = vmatprep.subr.mxu0 0.0
    %653 = vmatpush1.msra.mxu0 %v73
    %654 = vmatprep.subr.mxu0 0.0
    %655 = vmatpush1.msra.mxu0 %v74
    %656 = vmatprep.subr.mxu0 0.0
    %657 = vmatpush1.msra.mxu0 %v75
    %658 = vmatprep.subr.mxu0 0.0
    %659 = vmatpush1.msra.mxu0 0.0
    %660 = vmatprep.subr.mxu0 0.0
    %661 = vmatpush1.msra.mxu0 0.0
    %662 = vmatprep.subr.mxu0 0.0
    %663 = vmatpush1.msra.mxu0 0.0
    %664 = vmatprep.subr.mxu0 0.0
    %665 = vmatpush1.msra.mxu0 0.0
    %666 = vmatprep.subr.mxu0 0.0
    %667 = vmatpush1.msra.mxu0 0.0
    %668 = vmatprep.subr.mxu0 0.0
    %669 = vmatpush1.msra.mxu0 0.0
    %670 = vmatprep.subr.mxu0 0.0
    %671 = vmatpush1.msra.mxu0 0.0
    %672 = vmatprep.subr.mxu0 0.0
    %673 = vmatpush1.msra.mxu0 0.0
    %674 = vmatprep.subr.mxu0 0.0
    %675 = vmatpush1.msra.mxu0 0.0
    %676 = vmatprep.subr.mxu0 0.0
    %677 = vmatpush1.msra.mxu0 0.0
    %678 = vmatprep.subr.mxu0 0.0
    %679 = vmatpush1.msra.mxu0 0.0
    %680 = vmatprep.subr.mxu0 0.0
    %681 = vmatpush1.msra.mxu0 0.0
    %682 = vmatprep.subr.mxu0 0.0
    %683 = vmatpush1.msra.mxu0 0.0
    %684 = vmatprep.subr.mxu0 0.0
    %685 = vmatpush1.msra.mxu0 0.0
    %686 = vmatprep.subr.mxu0 0.0
    %687 = vmatpush1.msra.mxu0 0.0
    %688 = vmatprep.subr.mxu0 0.0
    %689 = vmatpush1.msra.mxu0 0.0
    %690 = vmatprep.subr.mxu0 0.0
    %691 = vmatpush1.msra.mxu0 0.0
    %692 = vmatprep.subr.mxu0 0.0
    %693 = vmatpush1.msra.mxu0 0.0
    %694 = vmatprep.subr.mxu0 0.0
    %695 = vmatpush1.msra.mxu0 0.0
    %696 = vmatprep.subr.mxu0 0.0
    %697 = vmatpush1.msra.mxu0 0.0
    %698 = vmatprep.subr.mxu0 0.0
    %699 = vmatpush1.msra.mxu0 0.0
    %700 = vmatprep.subr.mxu0 0.0
    %701 = vmatpush1.msra.mxu0 0.0
    %702 = vmatprep.subr.mxu0 0.0
    %703 = vmatpush1.msra.mxu0 0.0
    %704 = vmatprep.subr.mxu0 0.0
    %705 = vmatpush1.msra.mxu0 0.0
    %706 = vmatprep.subr.mxu0 0.0
    %707 = vmatpush1.msra.mxu0 0.0
    %708 = vmatprep.subr.mxu0 0.0
    %709 = vmatpush1.msra.mxu0 0.0
    %710 = vmatprep.mubr.f32.mxu0 0.0
    %711 = vmatmul.mubr.f32.gmra.mrb[0].mxu0 %v191
    %v712 = vpop.f32.mrb[0].mxu0
    %v713 = vadd.f32 0.0, %v712
    %v714 = vpop.f32.mrb[0].mxu0
    %715 = vmatprep.mubr.f32.mxu0 0.0
    %716 = vmatmul.mubr.f32.gmra.mrb[0].mxu0 %v194
    %v717 = vpop.f32.mrb[0].mxu0
    %v718 = vadd.f32 0.0, %v717
    %v719 = vpop.f32.mrb[0].mxu0
    %720 = vdwg.mxu0
    %721 = vmatprep.subr.mxu0 0.0
    %722 = vmatpush1.msra.mxu0 %v76
    %723 = vmatprep.subr.mxu0 0.0
    %724 = vmatpush1.msra.mxu0 %v77
    %725 = vmatprep.subr.mxu0 0.0
    %726 = vmatpush1.msra.mxu0 %v78
    %727 = vmatprep.subr.mxu0 0.0
    %728 = vmatpush1.msra.mxu0 %v79
    %729 = vmatprep.subr.mxu0 0.0
    %730 = vmatpush1.msra.mxu0 %v80
    %731 = vmatprep.subr.mxu0 0.0
    %732 = vmatpush1.msra.mxu0 %v81
    %733 = vmatprep.subr.mxu0 0.0
    %734 = vmatpush1.msra.mxu0 0.0
    %735 = vmatprep.subr.mxu0 0.0
    %736 = vmatpush1.msra.mxu0 0.0
    %737 = vmatprep.subr.mxu0 0.0
    %738 = vmatpush1.msra.mxu0 0.0
    %739 = vmatprep.subr.mxu0 0.0
    %740 = vmatpush1.msra.mxu0 0.0
    %741 = vmatprep.subr.mxu0 0.0
    %742 = vmatpush1.msra.mxu0 0.0
    %743 = vmatprep.subr.mxu0 0.0
    %744 = vmatpush1.msra.mxu0 0.0
    %745 = vmatprep.subr.mxu0 0.0
    %746 = vmatpush1.msra.mxu0 0.0
    %747 = vmatprep.subr.mxu0 0.0
    %748 = vmatpush1.msra.mxu0 0.0
    %749 = vmatprep.subr.mxu0 0.0
    %750 = vmatpush1.msra.mxu0 0.0
    %751 = vmatprep.subr.mxu0 0.0
    %752 = vmatpush1.msra.mxu0 0.0
    %753 = vmatprep.subr.mxu0 0.0
    %754 = vmatpush1.msra.mxu0 0.0
    %755 = vmatprep.subr.mxu0 0.0
    %756 = vmatpush1.msra.mxu0 0.0
    %757 = vmatprep.subr.mxu0 0.0
    %758 = vmatpush1.msra.mxu0 0.0
    %759 = vmatprep.subr.mxu0 0.0
    %760 = vmatpush1.msra.mxu0 0.0
    %761 = vmatprep.subr.mxu0 0.0
    %762 = vmatpush1.msra.mxu0 0.0
    %763 = vmatprep.subr.mxu0 0.0
    %764 = vmatpush1.msra.mxu0 0.0
    %765 = vmatprep.subr.mxu0 0.0
    %766 = vmatpush1.msra.mxu0 0.0
    %767 = vmatprep.subr.mxu0 0.0
    %768 = vmatpush1.msra.mxu0 0.0
    %769 = vmatprep.subr.mxu0 0.0
    %770 = vmatpush1.msra.mxu0 0.0
    %771 = vmatprep.subr.mxu0 0.0
    %772 = vmatpush1.msra.mxu0 0.0
    %773 = vmatprep.subr.mxu0 0.0
    %774 = vmatpush1.msra.mxu0 0.0
    %775 = vmatprep.subr.mxu0 0.0
    %776 = vmatpush1.msra.mxu0 0.0
    %777 = vmatprep.subr.mxu0 0.0
    %778 = vmatpush1.msra.mxu0 0.0
    %779 = vmatprep.subr.mxu0 0.0
    %780 = vmatpush1.msra.mxu0 0.0
    %781 = vmatprep.subr.mxu0 0.0
    %782 = vmatpush1.msra.mxu0 0.0
    %783 = vmatprep.subr.mxu0 0.0
    %784 = vmatpush1.msra.mxu0 0.0
    %785 = vmatprep.mubr.f32.mxu0 0.0
    %786 = vmatmul.mubr.f32.gmra.mrb[0].mxu0 %v191
    %v787 = vpop.f32.mrb[0].mxu0
    %v788 = vadd.f32 0.0, %v787
    %v789 = vpop.f32.mrb[0].mxu0
    %790 = vmatprep.mubr.f32.mxu0 0.0
    %791 = vmatmul.mubr.f32.gmra.mrb[0].mxu0 %v194
    %v792 = vpop.f32.mrb[0].mxu0
    %v793 = vadd.f32 0.0, %v792
    %v794 = vpop.f32.mrb[0].mxu0
    %795 = vdwg.mxu0
    %796 = vmatprep.subr.mxu0 0.0
    %797 = vmatpush1.msra.mxu0 %v82
    %798 = vmatprep.subr.mxu0 0.0
    %799 = vmatpush1.msra.mxu0 %v83
    %800 = vmatprep.subr.mxu0 0.0
    %801 = vmatpush1.msra.mxu0 %v84
    %802 = vmatprep.subr.mxu0 0.0
    %803 = vmatpush1.msra.mxu0 %v85
    %804 = vmatprep.subr.mxu0 0.0
    %805 = vmatpush1.msra.mxu0 %v86
    %806 = vmatprep.subr.mxu0 0.0
    %807 = vmatpush1.msra.mxu0 %v87
    %808 = vmatprep.subr.mxu0 0.0
    %809 = vmatpush1.msra.mxu0 0.0
    %810 = vmatprep.subr.mxu0 0.0
    %811 = vmatpush1.msra.mxu0 0.0
    %812 = vmatprep.subr.mxu0 0.0
    %813 = vmatpush1.msra.mxu0 0.0
    %814 = vmatprep.subr.mxu0 0.0
    %815 = vmatpush1.msra.mxu0 0.0
    %816 = vmatprep.subr.mxu0 0.0
    %817 = vmatpush1.msra.mxu0 0.0
    %818 = vmatprep.subr.mxu0 0.0
    %819 = vmatpush1.msra.mxu0 0.0
    %820 = vmatprep.subr.mxu0 0.0
    %821 = vmatpush1.msra.mxu0 0.0
    %822 = vmatprep.subr.mxu0 0.0
    %823 = vmatpush1.msra.mxu0 0.0
    %824 = vmatprep.subr.mxu0 0.0
    %825 = vmatpush1.msra.mxu0 0.0
    %826 = vmatprep.subr.mxu0 0.0
    %827 = vmatpush1.msra.mxu0 0.0
    %828 = vmatprep.subr.mxu0 0.0
    %829 = vmatpush1.msra.mxu0 0.0
    %830 = vmatprep.subr.mxu0 0.0
    %831 = vmatpush1.msra.mxu0 0.0
    %832 = vmatprep.subr.mxu0 0.0
    %833 = vmatpush1.msra.mxu0 0.0
    %834 = vmatprep.subr.mxu0 0.0
    %835 = vmatpush1.msra.mxu0 0.0
    %836 = vmatprep.subr.mxu0 0.0
    %837 = vmatpush1.msra.mxu0 0.0
    %838 = vmatprep.subr.mxu0 0.0
    %839 = vmatpush1.msra.mxu0 0.0
    %840 = vmatprep.subr.mxu0 0.0
    %841 = vmatpush1.msra.mxu0 0.0
    %842 = vmatprep.subr.mxu0 0.0
    %843 = vmatpush1.msra.mxu0 0.0
    %844 = vmatprep.subr.mxu0 0.0
    %845 = vmatpush1.msra.mxu0 0.0
    %846 = vmatprep.subr.mxu0 0.0
    %847 = vmatpush1.msra.mxu0 0.0
    %848 = vmatprep.subr.mxu0 0.0
    %849 = vmatpush1.msra.mxu0 0.0
    %850 = vmatprep.subr.mxu0 0.0
    %851 = vmatpush1.msra.mxu0 0.0
    %852 = vmatprep.subr.mxu0 0.0
    %853 = vmatpush1.msra.mxu0 0.0
    %854 = vmatprep.subr.mxu0 0.0
    %855 = vmatpush1.msra.mxu0 0.0
    %856 = vmatprep.subr.mxu0 0.0
    %857 = vmatpush1.msra.mxu0 0.0
    %858 = vmatprep.subr.mxu0 0.0
    %859 = vmatpush1.msra.mxu0 0.0
    %860 = vmatprep.mubr.f32.mxu0 0.0
    %861 = vmatmul.mubr.f32.gmra.mrb[0].mxu0 %v191
    %v862 = vpop.f32.mrb[0].mxu0
    %v863 = vadd.f32 0.0, %v862
    %v864 = vpop.f32.mrb[0].mxu0
    %865 = vmatprep.mubr.f32.mxu0 0.0
    %866 = vmatmul.mubr.f32.gmra.mrb[0].mxu0 %v194
    %v867 = vpop.f32.mrb[0].mxu0
    %v868 = vadd.f32 0.0, %v867
    %v869 = vpop.f32.mrb[0].mxu0
    %870 = vdwg.mxu0
    %871 = vmatprep.subr.mxu0 0.0
    %872 = vmatpush1.msra.mxu0 %v88
    %873 = vmatprep.subr.mxu0 0.0
    %874 = vmatpush1.msra.mxu0 %v89
    %875 = vmatprep.subr.mxu0 0.0
    %876 = vmatpush1.msra.mxu0 %v90
    %877 = vmatprep.subr.mxu0 0.0
    %878 = vmatpush1.msra.mxu0 %v91
    %879 = vmatprep.subr.mxu0 0.0
    %880 = vmatpush1.msra.mxu0 %v92
    %881 = vmatprep.subr.mxu0 0.0
    %882 = vmatpush1.msra.mxu0 %v93
    %883 = vmatprep.subr.mxu0 0.0
    %884 = vmatpush1.msra.mxu0 0.0
    %885 = vmatprep.subr.mxu0 0.0
    %886 = vmatpush1.msra.mxu0 0.0
    %887 = vmatprep.subr.mxu0 0.0
    %888 = vmatpush1.msra.mxu0 0.0
    %889 = vmatprep.subr.mxu0 0.0
    %890 = vmatpush1.msra.mxu0 0.0
    %891 = vmatprep.subr.mxu0 0.0
    %892 = vmatpush1.msra.mxu0 0.0
    %893 = vmatprep.subr.mxu0 0.0
    %894 = vmatpush1.msra.mxu0 0.0
    %895 = vmatprep.subr.mxu0 0.0
    %896 = vmatpush1.msra.mxu0 0.0
    %897 = vmatprep.subr.mxu0 0.0
    %898 = vmatpush1.msra.mxu0 0.0
    %899 = vmatprep.subr.mxu0 0.0
    %900 = vmatpush1.msra.mxu0 0.0
    %901 = vmatprep.subr.mxu0 0.0
    %902 = vmatpush1.msra.mxu0 0.0
    %903 = vmatprep.subr.mxu0 0.0
    %904 = vmatpush1.msra.mxu0 0.0
    %905 = vmatprep.subr.mxu0 0.0
    %906 = vmatpush1.msra.mxu0 0.0
    %907 = vmatprep.subr.mxu0 0.0
    %908 = vmatpush1.msra.mxu0 0.0
    %909 = vmatprep.subr.mxu0 0.0
    %910 = vmatpush1.msra.mxu0 0.0
    %911 = vmatprep.subr.mxu0 0.0
    %912 = vmatpush1.msra.mxu0 0.0
    %913 = vmatprep.subr.mxu0 0.0
    %914 = vmatpush1.msra.mxu0 0.0
    %915 = vmatprep.subr.mxu0 0.0
    %916 = vmatpush1.msra.mxu0 0.0
    %917 = vmatprep.subr.mxu0 0.0
    %918 = vmatpush1.msra.mxu0 0.0
    %919 = vmatprep.subr.mxu0 0.0
    %920 = vmatpush1.msra.mxu0 0.0
    %921 = vmatprep.subr.mxu0 0.0
    %922 = vmatpush1.msra.mxu0 0.0
    %923 = vmatprep.subr.mxu0 0.0
    %924 = vmatpush1.msra.mxu0 0.0
    %925 = vmatprep.subr.mxu0 0.0
    %926 = vmatpush1.msra.mxu0 0.0
    %927 = vmatprep.subr.mxu0 0.0
    %928 = vmatpush1.msra.mxu0 0.0
    %929 = vmatprep.subr.mxu0 0.0
    %930 = vmatpush1.msra.mxu0 0.0
    %931 = vmatprep.subr.mxu0 0.0
    %932 = vmatpush1.msra.mxu0 0.0
    %933 = vmatprep.subr.mxu0 0.0
    %934 = vmatpush1.msra.mxu0 0.0
    %935 = vmatprep.mubr.f32.mxu0 0.0
    %936 = vmatmul.mubr.f32.gmra.mrb[0].mxu0 %v191
    %v937 = vpop.f32.mrb[0].mxu0
    %v938 = vadd.f32 0.0, %v937
    %v939 = vpop.f32.mrb[0].mxu0
    %940 = vmatprep.mubr.f32.mxu0 0.0
    %941 = vmatmul.mubr.f32.gmra.mrb[0].mxu0 %v194
    %v942 = vpop.f32.mrb[0].mxu0
    %v943 = vadd.f32 0.0, %v942
    %v944 = vpop.f32.mrb[0].mxu0
    %945 = vdwg.mxu0
    %946 = vmatprep.subr.mxu0 0.0
    %947 = vmatpush1.msra.mxu0 %v94
    %948 = vmatprep.subr.mxu0 0.0
    %949 = vmatpush1.msra.mxu0 %v95
    %950 = vmatprep.subr.mxu0 0.0
    %951 = vmatpush1.msra.mxu0 %v96
    %952 = vmatprep.subr.mxu0 0.0
    %953 = vmatpush1.msra.mxu0 %v97
    %954 = vmatprep.subr.mxu0 0.0
    %955 = vmatpush1.msra.mxu0 %v98
    %956 = vmatprep.subr.mxu0 0.0
    %957 = vmatpush1.msra.mxu0 %v99
    %958 = vmatprep.subr.mxu0 0.0
    %959 = vmatpush1.msra.mxu0 0.0
    %960 = vmatprep.subr.mxu0 0.0
    %961 = vmatpush1.msra.mxu0 0.0
    %962 = vmatprep.subr.mxu0 0.0
    %963 = vmatpush1.msra.mxu0 0.0
    %964 = vmatprep.subr.mxu0 0.0
    %965 = vmatpush1.msra.mxu0 0.0
    %966 = vmatprep.subr.mxu0 0.0
    %967 = vmatpush1.msra.mxu0 0.0
    %968 = vmatprep.subr.mxu0 0.0
    %969 = vmatpush1.msra.mxu0 0.0
    %970 = vmatprep.subr.mxu0 0.0
    %971 = vmatpush1.msra.mxu0 0.0
    %972 = vmatprep.subr.mxu0 0.0
    %973 = vmatpush1.msra.mxu0 0.0
    %974 = vmatprep.subr.mxu0 0.0
    %975 = vmatpush1.msra.mxu0 0.0
    %976 = vmatprep.subr.mxu0 0.0
    %977 = vmatpush1.msra.mxu0 0.0
    %978 = vmatprep.subr.mxu0 0.0
    %979 = vmatpush1.msra.mxu0 0.0
    %980 = vmatprep.subr.mxu0 0.0
    %981 = vmatpush1.msra.mxu0 0.0
    %982 = vmatprep.subr.mxu0 0.0
    %983 = vmatpush1.msra.mxu0 0.0
    %984 = vmatprep.subr.mxu0 0.0
    %985 = vmatpush1.msra.mxu0 0.0
    %986 = vmatprep.subr.mxu0 0.0
    %987 = vmatpush1.msra.mxu0 0.0
    %988 = vmatprep.subr.mxu0 0.0
    %989 = vmatpush1.msra.mxu0 0.0
    %990 = vmatprep.subr.mxu0 0.0
    %991 = vmatpush1.msra.mxu0 0.0
    %992 = vmatprep.subr.mxu0 0.0
    %993 = vmatpush1.msra.mxu0 0.0
    %994 = vmatprep.subr.mxu0 0.0
    %995 = vmatpush1.msra.mxu0 0.0
    %996 = vmatprep.subr.mxu0 0.0
    %997 = vmatpush1.msra.mxu0 0.0
    %998 = vmatprep.subr.mxu0 0.0
    %999 = vmatpush1.msra.mxu0 0.0
    %1000 = vmatprep.subr.mxu0 0.0
    %1001 = vmatpush1.msra.mxu0 0.0
    %1002 = vmatprep.subr.mxu0 0.0
    %1003 = vmatpush1.msra.mxu0 0.0
    %1004 = vmatprep.subr.mxu0 0.0
    %1005 = vmatpush1.msra.mxu0 0.0
    %1006 = vmatprep.subr.mxu0 0.0
    %1007 = vmatpush1.msra.mxu0 0.0
    %1008 = vmatprep.subr.mxu0 0.0
    %1009 = vmatpush1.msra.mxu0 0.0
    %1010 = vmatprep.mubr.f32.mxu0 0.0
    %1011 = vmatmul.mubr.f32.gmra.mrb[0].mxu0 %v191
    %v1012 = vpop.f32.mrb[0].mxu0
    %v1013 = vadd.f32 0.0, %v1012
    %v1014 = vpop.f32.mrb[0].mxu0
    %1015 = vmatprep.mubr.f32.mxu0 0.0
    %1016 = vmatmul.mubr.f32.gmra.mrb[0].mxu0 %v194
    %v1017 = vpop.f32.mrb[0].mxu0
    %v1018 = vadd.f32 0.0, %v1017
    %v1019 = vpop.f32.mrb[0].mxu0
    %1020 = vdwg.mxu0
    %1021 = vmatprep.subr.mxu0 0.0
    %1022 = vmatpush1.msra.mxu0 %v100
    %1023 = vmatprep.subr.mxu0 0.0
    %1024 = vmatpush1.msra.mxu0 %v101
    %1025 = vmatprep.subr.mxu0 0.0
    %1026 = vmatpush1.msra.mxu0 %v102
    %1027 = vmatprep.subr.mxu0 0.0
    %1028 = vmatpush1.msra.mxu0 %v103
    %1029 = vmatprep.subr.mxu0 0.0
    %1030 = vmatpush1.msra.mxu0 %v104
    %1031 = vmatprep.subr.mxu0 0.0
    %1032 = vmatpush1.msra.mxu0 %v105
    %1033 = vmatprep.subr.mxu0 0.0
    %1034 = vmatpush1.msra.mxu0 0.0
    %1035 = vmatprep.subr.mxu0 0.0
    %1036 = vmatpush1.msra.mxu0 0.0
    %1037 = vmatprep.subr.mxu0 0.0
    %1038 = vmatpush1.msra.mxu0 0.0
    %1039 = vmatprep.subr.mxu0 0.0
    %1040 = vmatpush1.msra.mxu0 0.0
    %1041 = vmatprep.subr.mxu0 0.0
    %1042 = vmatpush1.msra.mxu0 0.0
    %1043 = vmatprep.subr.mxu0 0.0
    %1044 = vmatpush1.msra.mxu0 0.0
    %1045 = vmatprep.subr.mxu0 0.0
    %1046 = vmatpush1.msra.mxu0 0.0
    %1047 = vmatprep.subr.mxu0 0.0
    %1048 = vmatpush1.msra.mxu0 0.0
    %1049 = vmatprep.subr.mxu0 0.0
    %1050 = vmatpush1.msra.mxu0 0.0
    %1051 = vmatprep.subr.mxu0 0.0
    %1052 = vmatpush1.msra.mxu0 0.0
    %1053 = vmatprep.subr.mxu0 0.0
    %1054 = vmatpush1.msra.mxu0 0.0
    %1055 = vmatprep.subr.mxu0 0.0
    %1056 = vmatpush1.msra.mxu0 0.0
    %1057 = vmatprep.subr.mxu0 0.0
    %1058 = vmatpush1.msra.mxu0 0.0
    %1059 = vmatprep.subr.mxu0 0.0
    %1060 = vmatpush1.msra.mxu0 0.0
    %1061 = vmatprep.subr.mxu0 0.0
    %1062 = vmatpush1.msra.mxu0 0.0
    %1063 = vmatprep.subr.mxu0 0.0
    %1064 = vmatpush1.msra.mxu0 0.0
    %1065 = vmatprep.subr.mxu0 0.0
    %1066 = vmatpush1.msra.mxu0 0.0
    %1067 = vmatprep.subr.mxu0 0.0
    %1068 = vmatpush1.msra.mxu0 0.0
    %1069 = vmatprep.subr.mxu0 0.0
    %1070 = vmatpush1.msra.mxu0 0.0
    %1071 = vmatprep.subr.mxu0 0.0
    %1072 = vmatpush1.msra.mxu0 0.0
    %1073 = vmatprep.subr.mxu0 0.0
    %1074 = vmatpush1.msra.mxu0 0.0
    %1075 = vmatprep.subr.mxu0 0.0
    %1076 = vmatpush1.msra.mxu0 0.0
    %1077 = vmatprep.subr.mxu0 0.0
    %1078 = vmatpush1.msra.mxu0 0.0
    %1079 = vmatprep.subr.mxu0 0.0
    %1080 = vmatpush1.msra.mxu0 0.0
    %1081 = vmatprep.subr.mxu0 0.0
    %1082 = vmatpush1.msra.mxu0 0.0
    %1083 = vmatprep.subr.mxu0 0.0
    %1084 = vmatpush1.msra.mxu0 0.0
    %1085 = vmatprep.mubr.f32.mxu0 0.0
    %1086 = vmatmul.mubr.f32.gmra.mrb[0].mxu0 %v191
    %v1087 = vpop.f32.mrb[0].mxu0
    %v1088 = vadd.f32 0.0, %v1087
    %v1089 = vpop.f32.mrb[0].mxu0
    %1090 = vmatprep.mubr.f32.mxu0 0.0
    %1091 = vmatmul.mubr.f32.gmra.mrb[0].mxu0 %v194
    %v1092 = vpop.f32.mrb[0].mxu0
    %v1093 = vadd.f32 0.0, %v1092
    %v1094 = vpop.f32.mrb[0].mxu0
    %1095 = vdwg.mxu0
    %1096 = vmatprep.subr.mxu0 0.0
    %1097 = vmatpush1.msra.mxu0 %v106
    %1098 = vmatprep.subr.mxu0 0.0
    %1099 = vmatpush1.msra.mxu0 %v107
    %1100 = vmatprep.subr.mxu0 0.0
    %1101 = vmatpush1.msra.mxu0 %v108
    %1102 = vmatprep.subr.mxu0 0.0
    %1103 = vmatpush1.msra.mxu0 %v109
    %1104 = vmatprep.subr.mxu0 0.0
    %1105 = vmatpush1.msra.mxu0 %v110
    %1106 = vmatprep.subr.mxu0 0.0
    %1107 = vmatpush1.msra.mxu0 %v111
    %1108 = vmatprep.subr.mxu0 0.0
    %1109 = vmatpush1.msra.mxu0 0.0
    %1110 = vmatprep.subr.mxu0 0.0
    %1111 = vmatpush1.msra.mxu0 0.0
    %1112 = vmatprep.subr.mxu0 0.0
    %1113 = vmatpush1.msra.mxu0 0.0
    %1114 = vmatprep.subr.mxu0 0.0
    %1115 = vmatpush1.msra.mxu0 0.0
    %1116 = vmatprep.subr.mxu0 0.0
    %1117 = vmatpush1.msra.mxu0 0.0
    %1118 = vmatprep.subr.mxu0 0.0
    %1119 = vmatpush1.msra.mxu0 0.0
    %1120 = vmatprep.subr.mxu0 0.0
    %1121 = vmatpush1.msra.mxu0 0.0
    %1122 = vmatprep.subr.mxu0 0.0
    %1123 = vmatpush1.msra.mxu0 0.0
    %1124 = vmatprep.subr.mxu0 0.0
    %1125 = vmatpush1.msra.mxu0 0.0
    %1126 = vmatprep.subr.mxu0 0.0
    %1127 = vmatpush1.msra.mxu0 0.0
    %1128 = vmatprep.subr.mxu0 0.0
    %1129 = vmatpush1.msra.mxu0 0.0
    %1130 = vmatprep.subr.mxu0 0.0
    %1131 = vmatpush1.msra.mxu0 0.0
    %1132 = vmatprep.subr.mxu0 0.0
    %1133 = vmatpush1.msra.mxu0 0.0
    %1134 = vmatprep.subr.mxu0 0.0
    %1135 = vmatpush1.msra.mxu0 0.0
    %1136 = vmatprep.subr.mxu0 0.0
    %1137 = vmatpush1.msra.mxu0 0.0
    %1138 = vmatprep.subr.mxu0 0.0
    %1139 = vmatpush1.msra.mxu0 0.0
    %1140 = vmatprep.subr.mxu0 0.0
    %1141 = vmatpush1.msra.mxu0 0.0
    %1142 = vmatprep.subr.mxu0 0.0
    %1143 = vmatpush1.msra.mxu0 0.0
    %1144 = vmatprep.subr.mxu0 0.0
    %1145 = vmatpush1.msra.mxu0 0.0
    %1146 = vmatprep.subr.mxu0 0.0
    %1147 = vmatpush1.msra.mxu0 0.0
    %1148 = vmatprep.subr.mxu0 0.0
    %1149 = vmatpush1.msra.mxu0 0.0
    %1150 = vmatprep.subr.mxu0 0.0
    %1151 = vmatpush1.msra.mxu0 0.0
    %1152 = vmatprep.subr.mxu0 0.0
    %1153 = vmatpush1.msra.mxu0 0.0
    %1154 = vmatprep.subr.mxu0 0.0
    %1155 = vmatpush1.msra.mxu0 0.0
    %1156 = vmatprep.subr.mxu0 0.0
    %1157 = vmatpush1.msra.mxu0 0.0
    %1158 = vmatprep.subr.mxu0 0.0
    %1159 = vmatpush1.msra.mxu0 0.0
    %1160 = vmatprep.mubr.f32.mxu0 0.0
    %1161 = vmatmul.mubr.f32.gmra.mrb[0].mxu0 %v191
    %v1162 = vpop.f32.mrb[0].mxu0
    %v1163 = vadd.f32 0.0, %v1162
    %v1164 = vpop.f32.mrb[0].mxu0
    %1165 = vmatprep.mubr.f32.mxu0 0.0
    %1166 = vmatmul.mubr.f32.gmra.mrb[0].mxu0 %v194
    %v1167 = vpop.f32.mrb[0].mxu0
    %v1168 = vadd.f32 0.0, %v1167
    %v1169 = vpop.f32.mrb[0].mxu0
    %1170 = vdwg.mxu0
    %1171 = vmatprep.subr.mxu0 0.0
    %1172 = vmatpush1.msra.mxu0 %v112
    %1173 = vmatprep.subr.mxu0 0.0
    %1174 = vmatpush1.msra.mxu0 %v113
    %1175 = vmatprep.subr.mxu0 0.0
    %1176 = vmatpush1.msra.mxu0 %v114
    %1177 = vmatprep.subr.mxu0 0.0
    %1178 = vmatpush1.msra.mxu0 %v115
    %1179 = vmatprep.subr.mxu0 0.0
    %1180 = vmatpush1.msra.mxu0 %v116
    %1181 = vmatprep.subr.mxu0 0.0
    %1182 = vmatpush1.msra.mxu0 %v117
    %1183 = vmatprep.subr.mxu0 0.0
    %1184 = vmatpush1.msra.mxu0 0.0
    %1185 = vmatprep.subr.mxu0 0.0
    %1186 = vmatpush1.msra.mxu0 0.0
    %1187 = vmatprep.subr.mxu0 0.0
    %1188 = vmatpush1.msra.mxu0 0.0
    %1189 = vmatprep.subr.mxu0 0.0
    %1190 = vmatpush1.msra.mxu0 0.0
    %1191 = vmatprep.subr.mxu0 0.0
    %1192 = vmatpush1.msra.mxu0 0.0
    %1193 = vmatprep.subr.mxu0 0.0
    %1194 = vmatpush1.msra.mxu0 0.0
    %1195 = vmatprep.subr.mxu0 0.0
    %1196 = vmatpush1.msra.mxu0 0.0
    %1197 = vmatprep.subr.mxu0 0.0
    %1198 = vmatpush1.msra.mxu0 0.0
    %1199 = vmatprep.subr.mxu0 0.0
    %1200 = vmatpush1.msra.mxu0 0.0
    %1201 = vmatprep.subr.mxu0 0.0
    %1202 = vmatpush1.msra.mxu0 0.0
    %1203 = vmatprep.subr.mxu0 0.0
    %1204 = vmatpush1.msra.mxu0 0.0
    %1205 = vmatprep.subr.mxu0 0.0
    %1206 = vmatpush1.msra.mxu0 0.0
    %1207 = vmatprep.subr.mxu0 0.0
    %1208 = vmatpush1.msra.mxu0 0.0
    %1209 = vmatprep.subr.mxu0 0.0
    %1210 = vmatpush1.msra.mxu0 0.0
    %1211 = vmatprep.subr.mxu0 0.0
    %1212 = vmatpush1.msra.mxu0 0.0
    %1213 = vmatprep.subr.mxu0 0.0
    %1214 = vmatpush1.msra.mxu0 0.0
    %1215 = vmatprep.subr.mxu0 0.0
    %1216 = vmatpush1.msra.mxu0 0.0
    %1217 = vmatprep.subr.mxu0 0.0
    %1218 = vmatpush1.msra.mxu0 0.0
    %1219 = vmatprep.subr.mxu0 0.0
    %1220 = vmatpush1.msra.mxu0 0.0
    %1221 = vmatprep.subr.mxu0 0.0
    %1222 = vmatpush1.msra.mxu0 0.0
    %1223 = vmatprep.subr.mxu0 0.0
    %1224 = vmatpush1.msra.mxu0 0.0
    %1225 = vmatprep.subr.mxu0 0.0
    %1226 = vmatpush1.msra.mxu0 0.0
    %1227 = vmatprep.subr.mxu0 0.0
    %1228 = vmatpush1.msra.mxu0 0.0
    %1229 = vmatprep.subr.mxu0 0.0
    %1230 = vmatpush1.msra.mxu0 0.0
    %1231 = vmatprep.subr.mxu0 0.0
    %1232 = vmatpush1.msra.mxu0 0.0
    %1233 = vmatprep.subr.mxu0 0.0
    %1234 = vmatpush1.msra.mxu0 0.0
    %1235 = vmatprep.mubr.f32.mxu0 0.0
    %1236 = vmatmul.mubr.f32.gmra.mrb[0].mxu0 %v191
    %v1237 = vpop.f32.mrb[0].mxu0
    %v1238 = vadd.f32 0.0, %v1237
    %v1239 = vpop.f32.mrb[0].mxu0
    %1240 = vmatprep.mubr.f32.mxu0 0.0
    %1241 = vmatmul.mubr.f32.gmra.mrb[0].mxu0 %v194
    %v1242 = vpop.f32.mrb[0].mxu0
    %v1243 = vadd.f32 0.0, %v1242
    %v1244 = vpop.f32.mrb[0].mxu0
    %1245 = vdwg.mxu0
    %1246 = vmatprep.subr.mxu0 0.0
    %1247 = vmatpush1.msra.mxu0 %v118
    %1248 = vmatprep.subr.mxu0 0.0
    %1249 = vmatpush1.msra.mxu0 %v119
    %1250 = vmatprep.subr.mxu0 0.0
    %1251 = vmatpush1.msra.mxu0 %v120
    %1252 = vmatprep.subr.mxu0 0.0
    %1253 = vmatpush1.msra.mxu0 %v121
    %1254 = vmatprep.subr.mxu0 0.0
    %1255 = vmatpush1.msra.mxu0 %v122
    %1256 = vmatprep.subr.mxu0 0.0
    %1257 = vmatpush1.msra.mxu0 %v123
    %1258 = vmatprep.subr.mxu0 0.0
    %1259 = vmatpush1.msra.mxu0 0.0
    %1260 = vmatprep.subr.mxu0 0.0
    %1261 = vmatpush1.msra.mxu0 0.0
    %1262 = vmatprep.subr.mxu0 0.0
    %1263 = vmatpush1.msra.mxu0 0.0
    %1264 = vmatprep.subr.mxu0 0.0
    %1265 = vmatpush1.msra.mxu0 0.0
    %1266 = vmatprep.subr.mxu0 0.0
    %1267 = vmatpush1.msra.mxu0 0.0
    %1268 = vmatprep.subr.mxu0 0.0
    %1269 = vmatpush1.msra.mxu0 0.0
    %1270 = vmatprep.subr.mxu0 0.0
    %1271 = vmatpush1.msra.mxu0 0.0
    %1272 = vmatprep.subr.mxu0 0.0
    %1273 = vmatpush1.msra.mxu0 0.0
    %1274 = vmatprep.subr.mxu0 0.0
    %1275 = vmatpush1.msra.mxu0 0.0
    %1276 = vmatprep.subr.mxu0 0.0
    %1277 = vmatpush1.msra.mxu0 0.0
    %1278 = vmatprep.subr.mxu0 0.0
    %1279 = vmatpush1.msra.mxu0 0.0
    %1280 = vmatprep.subr.mxu0 0.0
    %1281 = vmatpush1.msra.mxu0 0.0
    %1282 = vmatprep.subr.mxu0 0.0
    %1283 = vmatpush1.msra.mxu0 0.0
    %1284 = vmatprep.subr.mxu0 0.0
    %1285 = vmatpush1.msra.mxu0 0.0
    %1286 = vmatprep.subr.mxu0 0.0
    %1287 = vmatpush1.msra.mxu0 0.0
    %1288 = vmatprep.subr.mxu0 0.0
    %1289 = vmatpush1.msra.mxu0 0.0
    %1290 = vmatprep.subr.mxu0 0.0
    %1291 = vmatpush1.msra.mxu0 0.0
    %1292 = vmatprep.subr.mxu0 0.0
    %1293 = vmatpush1.msra.mxu0 0.0
    %1294 = vmatprep.subr.mxu0 0.0
    %1295 = vmatpush1.msra.mxu0 0.0
    %1296 = vmatprep.subr.mxu0 0.0
    %1297 = vmatpush1.msra.mxu0 0.0
    %1298 = vmatprep.subr.mxu0 0.0
    %1299 = vmatpush1.msra.mxu0 0.0
    %1300 = vmatprep.subr.mxu0 0.0
    %1301 = vmatpush1.msra.mxu0 0.0
    %1302 = vmatprep.subr.mxu0 0.0
    %1303 = vmatpush1.msra.mxu0 0.0
    %1304 = vmatprep.subr.mxu0 0.0
    %1305 = vmatpush1.msra.mxu0 0.0
    %1306 = vmatprep.subr.mxu0 0.0
    %1307 = vmatpush1.msra.mxu0 0.0
    %1308 = vmatprep.subr.mxu0 0.0
    %1309 = vmatpush1.msra.mxu0 0.0
    %1310 = vmatprep.mubr.f32.mxu0 0.0
    %1311 = vmatmul.mubr.f32.gmra.mrb[0].mxu0 %v191
    %v1312 = vpop.f32.mrb[0].mxu0
    %v1313 = vadd.f32 0.0, %v1312
    %v1314 = vpop.f32.mrb[0].mxu0
    %1315 = vmatprep.mubr.f32.mxu0 0.0
    %1316 = vmatmul.mubr.f32.gmra.mrb[0].mxu0 %v194
    %v1317 = vpop.f32.mrb[0].mxu0
    %v1318 = vadd.f32 0.0, %v1317
    %v1319 = vpop.f32.mrb[0].mxu0
    %1320 = vdwg.mxu0
    %1321 = vmatprep.subr.mxu0 0.0
    %1322 = vmatpush1.msra.mxu0 %v124
    %1323 = vmatprep.subr.mxu0 0.0
    %1324 = vmatpush1.msra.mxu0 %v125
    %1325 = vmatprep.subr.mxu0 0.0
    %1326 = vmatpush1.msra.mxu0 %v126
    %1327 = vmatprep.subr.mxu0 0.0
    %1328 = vmatpush1.msra.mxu0 %v127
    %1329 = vmatprep.subr.mxu0 0.0
    %1330 = vmatpush1.msra.mxu0 %v128
    %1331 = vmatprep.subr.mxu0 0.0
    %1332 = vmatpush1.msra.mxu0 %v129
    %1333 = vmatprep.subr.mxu0 0.0
    %1334 = vmatpush1.msra.mxu0 0.0
    %1335 = vmatprep.subr.mxu0 0.0
    %1336 = vmatpush1.msra.mxu0 0.0
    %1337 = vmatprep.subr.mxu0 0.0
    %1338 = vmatpush1.msra.mxu0 0.0
    %1339 = vmatprep.subr.mxu0 0.0
    %1340 = vmatpush1.msra.mxu0 0.0
    %1341 = vmatprep.subr.mxu0 0.0
    %1342 = vmatpush1.msra.mxu0 0.0
    %1343 = vmatprep.subr.mxu0 0.0
    %1344 = vmatpush1.msra.mxu0 0.0
    %1345 = vmatprep.subr.mxu0 0.0
    %1346 = vmatpush1.msra.mxu0 0.0
    %1347 = vmatprep.subr.mxu0 0.0
    %1348 = vmatpush1.msra.mxu0 0.0
    %1349 = vmatprep.subr.mxu0 0.0
    %1350 = vmatpush1.msra.mxu0 0.0
    %1351 = vmatprep.subr.mxu0 0.0
    %1352 = vmatpush1.msra.mxu0 0.0
    %1353 = vmatprep.subr.mxu0 0.0
    %1354 = vmatpush1.msra.mxu0 0.0
    %1355 = vmatprep.subr.mxu0 0.0
    %1356 = vmatpush1.msra.mxu0 0.0
    %1357 = vmatprep.subr.mxu0 0.0
    %1358 = vmatpush1.msra.mxu0 0.0
    %1359 = vmatprep.subr.mxu0 0.0
    %1360 = vmatpush1.msra.mxu0 0.0
    %1361 = vmatprep.subr.mxu0 0.0
    %1362 = vmatpush1.msra.mxu0 0.0
    %1363 = vmatprep.subr.mxu0 0.0
    %1364 = vmatpush1.msra.mxu0 0.0
    %1365 = vmatprep.subr.mxu0 0.0
    %1366 = vmatpush1.msra.mxu0 0.0
    %1367 = vmatprep.subr.mxu0 0.0
    %1368 = vmatpush1.msra.mxu0 0.0
    %1369 = vmatprep.subr.mxu0 0.0
    %1370 = vmatpush1.msra.mxu0 0.0
    %1371 = vmatprep.subr.mxu0 0.0
    %1372 = vmatpush1.msra.mxu0 0.0
    %1373 = vmatprep.subr.mxu0 0.0
    %1374 = vmatpush1.msra.mxu0 0.0
    %1375 = vmatprep.subr.mxu0 0.0
    %1376 = vmatpush1.msra.mxu0 0.0
    %1377 = vmatprep.subr.mxu0 0.0
    %1378 = vmatpush1.msra.mxu0 0.0
    %1379 = vmatprep.subr.mxu0 0.0
    %1380 = vmatpush1.msra.mxu0 0.0
    %1381 = vmatprep.subr.mxu0 0.0
    %1382 = vmatpush1.msra.mxu0 0.0
    %1383 = vmatprep.subr.mxu0 0.0
    %1384 = vmatpush1.msra.mxu0 0.0
    %1385 = vmatprep.mubr.f32.mxu0 0.0
    %1386 = vmatmul.mubr.f32.gmra.mrb[0].mxu0 %v191
    %v1387 = vpop.f32.mrb[0].mxu0
    %v1388 = vadd.f32 0.0, %v1387
    %v1389 = vpop.f32.mrb[0].mxu0
    %1390 = vmatprep.mubr.f32.mxu0 0.0
    %1391 = vmatmul.mubr.f32.gmra.mrb[0].mxu0 %v194
    %v1392 = vpop.f32.mrb[0].mxu0
    %v1393 = vadd.f32 0.0, %v1392
    %v1394 = vpop.f32.mrb[0].mxu0
    %1395 = vdwg.mxu0
    %1396 = vmatprep.subr.mxu0 0.0
    %1397 = vmatpush1.msra.mxu0 %v130
    %1398 = vmatprep.subr.mxu0 0.0
    %1399 = vmatpush1.msra.mxu0 %v131
    %1400 = vmatprep.subr.mxu0 0.0
    %1401 = vmatpush1.msra.mxu0 %v132
    %1402 = vmatprep.subr.mxu0 0.0
    %1403 = vmatpush1.msra.mxu0 %v133
    %1404 = vmatprep.subr.mxu0 0.0
    %1405 = vmatpush1.msra.mxu0 %v134
    %1406 = vmatprep.subr.mxu0 0.0
    %1407 = vmatpush1.msra.mxu0 %v135
    %1408 = vmatprep.subr.mxu0 0.0
    %1409 = vmatpush1.msra.mxu0 0.0
    %1410 = vmatprep.subr.mxu0 0.0
    %1411 = vmatpush1.msra.mxu0 0.0
    %1412 = vmatprep.subr.mxu0 0.0
    %1413 = vmatpush1.msra.mxu0 0.0
    %1414 = vmatprep.subr.mxu0 0.0
    %1415 = vmatpush1.msra.mxu0 0.0
    %1416 = vmatprep.subr.mxu0 0.0
    %1417 = vmatpush1.msra.mxu0 0.0
    %1418 = vmatprep.subr.mxu0 0.0
    %1419 = vmatpush1.msra.mxu0 0.0
    %1420 = vmatprep.subr.mxu0 0.0
    %1421 = vmatpush1.msra.mxu0 0.0
    %1422 = vmatprep.subr.mxu0 0.0
    %1423 = vmatpush1.msra.mxu0 0.0
    %1424 = vmatprep.subr.mxu0 0.0
    %1425 = vmatpush1.msra.mxu0 0.0
    %1426 = vmatprep.subr.mxu0 0.0
    %1427 = vmatpush1.msra.mxu0 0.0
    %1428 = vmatprep.subr.mxu0 0.0
    %1429 = vmatpush1.msra.mxu0 0.0
    %1430 = vmatprep.subr.mxu0 0.0
    %1431 = vmatpush1.msra.mxu0 0.0
    %1432 = vmatprep.subr.mxu0 0.0
    %1433 = vmatpush1.msra.mxu0 0.0
    %1434 = vmatprep.subr.mxu0 0.0
    %1435 = vmatpush1.msra.mxu0 0.0
    %1436 = vmatprep.subr.mxu0 0.0
    %1437 = vmatpush1.msra.mxu0 0.0
    %1438 = vmatprep.subr.mxu0 0.0
    %1439 = vmatpush1.msra.mxu0 0.0
    %1440 = vmatprep.subr.mxu0 0.0
    %1441 = vmatpush1.msra.mxu0 0.0
    %1442 = vmatprep.subr.mxu0 0.0
    %1443 = vmatpush1.msra.mxu0 0.0
    %1444 = vmatprep.subr.mxu0 0.0
    %1445 = vmatpush1.msra.mxu0 0.0
    %1446 = vmatprep.subr.mxu0 0.0
    %1447 = vmatpush1.msra.mxu0 0.0
    %1448 = vmatprep.subr.mxu0 0.0
    %1449 = vmatpush1.msra.mxu0 0.0
    %1450 = vmatprep.subr.mxu0 0.0
    %1451 = vmatpush1.msra.mxu0 0.0
    %1452 = vmatprep.subr.mxu0 0.0
    %1453 = vmatpush1.msra.mxu0 0.0
    %1454 = vmatprep.subr.mxu0 0.0
    %1455 = vmatpush1.msra.mxu0 0.0
    %1456 = vmatprep.subr.mxu0 0.0
    %1457 = vmatpush1.msra.mxu0 0.0
    %1458 = vmatprep.subr.mxu0 0.0
    %1459 = vmatpush1.msra.mxu0 0.0
    %1460 = vmatprep.mubr.f32.mxu0 0.0
    %1461 = vmatmul.mubr.f32.gmra.mrb[0].mxu0 %v191
    %v1462 = vpop.f32.mrb[0].mxu0
    %v1463 = vadd.f32 0.0, %v1462
    %v1464 = vpop.f32.mrb[0].mxu0
    %1465 = vmatprep.mubr.f32.mxu0 0.0
    %1466 = vmatmul.mubr.f32.gmra.mrb[0].mxu0 %v194
    %v1467 = vpop.f32.mrb[0].mxu0
    %v1468 = vadd.f32 0.0, %v1467
    %v1469 = vpop.f32.mrb[0].mxu0
    %1470 = vdwg.mxu0
    %1471 = vmatprep.subr.mxu0 0.0
    %1472 = vmatpush1.msra.mxu0 %v136
    %1473 = vmatprep.subr.mxu0 0.0
    %1474 = vmatpush1.msra.mxu0 %v137
    %1475 = vmatprep.subr.mxu0 0.0
    %1476 = vmatpush1.msra.mxu0 %v138
    %1477 = vmatprep.subr.mxu0 0.0
    %1478 = vmatpush1.msra.mxu0 %v139
    %1479 = vmatprep.subr.mxu0 0.0
    %1480 = vmatpush1.msra.mxu0 %v140
    %1481 = vmatprep.subr.mxu0 0.0
    %1482 = vmatpush1.msra.mxu0 %v141
    %1483 = vmatprep.subr.mxu0 0.0
    %1484 = vmatpush1.msra.mxu0 0.0
    %1485 = vmatprep.subr.mxu0 0.0
    %1486 = vmatpush1.msra.mxu0 0.0
    %1487 = vmatprep.subr.mxu0 0.0
    %1488 = vmatpush1.msra.mxu0 0.0
    %1489 = vmatprep.subr.mxu0 0.0
    %1490 = vmatpush1.msra.mxu0 0.0
    %1491 = vmatprep.subr.mxu0 0.0
    %1492 = vmatpush1.msra.mxu0 0.0
    %1493 = vmatprep.subr.mxu0 0.0
    %1494 = vmatpush1.msra.mxu0 0.0
    %1495 = vmatprep.subr.mxu0 0.0
    %1496 = vmatpush1.msra.mxu0 0.0
    %1497 = vmatprep.subr.mxu0 0.0
    %1498 = vmatpush1.msra.mxu0 0.0
    %1499 = vmatprep.subr.mxu0 0.0
    %1500 = vmatpush1.msra.mxu0 0.0
    %1501 = vmatprep.subr.mxu0 0.0
    %1502 = vmatpush1.msra.mxu0 0.0
    %1503 = vmatprep.subr.mxu0 0.0
    %1504 = vmatpush1.msra.mxu0 0.0
    %1505 = vmatprep.subr.mxu0 0.0
    %1506 = vmatpush1.msra.mxu0 0.0
    %1507 = vmatprep.subr.mxu0 0.0
    %1508 = vmatpush1.msra.mxu0 0.0
    %1509 = vmatprep.subr.mxu0 0.0
    %1510 = vmatpush1.msra.mxu0 0.0
    %1511 = vmatprep.subr.mxu0 0.0
    %1512 = vmatpush1.msra.mxu0 0.0
    %1513 = vmatprep.subr.mxu0 0.0
    %1514 = vmatpush1.msra.mxu0 0.0
    %1515 = vmatprep.subr.mxu0 0.0
    %1516 = vmatpush1.msra.mxu0 0.0
    %1517 = vmatprep.subr.mxu0 0.0
    %1518 = vmatpush1.msra.mxu0 0.0
    %1519 = vmatprep.subr.mxu0 0.0
    %1520 = vmatpush1.msra.mxu0 0.0
    %1521 = vmatprep.subr.mxu0 0.0
    %1522 = vmatpush1.msra.mxu0 0.0
    %1523 = vmatprep.subr.mxu0 0.0
    %1524 = vmatpush1.msra.mxu0 0.0
    %1525 = vmatprep.subr.mxu0 0.0
    %1526 = vmatpush1.msra.mxu0 0.0
    %1527 = vmatprep.subr.mxu0 0.0
    %1528 = vmatpush1.msra.mxu0 0.0
    %1529 = vmatprep.subr.mxu0 0.0
    %1530 = vmatpush1.msra.mxu0 0.0
    %1531 = vmatprep.subr.mxu0 0.0
    %1532 = vmatpush1.msra.mxu0 0.0
    %1533 = vmatprep.subr.mxu0 0.0
    %1534 = vmatpush1.msra.mxu0 0.0
    %1535 = vmatprep.mubr.f32.mxu0 0.0
    %1536 = vmatmul.mubr.f32.gmra.mrb[0].mxu0 %v191
    %v1537 = vpop.f32.mrb[0].mxu0
    %v1538 = vadd.f32 0.0, %v1537
    %v1539 = vpop.f32.mrb[0].mxu0
    %1540 = vmatprep.mubr.f32.mxu0 0.0
    %1541 = vmatmul.mubr.f32.gmra.mrb[0].mxu0 %v194
    %v1542 = vpop.f32.mrb[0].mxu0
    %v1543 = vadd.f32 0.0, %v1542
    %v1544 = vpop.f32.mrb[0].mxu0
    %1545 = vdwg.mxu0
    %vm1546 = vcmask 64512
    %v1548 = vsel %vm1546, %v263, 0
    %v1551 = vsel %vm1546, %v713, 0
    %1553 = vmatprep.subr.mxu0 0.0
    %1554 = vmatpush1.xpose.msra.mxu0 %v1551
    %1555 = vmatprep.subr.mxu0 0.0
    %1556 = vmatpush1.xpose.msra.mxu0 0.0
    %1557 = vmatprep.subr.mxu0 0.0
    %1558 = vmatpush1.xpose.msra.mxu0 0.0
    %1559 = vmatprep.subr.mxu0 0.0
    %1560 = vmatpush1.xpose.msra.mxu0 0.0
    %1561 = vmatprep.subr.mxu0 0.0
    %1562 = vmatpush1.xpose.msra.mxu0 0.0
    %1563 = vmatprep.subr.mxu0 0.0
    %1564 = vmatpush1.xpose.msra.mxu0 0.0
    %1565 = vmatprep.subr.mxu0 0.0
    %1566 = vmatpush1.xpose.msra.mxu0 0.0
    %1567 = vmatprep.subr.mxu0 0.0
    %1568 = vmatpush1.xpose.msra.mxu0 0.0
    %1569 = vmatprep.subr.mxu0 0.0
    %1570 = vmatpush1.xpose.msra.mxu0 0.0
    %1571 = vmatprep.subr.mxu0 0.0
    %1572 = vmatpush1.xpose.msra.mxu0 0.0
    %1573 = vmatprep.subr.mxu0 0.0
    %1574 = vmatpush1.xpose.msra.mxu0 0.0
    %1575 = vmatprep.subr.mxu0 0.0
    %1576 = vmatpush1.xpose.msra.mxu0 0.0
    %1577 = vmatprep.subr.mxu0 0.0
    %1578 = vmatpush1.xpose.msra.mxu0 0.0
    %1579 = vmatprep.subr.mxu0 0.0
    %1580 = vmatpush1.xpose.msra.mxu0 0.0
    %1581 = vmatprep.subr.mxu0 0.0
    %1582 = vmatpush1.xpose.msra.mxu0 0.0
    %1583 = vmatprep.subr.mxu0 0.0
    %1584 = vmatpush1.xpose.msra.mxu0 0.0
    %1585 = vmatprep.subr.mxu0 0.0
    %1586 = vmatpush1.xpose.msra.mxu0 0.0
    %1587 = vmatprep.subr.mxu0 0.0
    %1588 = vmatpush1.xpose.msra.mxu0 0.0
    %1589 = vmatprep.subr.mxu0 0.0
    %1590 = vmatpush1.xpose.msra.mxu0 0.0
    %1591 = vmatprep.subr.mxu0 0.0
    %1592 = vmatpush1.xpose.msra.mxu0 0.0
    %1593 = vmatprep.subr.mxu0 0.0
    %1594 = vmatpush1.xpose.msra.mxu0 0.0
    %1595 = vmatprep.subr.mxu0 0.0
    %1596 = vmatpush1.xpose.msra.mxu0 0.0
    %1597 = vmatprep.subr.mxu0 0.0
    %1598 = vmatpush1.xpose.msra.mxu0 0.0
    %1599 = vmatprep.subr.mxu0 0.0
    %1600 = vmatpush1.xpose.msra.mxu0 0.0
    %1601 = vmatprep.subr.mxu0 0.0
    %1602 = vmatpush1.xpose.msra.mxu0 0.0
    %1603 = vmatprep.subr.mxu0 0.0
    %1604 = vmatpush1.xpose.msra.mxu0 0.0
    %1605 = vmatprep.subr.mxu0 0.0
    %1606 = vmatpush1.xpose.msra.mxu0 0.0
    %1607 = vmatprep.subr.mxu0 0.0
    %1608 = vmatpush1.xpose.msra.mxu0 0.0
    %1609 = vmatprep.subr.mxu0 0.0
    %1610 = vmatpush1.xpose.msra.mxu0 0.0
    %1611 = vmatprep.subr.mxu0 0.0
    %1612 = vmatpush1.xpose.msra.mxu0 0.0
    %1613 = vmatprep.subr.mxu0 0.0
    %1614 = vmatpush1.xpose.msra.mxu0 0.0
    %1615 = vmatprep.subr.mxu0 0.0
    %1616 = vmatpush1.xpose.msra.mxu0 0.0
    %1617 = vmatprep.mubr.f32.mxu0 0.0
    %1618 = vmatmul.mubr.f32.gmra.mrb[0].mxu0 %v1548
    %v1619 = vpop.f32.mrb[0].mxu0
    %v1620 = vadd.f32 0.0, %v1619
    %v1621 = vpop.f32.mrb[0].mxu0
    %1622 = vdwg.mxu0
    %v1624 = vsel %vm1546, %v338, 0
    %v1627 = vsel %vm1546, %v788, 0
    %1629 = vmatprep.subr.mxu0 0.0
    %1630 = vmatpush1.xpose.msra.mxu0 %v1627
    %1631 = vmatprep.subr.mxu0 0.0
    %1632 = vmatpush1.xpose.msra.mxu0 0.0
    %1633 = vmatprep.subr.mxu0 0.0
    %1634 = vmatpush1.xpose.msra.mxu0 0.0
    %1635 = vmatprep.subr.mxu0 0.0
    %1636 = vmatpush1.xpose.msra.mxu0 0.0
    %1637 = vmatprep.subr.mxu0 0.0
    %1638 = vmatpush1.xpose.msra.mxu0 0.0
    %1639 = vmatprep.subr.mxu0 0.0
    %1640 = vmatpush1.xpose.msra.mxu0 0.0
    %1641 = vmatprep.subr.mxu0 0.0
    %1642 = vmatpush1.xpose.msra.mxu0 0.0
    %1643 = vmatprep.subr.mxu0 0.0
    %1644 = vmatpush1.xpose.msra.mxu0 0.0
    %1645 = vmatprep.subr.mxu0 0.0
    %1646 = vmatpush1.xpose.msra.mxu0 0.0
    %1647 = vmatprep.subr.mxu0 0.0
    %1648 = vmatpush1.xpose.msra.mxu0 0.0
    %1649 = vmatprep.subr.mxu0 0.0
    %1650 = vmatpush1.xpose.msra.mxu0 0.0
    %1651 = vmatprep.subr.mxu0 0.0
    %1652 = vmatpush1.xpose.msra.mxu0 0.0
    %1653 = vmatprep.subr.mxu0 0.0
    %1654 = vmatpush1.xpose.msra.mxu0 0.0
    %1655 = vmatprep.subr.mxu0 0.0
    %1656 = vmatpush1.xpose.msra.mxu0 0.0
    %1657 = vmatprep.subr.mxu0 0.0
    %1658 = vmatpush1.xpose.msra.mxu0 0.0
    %1659 = vmatprep.subr.mxu0 0.0
    %1660 = vmatpush1.xpose.msra.mxu0 0.0
    %1661 = vmatprep.subr.mxu0 0.0
    %1662 = vmatpush1.xpose.msra.mxu0 0.0
    %1663 = vmatprep.subr.mxu0 0.0
    %1664 = vmatpush1.xpose.msra.mxu0 0.0
    %1665 = vmatprep.subr.mxu0 0.0
    %1666 = vmatpush1.xpose.msra.mxu0 0.0
    %1667 = vmatprep.subr.mxu0 0.0
    %1668 = vmatpush1.xpose.msra.mxu0 0.0
    %1669 = vmatprep.subr.mxu0 0.0
    %1670 = vmatpush1.xpose.msra.mxu0 0.0
    %1671 = vmatprep.subr.mxu0 0.0
    %1672 = vmatpush1.xpose.msra.mxu0 0.0
    %1673 = vmatprep.subr.mxu0 0.0
    %1674 = vmatpush1.xpose.msra.mxu0 0.0
    %1675 = vmatprep.subr.mxu0 0.0
    %1676 = vmatpush1.xpose.msra.mxu0 0.0
    %1677 = vmatprep.subr.mxu0 0.0
    %1678 = vmatpush1.xpose.msra.mxu0 0.0
    %1679 = vmatprep.subr.mxu0 0.0
    %1680 = vmatpush1.xpose.msra.mxu0 0.0
    %1681 = vmatprep.subr.mxu0 0.0
    %1682 = vmatpush1.xpose.msra.mxu0 0.0
    %1683 = vmatprep.subr.mxu0 0.0
    %1684 = vmatpush1.xpose.msra.mxu0 0.0
    %1685 = vmatprep.subr.mxu0 0.0
    %1686 = vmatpush1.xpose.msra.mxu0 0.0
    %1687 = vmatprep.subr.mxu0 0.0
    %1688 = vmatpush1.xpose.msra.mxu0 0.0
    %1689 = vmatprep.subr.mxu0 0.0
    %1690 = vmatpush1.xpose.msra.mxu0 0.0
    %1691 = vmatprep.subr.mxu0 0.0
    %1692 = vmatpush1.xpose.msra.mxu0 0.0
    %1693 = vmatprep.mubr.f32.mxu0 0.0
    %1694 = vmatmul.mubr.f32.gmra.mrb[0].mxu0 %v1624
    %v1695 = vpop.f32.mrb[0].mxu0
    %v1696 = vadd.f32 0.0, %v1695
    %v1697 = vpop.f32.mrb[0].mxu0
    %1698 = vdwg.mxu0
    %v1700 = vsel %vm1546, %v413, 0
    %v1703 = vsel %vm1546, %v863, 0
    %1705 = vmatprep.subr.mxu0 0.0
    %1706 = vmatpush1.xpose.msra.mxu0 %v1703
    %1707 = vmatprep.subr.mxu0 0.0
    %1708 = vmatpush1.xpose.msra.mxu0 0.0
    %1709 = vmatprep.subr.mxu0 0.0
    %1710 = vmatpush1.xpose.msra.mxu0 0.0
    %1711 = vmatprep.subr.mxu0 0.0
    %1712 = vmatpush1.xpose.msra.mxu0 0.0
    %1713 = vmatprep.subr.mxu0 0.0
    %1714 = vmatpush1.xpose.msra.mxu0 0.0
    %1715 = vmatprep.subr.mxu0 0.0
    %1716 = vmatpush1.xpose.msra.mxu0 0.0
    %1717 = vmatprep.subr.mxu0 0.0
    %1718 = vmatpush1.xpose.msra.mxu0 0.0
    %1719 = vmatprep.subr.mxu0 0.0
    %1720 = vmatpush1.xpose.msra.mxu0 0.0
    %1721 = vmatprep.subr.mxu0 0.0
    %1722 = vmatpush1.xpose.msra.mxu0 0.0
    %1723 = vmatprep.subr.mxu0 0.0
    %1724 = vmatpush1.xpose.msra.mxu0 0.0
    %1725 = vmatprep.subr.mxu0 0.0
    %1726 = vmatpush1.xpose.msra.mxu0 0.0
    %1727 = vmatprep.subr.mxu0 0.0
    %1728 = vmatpush1.xpose.msra.mxu0 0.0
    %1729 = vmatprep.subr.mxu0 0.0
    %1730 = vmatpush1.xpose.msra.mxu0 0.0
    %1731 = vmatprep.subr.mxu0 0.0
    %1732 = vmatpush1.xpose.msra.mxu0 0.0
    %1733 = vmatprep.subr.mxu0 0.0
    %1734 = vmatpush1.xpose.msra.mxu0 0.0
    %1735 = vmatprep.subr.mxu0 0.0
    %1736 = vmatpush1.xpose.msra.mxu0 0.0
    %1737 = vmatprep.subr.mxu0 0.0
    %1738 = vmatpush1.xpose.msra.mxu0 0.0
    %1739 = vmatprep.subr.mxu0 0.0
    %1740 = vmatpush1.xpose.msra.mxu0 0.0
    %1741 = vmatprep.subr.mxu0 0.0
    %1742 = vmatpush1.xpose.msra.mxu0 0.0
    %1743 = vmatprep.subr.mxu0 0.0
    %1744 = vmatpush1.xpose.msra.mxu0 0.0
    %1745 = vmatprep.subr.mxu0 0.0
    %1746 = vmatpush1.xpose.msra.mxu0 0.0
    %1747 = vmatprep.subr.mxu0 0.0
    %1748 = vmatpush1.xpose.msra.mxu0 0.0
    %1749 = vmatprep.subr.mxu0 0.0
    %1750 = vmatpush1.xpose.msra.mxu0 0.0
    %1751 = vmatprep.subr.mxu0 0.0
    %1752 = vmatpush1.xpose.msra.mxu0 0.0
    %1753 = vmatprep.subr.mxu0 0.0
    %1754 = vmatpush1.xpose.msra.mxu0 0.0
    %1755 = vmatprep.subr.mxu0 0.0
    %1756 = vmatpush1.xpose.msra.mxu0 0.0
    %1757 = vmatprep.subr.mxu0 0.0
    %1758 = vmatpush1.xpose.msra.mxu0 0.0
    %1759 = vmatprep.subr.mxu0 0.0
    %1760 = vmatpush1.xpose.msra.mxu0 0.0
    %1761 = vmatprep.subr.mxu0 0.0
    %1762 = vmatpush1.xpose.msra.mxu0 0.0
    %1763 = vmatprep.subr.mxu0 0.0
    %1764 = vmatpush1.xpose.msra.mxu0 0.0
    %1765 = vmatprep.subr.mxu0 0.0
    %1766 = vmatpush1.xpose.msra.mxu0 0.0
    %1767 = vmatprep.subr.mxu0 0.0
    %1768 = vmatpush1.xpose.msra.mxu0 0.0
    %1769 = vmatprep.mubr.f32.mxu0 0.0
    %1770 = vmatmul.mubr.f32.gmra.mrb[0].mxu0 %v1700
    %v1771 = vpop.f32.mrb[0].mxu0
    %v1772 = vadd.f32 0.0, %v1771
    %v1773 = vpop.f32.mrb[0].mxu0
    %1774 = vdwg.mxu0
    %v1776 = vsel %vm1546, %v488, 0
    %v1779 = vsel %vm1546, %v938, 0
    %1781 = vmatprep.subr.mxu0 0.0
    %1782 = vmatpush1.xpose.msra.mxu0 %v1779
    %1783 = vmatprep.subr.mxu0 0.0
    %1784 = vmatpush1.xpose.msra.mxu0 0.0
    %1785 = vmatprep.subr.mxu0 0.0
    %1786 = vmatpush1.xpose.msra.mxu0 0.0
    %1787 = vmatprep.subr.mxu0 0.0
    %1788 = vmatpush1.xpose.msra.mxu0 0.0
    %1789 = vmatprep.subr.mxu0 0.0
    %1790 = vmatpush1.xpose.msra.mxu0 0.0
    %1791 = vmatprep.subr.mxu0 0.0
    %1792 = vmatpush1.xpose.msra.mxu0 0.0
    %1793 = vmatprep.subr.mxu0 0.0
    %1794 = vmatpush1.xpose.msra.mxu0 0.0
    %1795 = vmatprep.subr.mxu0 0.0
    %1796 = vmatpush1.xpose.msra.mxu0 0.0
    %1797 = vmatprep.subr.mxu0 0.0
    %1798 = vmatpush1.xpose.msra.mxu0 0.0
    %1799 = vmatprep.subr.mxu0 0.0
    %1800 = vmatpush1.xpose.msra.mxu0 0.0
    %1801 = vmatprep.subr.mxu0 0.0
    %1802 = vmatpush1.xpose.msra.mxu0 0.0
    %1803 = vmatprep.subr.mxu0 0.0
    %1804 = vmatpush1.xpose.msra.mxu0 0.0
    %1805 = vmatprep.subr.mxu0 0.0
    %1806 = vmatpush1.xpose.msra.mxu0 0.0
    %1807 = vmatprep.subr.mxu0 0.0
    %1808 = vmatpush1.xpose.msra.mxu0 0.0
    %1809 = vmatprep.subr.mxu0 0.0
    %1810 = vmatpush1.xpose.msra.mxu0 0.0
    %1811 = vmatprep.subr.mxu0 0.0
    %1812 = vmatpush1.xpose.msra.mxu0 0.0
    %1813 = vmatprep.subr.mxu0 0.0
    %1814 = vmatpush1.xpose.msra.mxu0 0.0
    %1815 = vmatprep.subr.mxu0 0.0
    %1816 = vmatpush1.xpose.msra.mxu0 0.0
    %1817 = vmatprep.subr.mxu0 0.0
    %1818 = vmatpush1.xpose.msra.mxu0 0.0
    %1819 = vmatprep.subr.mxu0 0.0
    %1820 = vmatpush1.xpose.msra.mxu0 0.0
    %1821 = vmatprep.subr.mxu0 0.0
    %1822 = vmatpush1.xpose.msra.mxu0 0.0
    %1823 = vmatprep.subr.mxu0 0.0
    %1824 = vmatpush1.xpose.msra.mxu0 0.0
    %1825 = vmatprep.subr.mxu0 0.0
    %1826 = vmatpush1.xpose.msra.mxu0 0.0
    %1827 = vmatprep.subr.mxu0 0.0
    %1828 = vmatpush1.xpose.msra.mxu0 0.0
    %1829 = vmatprep.subr.mxu0 0.0
    %1830 = vmatpush1.xpose.msra.mxu0 0.0
    %1831 = vmatprep.subr.mxu0 0.0
    %1832 = vmatpush1.xpose.msra.mxu0 0.0
    %1833 = vmatprep.subr.mxu0 0.0
    %1834 = vmatpush1.xpose.msra.mxu0 0.0
    %1835 = vmatprep.subr.mxu0 0.0
    %1836 = vmatpush1.xpose.msra.mxu0 0.0
    %1837 = vmatprep.subr.mxu0 0.0
    %1838 = vmatpush1.xpose.msra.mxu0 0.0
    %1839 = vmatprep.subr.mxu0 0.0
    %1840 = vmatpush1.xpose.msra.mxu0 0.0
    %1841 = vmatprep.subr.mxu0 0.0
    %1842 = vmatpush1.xpose.msra.mxu0 0.0
    %1843 = vmatprep.subr.mxu0 0.0
    %1844 = vmatpush1.xpose.msra.mxu0 0.0
    %1845 = vmatprep.mubr.f32.mxu0 0.0
    %1846 = vmatmul.mubr.f32.gmra.mrb[0].mxu0 %v1776
    %v1847 = vpop.f32.mrb[0].mxu0
    %v1848 = vadd.f32 0.0, %v1847
    %v1849 = vpop.f32.mrb[0].mxu0
    %1850 = vdwg.mxu0
    %v1852 = vsel %vm1546, %v563, 0
    %v1855 = vsel %vm1546, %v1013, 0
    %1857 = vmatprep.subr.mxu0 0.0
    %1858 = vmatpush1.xpose.msra.mxu0 %v1855
    %1859 = vmatprep.subr.mxu0 0.0
    %1860 = vmatpush1.xpose.msra.mxu0 0.0
    %1861 = vmatprep.subr.mxu0 0.0
    %1862 = vmatpush1.xpose.msra.mxu0 0.0
    %1863 = vmatprep.subr.mxu0 0.0
    %1864 = vmatpush1.xpose.msra.mxu0 0.0
    %1865 = vmatprep.subr.mxu0 0.0
    %1866 = vmatpush1.xpose.msra.mxu0 0.0
    %1867 = vmatprep.subr.mxu0 0.0
    %1868 = vmatpush1.xpose.msra.mxu0 0.0
    %1869 = vmatprep.subr.mxu0 0.0
    %1870 = vmatpush1.xpose.msra.mxu0 0.0
    %1871 = vmatprep.subr.mxu0 0.0
    %1872 = vmatpush1.xpose.msra.mxu0 0.0
    %1873 = vmatprep.subr.mxu0 0.0
    %1874 = vmatpush1.xpose.msra.mxu0 0.0
    %1875 = vmatprep.subr.mxu0 0.0
    %1876 = vmatpush1.xpose.msra.mxu0 0.0
    %1877 = vmatprep.subr.mxu0 0.0
    %1878 = vmatpush1.xpose.msra.mxu0 0.0
    %1879 = vmatprep.subr.mxu0 0.0
    %1880 = vmatpush1.xpose.msra.mxu0 0.0
    %1881 = vmatprep.subr.mxu0 0.0
    %1882 = vmatpush1.xpose.msra.mxu0 0.0
    %1883 = vmatprep.subr.mxu0 0.0
    %1884 = vmatpush1.xpose.msra.mxu0 0.0
    %1885 = vmatprep.subr.mxu0 0.0
    %1886 = vmatpush1.xpose.msra.mxu0 0.0
    %1887 = vmatprep.subr.mxu0 0.0
    %1888 = vmatpush1.xpose.msra.mxu0 0.0
    %1889 = vmatprep.subr.mxu0 0.0
    %1890 = vmatpush1.xpose.msra.mxu0 0.0
    %1891 = vmatprep.subr.mxu0 0.0
    %1892 = vmatpush1.xpose.msra.mxu0 0.0
    %1893 = vmatprep.subr.mxu0 0.0
    %1894 = vmatpush1.xpose.msra.mxu0 0.0
    %1895 = vmatprep.subr.mxu0 0.0
    %1896 = vmatpush1.xpose.msra.mxu0 0.0
    %1897 = vmatprep.subr.mxu0 0.0
    %1898 = vmatpush1.xpose.msra.mxu0 0.0
    %1899 = vmatprep.subr.mxu0 0.0
    %1900 = vmatpush1.xpose.msra.mxu0 0.0
    %1901 = vmatprep.subr.mxu0 0.0
    %1902 = vmatpush1.xpose.msra.mxu0 0.0
    %1903 = vmatprep.subr.mxu0 0.0
    %1904 = vmatpush1.xpose.msra.mxu0 0.0
    %1905 = vmatprep.subr.mxu0 0.0
    %1906 = vmatpush1.xpose.msra.mxu0 0.0
    %1907 = vmatprep.subr.mxu0 0.0
    %1908 = vmatpush1.xpose.msra.mxu0 0.0
    %1909 = vmatprep.subr.mxu0 0.0
    %1910 = vmatpush1.xpose.msra.mxu0 0.0
    %1911 = vmatprep.subr.mxu0 0.0
    %1912 = vmatpush1.xpose.msra.mxu0 0.0
    %1913 = vmatprep.subr.mxu0 0.0
    %1914 = vmatpush1.xpose.msra.mxu0 0.0
    %1915 = vmatprep.subr.mxu0 0.0
    %1916 = vmatpush1.xpose.msra.mxu0 0.0
    %1917 = vmatprep.subr.mxu0 0.0
    %1918 = vmatpush1.xpose.msra.mxu0 0.0
    %1919 = vmatprep.subr.mxu0 0.0
    %1920 = vmatpush1.xpose.msra.mxu0 0.0
    %1921 = vmatprep.mubr.f32.mxu0 0.0
    %1922 = vmatmul.mubr.f32.gmra.mrb[0].mxu0 %v1852
    %v1923 = vpop.f32.mrb[0].mxu0
    %v1924 = vadd.f32 0.0, %v1923
    %v1925 = vpop.f32.mrb[0].mxu0
    %1926 = vdwg.mxu0
    %v1928 = vsel %vm1546, %v638, 0
    %v1931 = vsel %vm1546, %v1088, 0
    %1933 = vmatprep.subr.mxu0 0.0
    %1934 = vmatpush1.xpose.msra.mxu0 %v1931
    %1935 = vmatprep.subr.mxu0 0.0
    %1936 = vmatpush1.xpose.msra.mxu0 0.0
    %1937 = vmatprep.subr.mxu0 0.0
    %1938 = vmatpush1.xpose.msra.mxu0 0.0
    %1939 = vmatprep.subr.mxu0 0.0
    %1940 = vmatpush1.xpose.msra.mxu0 0.0
    %1941 = vmatprep.subr.mxu0 0.0
    %1942 = vmatpush1.xpose.msra.mxu0 0.0
    %1943 = vmatprep.subr.mxu0 0.0
    %1944 = vmatpush1.xpose.msra.mxu0 0.0
    %1945 = vmatprep.subr.mxu0 0.0
    %1946 = vmatpush1.xpose.msra.mxu0 0.0
    %1947 = vmatprep.subr.mxu0 0.0
    %1948 = vmatpush1.xpose.msra.mxu0 0.0
    %1949 = vmatprep.subr.mxu0 0.0
    %1950 = vmatpush1.xpose.msra.mxu0 0.0
    %1951 = vmatprep.subr.mxu0 0.0
    %1952 = vmatpush1.xpose.msra.mxu0 0.0
    %1953 = vmatprep.subr.mxu0 0.0
    %1954 = vmatpush1.xpose.msra.mxu0 0.0
    %1955 = vmatprep.subr.mxu0 0.0
    %1956 = vmatpush1.xpose.msra.mxu0 0.0
    %1957 = vmatprep.subr.mxu0 0.0
    %1958 = vmatpush1.xpose.msra.mxu0 0.0
    %1959 = vmatprep.subr.mxu0 0.0
    %1960 = vmatpush1.xpose.msra.mxu0 0.0
    %1961 = vmatprep.subr.mxu0 0.0
    %1962 = vmatpush1.xpose.msra.mxu0 0.0
    %1963 = vmatprep.subr.mxu0 0.0
    %1964 = vmatpush1.xpose.msra.mxu0 0.0
    %1965 = vmatprep.subr.mxu0 0.0
    %1966 = vmatpush1.xpose.msra.mxu0 0.0
    %1967 = vmatprep.subr.mxu0 0.0
    %1968 = vmatpush1.xpose.msra.mxu0 0.0
    %1969 = vmatprep.subr.mxu0 0.0
    %1970 = vmatpush1.xpose.msra.mxu0 0.0
    %1971 = vmatprep.subr.mxu0 0.0
    %1972 = vmatpush1.xpose.msra.mxu0 0.0
    %1973 = vmatprep.subr.mxu0 0.0
    %1974 = vmatpush1.xpose.msra.mxu0 0.0
    %1975 = vmatprep.subr.mxu0 0.0
    %1976 = vmatpush1.xpose.msra.mxu0 0.0
    %1977 = vmatprep.subr.mxu0 0.0
    %1978 = vmatpush1.xpose.msra.mxu0 0.0
    %1979 = vmatprep.subr.mxu0 0.0
    %1980 = vmatpush1.xpose.msra.mxu0 0.0
    %1981 = vmatprep.subr.mxu0 0.0
    %1982 = vmatpush1.xpose.msra.mxu0 0.0
    %1983 = vmatprep.subr.mxu0 0.0
    %1984 = vmatpush1.xpose.msra.mxu0 0.0
    %1985 = vmatprep.subr.mxu0 0.0
    %1986 = vmatpush1.xpose.msra.mxu0 0.0
    %1987 = vmatprep.subr.mxu0 0.0
    %1988 = vmatpush1.xpose.msra.mxu0 0.0
    %1989 = vmatprep.subr.mxu0 0.0
    %1990 = vmatpush1.xpose.msra.mxu0 0.0
    %1991 = vmatprep.subr.mxu0 0.0
    %1992 = vmatpush1.xpose.msra.mxu0 0.0
    %1993 = vmatprep.subr.mxu0 0.0
    %1994 = vmatpush1.xpose.msra.mxu0 0.0
    %1995 = vmatprep.subr.mxu0 0.0
    %1996 = vmatpush1.xpose.msra.mxu0 0.0
    %1997 = vmatprep.mubr.f32.mxu0 0.0
    %1998 = vmatmul.mubr.f32.gmra.mrb[0].mxu0 %v1928
    %v1999 = vpop.f32.mrb[0].mxu0
    %v2000 = vadd.f32 0.0, %v1999
    %v2001 = vpop.f32.mrb[0].mxu0
    %2002 = vdwg.mxu0
    %v2003 = vmul.f32 %v1620, 0.35355338
    %v2004 = vmul.f32 %v1696, 0.35355338
    %v2005 = vmul.f32 %v1772, 0.35355338
    %v2006 = vmul.f32 %v1848, 0.35355338
    %v2007 = vmul.f32 %v1924, 0.35355338
    %v2008 = vmul.f32 %v2000, 0.35355338
    %v2009 = vadd.f32 %v2003, %v153
    %v2010 = vadd.f32 %v2004, %v153
    %v2011 = vadd.f32 %v2005, %v153
    %v2012 = vadd.f32 %v2006, %v153
    %v2013 = vadd.f32 %v2007, %v153
    %v2014 = vadd.f32 %v2008, %v153
    %v2015 = vsel %vm1546, %v2009, -inf
    %2016 = vmax.xlane.f32.xlu0 %v2015
    %v2017 = vpop.xlane.xlu0 %2016
    %v2018 = vsel %vm1546, %v2010, -inf
    %2019 = vmax.xlane.f32.xlu0 %v2018
    %v2020 = vpop.xlane.xlu0 %2019
    %v2021 = vsel %vm1546, %v2011, -inf
    %2022 = vmax.xlane.f32.xlu0 %v2021
    %v2023 = vpop.xlane.xlu0 %2022
    %v2024 = vsel %vm1546, %v2012, -inf
    %2025 = vmax.xlane.f32.xlu0 %v2024
    %v2026 = vpop.xlane.xlu0 %2025
    %v2027 = vsel %vm1546, %v2013, -inf
    %2028 = vmax.xlane.f32.xlu0 %v2027
    %v2029 = vpop.xlane.xlu0 %2028
    %v2030 = vsel %vm1546, %v2014, -inf
    %2031 = vmax.xlane.f32.xlu0 %v2030
    %v2032 = vpop.xlane.xlu0 %2031
    %v2033 = vsub.f32 %v2009, %v2017
    %v2034 = vsub.f32 %v2010, %v2020
    %v2035 = vsub.f32 %v2011, %v2023
    %v2036 = vsub.f32 %v2012, %v2026
    %v2037 = vsub.f32 %v2013, %v2029
    %v2038 = vsub.f32 %v2014, %v2032
    %v2039 = vmul.f32 %v2033, 1.442695
    %v2040 = vpow.pop %v2039
    %v2041 = vmul.f32 %v2034, 1.442695
    %v2042 = vpow.pop %v2041
    %v2043 = vmul.f32 %v2035, 1.442695
    %v2044 = vpow.pop %v2043
    %v2045 = vmul.f32 %v2036, 1.442695
    %v2046 = vpow.pop %v2045
    %v2047 = vmul.f32 %v2037, 1.442695
    %v2048 = vpow.pop %v2047
    %v2049 = vmul.f32 %v2038, 1.442695
    %v2050 = vpow.pop %v2049
    %v2051 = vsel %vm1546, %v2040, 0.0
    %2052 = vadd.xlane.f32.xlu0 %v2051
    %v2053 = vpop.xlane.xlu0 %2052
    %v2054 = vsel %vm1546, %v2042, 0.0
    %2055 = vadd.xlane.f32.xlu0 %v2054
    %v2056 = vpop.xlane.xlu0 %2055
    %v2057 = vsel %vm1546, %v2044, 0.0
    %2058 = vadd.xlane.f32.xlu0 %v2057
    %v2059 = vpop.xlane.xlu0 %2058
    %v2060 = vsel %vm1546, %v2046, 0.0
    %2061 = vadd.xlane.f32.xlu0 %v2060
    %v2062 = vpop.xlane.xlu0 %2061
    %v2063 = vsel %vm1546, %v2048, 0.0
    %2064 = vadd.xlane.f32.xlu0 %v2063
    %v2065 = vpop.xlane.xlu0 %2064
    %v2066 = vsel %vm1546, %v2050, 0.0
    %2067 = vadd.xlane.f32.xlu0 %v2066
    %v2068 = vpop.xlane.xlu0 %2067
    %v2069 = vrcp.pop %v2053
    %v2070 = vmul.f32 %v2040, %v2069
    %v2071 = vrcp.pop %v2056
    %v2072 = vmul.f32 %v2042, %v2071
    %v2073 = vrcp.pop %v2059
    %v2074 = vmul.f32 %v2044, %v2073
    %v2075 = vrcp.pop %v2062
    %v2076 = vmul.f32 %v2046, %v2075
    %v2077 = vrcp.pop %v2065
    %v2078 = vmul.f32 %v2048, %v2077
    %v2079 = vrcp.pop %v2068
    %v2080 = vmul.f32 %v2050, %v2079
    %v2082 = vsel %vm1546, %v2070, 0
    %2084 = vmatprep.subr.mxu0 0.0
    %2085 = vmatpush1.msra.mxu0 %v1163
    %2086 = vmatprep.subr.mxu0 0.0
    %2087 = vmatpush1.msra.mxu0 0.0
    %2088 = vmatprep.subr.mxu0 0.0
    %2089 = vmatpush1.msra.mxu0 0.0
    %2090 = vmatprep.subr.mxu0 0.0
    %2091 = vmatpush1.msra.mxu0 0.0
    %2092 = vmatprep.subr.mxu0 0.0
    %2093 = vmatpush1.msra.mxu0 0.0
    %2094 = vmatprep.subr.mxu0 0.0
    %2095 = vmatpush1.msra.mxu0 0.0
    %2096 = vmatprep.subr.mxu0 0.0
    %2097 = vmatpush1.msra.mxu0 0.0
    %2098 = vmatprep.subr.mxu0 0.0
    %2099 = vmatpush1.msra.mxu0 0.0
    %2100 = vmatprep.subr.mxu0 0.0
    %2101 = vmatpush1.msra.mxu0 0.0
    %2102 = vmatprep.subr.mxu0 0.0
    %2103 = vmatpush1.msra.mxu0 0.0
    %2104 = vmatprep.subr.mxu0 0.0
    %2105 = vmatpush1.msra.mxu0 0.0
    %2106 = vmatprep.subr.mxu0 0.0
    %2107 = vmatpush1.msra.mxu0 0.0
    %2108 = vmatprep.subr.mxu0 0.0
    %2109 = vmatpush1.msra.mxu0 0.0
    %2110 = vmatprep.subr.mxu0 0.0
    %2111 = vmatpush1.msra.mxu0 0.0
    %2112 = vmatprep.subr.mxu0 0.0
    %2113 = vmatpush1.msra.mxu0 0.0
    %2114 = vmatprep.subr.mxu0 0.0
    %2115 = vmatpush1.msra.mxu0 0.0
    %2116 = vmatprep.subr.mxu0 0.0
    %2117 = vmatpush1.msra.mxu0 0.0
    %2118 = vmatprep.subr.mxu0 0.0
    %2119 = vmatpush1.msra.mxu0 0.0
    %2120 = vmatprep.subr.mxu0 0.0
    %2121 = vmatpush1.msra.mxu0 0.0
    %2122 = vmatprep.subr.mxu0 0.0
    %2123 = vmatpush1.msra.mxu0 0.0
    %2124 = vmatprep.subr.mxu0 0.0
    %2125 = vmatpush1.msra.mxu0 0.0
    %2126 = vmatprep.subr.mxu0 0.0
    %2127 = vmatpush1.msra.mxu0 0.0
    %2128 = vmatprep.subr.mxu0 0.0
    %2129 = vmatpush1.msra.mxu0 0.0
    %2130 = vmatprep.subr.mxu0 0.0
    %2131 = vmatpush1.msra.mxu0 0.0
    %2132 = vmatprep.subr.mxu0 0.0
    %2133 = vmatpush1.msra.mxu0 0.0
    %2134 = vmatprep.subr.mxu0 0.0
    %2135 = vmatpush1.msra.mxu0 0.0
    %2136 = vmatprep.subr.mxu0 0.0
    %2137 = vmatpush1.msra.mxu0 0.0
    %2138 = vmatprep.subr.mxu0 0.0
    %2139 = vmatpush1.msra.mxu0 0.0
    %2140 = vmatprep.subr.mxu0 0.0
    %2141 = vmatpush1.msra.mxu0 0.0
    %2142 = vmatprep.subr.mxu0 0.0
    %2143 = vmatpush1.msra.mxu0 0.0
    %2144 = vmatprep.subr.mxu0 0.0
    %2145 = vmatpush1.msra.mxu0 0.0
    %2146 = vmatprep.subr.mxu0 0.0
    %2147 = vmatpush1.msra.mxu0 0.0
    %2148 = vmatprep.mubr.f32.mxu0 0.0
    %2149 = vmatmul.mubr.f32.gmra.mrb[0].mxu0 %v2082
    %v2150 = vpop.f32.mrb[0].mxu0
    %v2151 = vadd.f32 0.0, %v2150
    %v2152 = vpop.f32.mrb[0].mxu0
    %2153 = vdwg.mxu0
    %v2155 = vsel %vm1546, %v2072, 0
    %2157 = vmatprep.subr.mxu0 0.0
    %2158 = vmatpush1.msra.mxu0 %v1238
    %2159 = vmatprep.subr.mxu0 0.0
    %2160 = vmatpush1.msra.mxu0 0.0
    %2161 = vmatprep.subr.mxu0 0.0
    %2162 = vmatpush1.msra.mxu0 0.0
    %2163 = vmatprep.subr.mxu0 0.0
    %2164 = vmatpush1.msra.mxu0 0.0
    %2165 = vmatprep.subr.mxu0 0.0
    %2166 = vmatpush1.msra.mxu0 0.0
    %2167 = vmatprep.subr.mxu0 0.0
    %2168 = vmatpush1.msra.mxu0 0.0
    %2169 = vmatprep.subr.mxu0 0.0
    %2170 = vmatpush1.msra.mxu0 0.0
    %2171 = vmatprep.subr.mxu0 0.0
    %2172 = vmatpush1.msra.mxu0 0.0
    %2173 = vmatprep.subr.mxu0 0.0
    %2174 = vmatpush1.msra.mxu0 0.0
    %2175 = vmatprep.subr.mxu0 0.0
    %2176 = vmatpush1.msra.mxu0 0.0
    %2177 = vmatprep.subr.mxu0 0.0
    %2178 = vmatpush1.msra.mxu0 0.0
    %2179 = vmatprep.subr.mxu0 0.0
    %2180 = vmatpush1.msra.mxu0 0.0
    %2181 = vmatprep.subr.mxu0 0.0
    %2182 = vmatpush1.msra.mxu0 0.0
    %2183 = vmatprep.subr.mxu0 0.0
    %2184 = vmatpush1.msra.mxu0 0.0
    %2185 = vmatprep.subr.mxu0 0.0
    %2186 = vmatpush1.msra.mxu0 0.0
    %2187 = vmatprep.subr.mxu0 0.0
    %2188 = vmatpush1.msra.mxu0 0.0
    %2189 = vmatprep.subr.mxu0 0.0
    %2190 = vmatpush1.msra.mxu0 0.0
    %2191 = vmatprep.subr.mxu0 0.0
    %2192 = vmatpush1.msra.mxu0 0.0
    %2193 = vmatprep.subr.mxu0 0.0
    %2194 = vmatpush1.msra.mxu0 0.0
    %2195 = vmatprep.subr.mxu0 0.0
    %2196 = vmatpush1.msra.mxu0 0.0
    %2197 = vmatprep.subr.mxu0 0.0
    %2198 = vmatpush1.msra.mxu0 0.0
    %2199 = vmatprep.subr.mxu0 0.0
    %2200 = vmatpush1.msra.mxu0 0.0
    %2201 = vmatprep.subr.mxu0 0.0
    %2202 = vmatpush1.msra.mxu0 0.0
    %2203 = vmatprep.subr.mxu0 0.0
    %2204 = vmatpush1.msra.mxu0 0.0
    %2205 = vmatprep.subr.mxu0 0.0
    %2206 = vmatpush1.msra.mxu0 0.0
    %2207 = vmatprep.subr.mxu0 0.0
    %2208 = vmatpush1.msra.mxu0 0.0
    %2209 = vmatprep.subr.mxu0 0.0
    %2210 = vmatpush1.msra.mxu0 0.0
    %2211 = vmatprep.subr.mxu0 0.0
    %2212 = vmatpush1.msra.mxu0 0.0
    %2213 = vmatprep.subr.mxu0 0.0
    %2214 = vmatpush1.msra.mxu0 0.0
    %2215 = vmatprep.subr.mxu0 0.0
    %2216 = vmatpush1.msra.mxu0 0.0
    %2217 = vmatprep.subr.mxu0 0.0
    %2218 = vmatpush1.msra.mxu0 0.0
    %2219 = vmatprep.subr.mxu0 0.0
    %2220 = vmatpush1.msra.mxu0 0.0
    %2221 = vmatprep.mubr.f32.mxu0 0.0
    %2222 = vmatmul.mubr.f32.gmra.mrb[0].mxu0 %v2155
    %v2223 = vpop.f32.mrb[0].mxu0
    %v2224 = vadd.f32 0.0, %v2223
    %v2225 = vpop.f32.mrb[0].mxu0
    %2226 = vdwg.mxu0
    %v2228 = vsel %vm1546, %v2074, 0
    %2230 = vmatprep.subr.mxu0 0.0
    %2231 = vmatpush1.msra.mxu0 %v1313
    %2232 = vmatprep.subr.mxu0 0.0
    %2233 = vmatpush1.msra.mxu0 0.0
    %2234 = vmatprep.subr.mxu0 0.0
    %2235 = vmatpush1.msra.mxu0 0.0
    %2236 = vmatprep.subr.mxu0 0.0
    %2237 = vmatpush1.msra.mxu0 0.0
    %2238 = vmatprep.subr.mxu0 0.0
    %2239 = vmatpush1.msra.mxu0 0.0
    %2240 = vmatprep.subr.mxu0 0.0
    %2241 = vmatpush1.msra.mxu0 0.0
    %2242 = vmatprep.subr.mxu0 0.0
    %2243 = vmatpush1.msra.mxu0 0.0
    %2244 = vmatprep.subr.mxu0 0.0
    %2245 = vmatpush1.msra.mxu0 0.0
    %2246 = vmatprep.subr.mxu0 0.0
    %2247 = vmatpush1.msra.mxu0 0.0
    %2248 = vmatprep.subr.mxu0 0.0
    %2249 = vmatpush1.msra.mxu0 0.0
    %2250 = vmatprep.subr.mxu0 0.0
    %2251 = vmatpush1.msra.mxu0 0.0
    %2252 = vmatprep.subr.mxu0 0.0
    %2253 = vmatpush1.msra.mxu0 0.0
    %2254 = vmatprep.subr.mxu0 0.0
    %2255 = vmatpush1.msra.mxu0 0.0
    %2256 = vmatprep.subr.mxu0 0.0
    %2257 = vmatpush1.msra.mxu0 0.0
    %2258 = vmatprep.subr.mxu0 0.0
    %2259 = vmatpush1.msra.mxu0 0.0
    %2260 = vmatprep.subr.mxu0 0.0
    %2261 = vmatpush1.msra.mxu0 0.0
    %2262 = vmatprep.subr.mxu0 0.0
    %2263 = vmatpush1.msra.mxu0 0.0
    %2264 = vmatprep.subr.mxu0 0.0
    %2265 = vmatpush1.msra.mxu0 0.0
    %2266 = vmatprep.subr.mxu0 0.0
    %2267 = vmatpush1.msra.mxu0 0.0
    %2268 = vmatprep.subr.mxu0 0.0
    %2269 = vmatpush1.msra.mxu0 0.0
    %2270 = vmatprep.subr.mxu0 0.0
    %2271 = vmatpush1.msra.mxu0 0.0
    %2272 = vmatprep.subr.mxu0 0.0
    %2273 = vmatpush1.msra.mxu0 0.0
    %2274 = vmatprep.subr.mxu0 0.0
    %2275 = vmatpush1.msra.mxu0 0.0
    %2276 = vmatprep.subr.mxu0 0.0
    %2277 = vmatpush1.msra.mxu0 0.0
    %2278 = vmatprep.subr.mxu0 0.0
    %2279 = vmatpush1.msra.mxu0 0.0
    %2280 = vmatprep.subr.mxu0 0.0
    %2281 = vmatpush1.msra.mxu0 0.0
    %2282 = vmatprep.subr.mxu0 0.0
    %2283 = vmatpush1.msra.mxu0 0.0
    %2284 = vmatprep.subr.mxu0 0.0
    %2285 = vmatpush1.msra.mxu0 0.0
    %2286 = vmatprep.subr.mxu0 0.0
    %2287 = vmatpush1.msra.mxu0 0.0
    %2288 = vmatprep.subr.mxu0 0.0
    %2289 = vmatpush1.msra.mxu0 0.0
    %2290 = vmatprep.subr.mxu0 0.0
    %2291 = vmatpush1.msra.mxu0 0.0
    %2292 = vmatprep.subr.mxu0 0.0
    %2293 = vmatpush1.msra.mxu0 0.0
    %2294 = vmatprep.mubr.f32.mxu0 0.0
    %2295 = vmatmul.mubr.f32.gmra.mrb[0].mxu0 %v2228
    %v2296 = vpop.f32.mrb[0].mxu0
    %v2297 = vadd.f32 0.0, %v2296
    %v2298 = vpop.f32.mrb[0].mxu0
    %2299 = vdwg.mxu0
    %v2301 = vsel %vm1546, %v2076, 0
    %2303 = vmatprep.subr.mxu0 0.0
    %2304 = vmatpush1.msra.mxu0 %v1388
    %2305 = vmatprep.subr.mxu0 0.0
    %2306 = vmatpush1.msra.mxu0 0.0
    %2307 = vmatprep.subr.mxu0 0.0
    %2308 = vmatpush1.msra.mxu0 0.0
    %2309 = vmatprep.subr.mxu0 0.0
    %2310 = vmatpush1.msra.mxu0 0.0
    %2311 = vmatprep.subr.mxu0 0.0
    %2312 = vmatpush1.msra.mxu0 0.0
    %2313 = vmatprep.subr.mxu0 0.0
    %2314 = vmatpush1.msra.mxu0 0.0
    %2315 = vmatprep.subr.mxu0 0.0
    %2316 = vmatpush1.msra.mxu0 0.0
    %2317 = vmatprep.subr.mxu0 0.0
    %2318 = vmatpush1.msra.mxu0 0.0
    %2319 = vmatprep.subr.mxu0 0.0
    %2320 = vmatpush1.msra.mxu0 0.0
    %2321 = vmatprep.subr.mxu0 0.0
    %2322 = vmatpush1.msra.mxu0 0.0
    %2323 = vmatprep.subr.mxu0 0.0
    %2324 = vmatpush1.msra.mxu0 0.0
    %2325 = vmatprep.subr.mxu0 0.0
    %2326 = vmatpush1.msra.mxu0 0.0
    %2327 = vmatprep.subr.mxu0 0.0
    %2328 = vmatpush1.msra.mxu0 0.0
    %2329 = vmatprep.subr.mxu0 0.0
    %2330 = vmatpush1.msra.mxu0 0.0
    %2331 = vmatprep.subr.mxu0 0.0
    %2332 = vmatpush1.msra.mxu0 0.0
    %2333 = vmatprep.subr.mxu0 0.0
    %2334 = vmatpush1.msra.mxu0 0.0
    %2335 = vmatprep.subr.mxu0 0.0
    %2336 = vmatpush1.msra.mxu0 0.0
    %2337 = vmatprep.subr.mxu0 0.0
    %2338 = vmatpush1.msra.mxu0 0.0
    %2339 = vmatprep.subr.mxu0 0.0
    %2340 = vmatpush1.msra.mxu0 0.0
    %2341 = vmatprep.subr.mxu0 0.0
    %2342 = vmatpush1.msra.mxu0 0.0
    %2343 = vmatprep.subr.mxu0 0.0
    %2344 = vmatpush1.msra.mxu0 0.0
    %2345 = vmatprep.subr.mxu0 0.0
    %2346 = vmatpush1.msra.mxu0 0.0
    %2347 = vmatprep.subr.mxu0 0.0
    %2348 = vmatpush1.msra.mxu0 0.0
    %2349 = vmatprep.subr.mxu0 0.0
    %2350 = vmatpush1.msra.mxu0 0.0
    %2351 = vmatprep.subr.mxu0 0.0
    %2352 = vmatpush1.msra.mxu0 0.0
    %2353 = vmatprep.subr.mxu0 0.0
    %2354 = vmatpush1.msra.mxu0 0.0
    %2355 = vmatprep.subr.mxu0 0.0
    %2356 = vmatpush1.msra.mxu0 0.0
    %2357 = vmatprep.subr.mxu0 0.0
    %2358 = vmatpush1.msra.mxu0 0.0
    %2359 = vmatprep.subr.mxu0 0.0
    %2360 = vmatpush1.msra.mxu0 0.0
    %2361 = vmatprep.subr.mxu0 0.0
    %2362 = vmatpush1.msra.mxu0 0.0
    %2363 = vmatprep.subr.mxu0 0.0
    %2364 = vmatpush1.msra.mxu0 0.0
    %2365 = vmatprep.subr.mxu0 0.0
    %2366 = vmatpush1.msra.mxu0 0.0
    %2367 = vmatprep.mubr.f32.mxu0 0.0
    %2368 = vmatmul.mubr.f32.gmra.mrb[0].mxu0 %v2301
    %v2369 = vpop.f32.mrb[0].mxu0
    %v2370 = vadd.f32 0.0, %v2369
    %v2371 = vpop.f32.mrb[0].mxu0
    %2372 = vdwg.mxu0
    %v2374 = vsel %vm1546, %v2078, 0
    %2376 = vmatprep.subr.mxu0 0.0
    %2377 = vmatpush1.msra.mxu0 %v1463
    %2378 = vmatprep.subr.mxu0 0.0
    %2379 = vmatpush1.msra.mxu0 0.0
    %2380 = vmatprep.subr.mxu0 0.0
    %2381 = vmatpush1.msra.mxu0 0.0
    %2382 = vmatprep.subr.mxu0 0.0
    %2383 = vmatpush1.msra.mxu0 0.0
    %2384 = vmatprep.subr.mxu0 0.0
    %2385 = vmatpush1.msra.mxu0 0.0
    %2386 = vmatprep.subr.mxu0 0.0
    %2387 = vmatpush1.msra.mxu0 0.0
    %2388 = vmatprep.subr.mxu0 0.0
    %2389 = vmatpush1.msra.mxu0 0.0
    %2390 = vmatprep.subr.mxu0 0.0
    %2391 = vmatpush1.msra.mxu0 0.0
    %2392 = vmatprep.subr.mxu0 0.0
    %2393 = vmatpush1.msra.mxu0 0.0
    %2394 = vmatprep.subr.mxu0 0.0
    %2395 = vmatpush1.msra.mxu0 0.0
    %2396 = vmatprep.subr.mxu0 0.0
    %2397 = vmatpush1.msra.mxu0 0.0
    %2398 = vmatprep.subr.mxu0 0.0
    %2399 = vmatpush1.msra.mxu0 0.0
    %2400 = vmatprep.subr.mxu0 0.0
    %2401 = vmatpush1.msra.mxu0 0.0
    %2402 = vmatprep.subr.mxu0 0.0
    %2403 = vmatpush1.msra.mxu0 0.0
    %2404 = vmatprep.subr.mxu0 0.0
    %2405 = vmatpush1.msra.mxu0 0.0
    %2406 = vmatprep.subr.mxu0 0.0
    %2407 = vmatpush1.msra.mxu0 0.0
    %2408 = vmatprep.subr.mxu0 0.0
    %2409 = vmatpush1.msra.mxu0 0.0
    %2410 = vmatprep.subr.mxu0 0.0
    %2411 = vmatpush1.msra.mxu0 0.0
    %2412 = vmatprep.subr.mxu0 0.0
    %2413 = vmatpush1.msra.mxu0 0.0
    %2414 = vmatprep.subr.mxu0 0.0
    %2415 = vmatpush1.msra.mxu0 0.0
    %2416 = vmatprep.subr.mxu0 0.0
    %2417 = vmatpush1.msra.mxu0 0.0
    %2418 = vmatprep.subr.mxu0 0.0
    %2419 = vmatpush1.msra.mxu0 0.0
    %2420 = vmatprep.subr.mxu0 0.0
    %2421 = vmatpush1.msra.mxu0 0.0
    %2422 = vmatprep.subr.mxu0 0.0
    %2423 = vmatpush1.msra.mxu0 0.0
    %2424 = vmatprep.subr.mxu0 0.0
    %2425 = vmatpush1.msra.mxu0 0.0
    %2426 = vmatprep.subr.mxu0 0.0
    %2427 = vmatpush1.msra.mxu0 0.0
    %2428 = vmatprep.subr.mxu0 0.0
    %2429 = vmatpush1.msra.mxu0 0.0
    %2430 = vmatprep.subr.mxu0 0.0
    %2431 = vmatpush1.msra.mxu0 0.0
    %2432 = vmatprep.subr.mxu0 0.0
    %2433 = vmatpush1.msra.mxu0 0.0
    %2434 = vmatprep.subr.mxu0 0.0
    %2435 = vmatpush1.msra.mxu0 0.0
    %2436 = vmatprep.subr.mxu0 0.0
    %2437 = vmatpush1.msra.mxu0 0.0
    %2438 = vmatprep.subr.mxu0 0.0
    %2439 = vmatpush1.msra.mxu0 0.0
    %2440 = vmatprep.mubr.f32.mxu0 0.0
    %2441 = vmatmul.mubr.f32.gmra.mrb[0].mxu0 %v2374
    %v2442 = vpop.f32.mrb[0].mxu0
    %v2443 = vadd.f32 0.0, %v2442
    %v2444 = vpop.f32.mrb[0].mxu0
    %2445 = vdwg.mxu0
    %v2447 = vsel %vm1546, %v2080, 0
    %2449 = vmatprep.subr.mxu0 0.0
    %2450 = vmatpush1.msra.mxu0 %v1538
    %2451 = vmatprep.subr.mxu0 0.0
    %2452 = vmatpush1.msra.mxu0 0.0
    %2453 = vmatprep.subr.mxu0 0.0
    %2454 = vmatpush1.msra.mxu0 0.0
    %2455 = vmatprep.subr.mxu0 0.0
    %2456 = vmatpush1.msra.mxu0 0.0
    %2457 = vmatprep.subr.mxu0 0.0
    %2458 = vmatpush1.msra.mxu0 0.0
    %2459 = vmatprep.subr.mxu0 0.0
    %2460 = vmatpush1.msra.mxu0 0.0
    %2461 = vmatprep.subr.mxu0 0.0
    %2462 = vmatpush1.msra.mxu0 0.0
    %2463 = vmatprep.subr.mxu0 0.0
    %2464 = vmatpush1.msra.mxu0 0.0
    %2465 = vmatprep.subr.mxu0 0.0
    %2466 = vmatpush1.msra.mxu0 0.0
    %2467 = vmatprep.subr.mxu0 0.0
    %2468 = vmatpush1.msra.mxu0 0.0
    %2469 = vmatprep.subr.mxu0 0.0
    %2470 = vmatpush1.msra.mxu0 0.0
    %2471 = vmatprep.subr.mxu0 0.0
    %2472 = vmatpush1.msra.mxu0 0.0
    %2473 = vmatprep.subr.mxu0 0.0
    %2474 = vmatpush1.msra.mxu0 0.0
    %2475 = vmatprep.subr.mxu0 0.0
    %2476 = vmatpush1.msra.mxu0 0.0
    %2477 = vmatprep.subr.mxu0 0.0
    %2478 = vmatpush1.msra.mxu0 0.0
    %2479 = vmatprep.subr.mxu0 0.0
    %2480 = vmatpush1.msra.mxu0 0.0
    %2481 = vmatprep.subr.mxu0 0.0
    %2482 = vmatpush1.msra.mxu0 0.0
    %2483 = vmatprep.subr.mxu0 0.0
    %2484 = vmatpush1.msra.mxu0 0.0
    %2485 = vmatprep.subr.mxu0 0.0
    %2486 = vmatpush1.msra.mxu0 0.0
    %2487 = vmatprep.subr.mxu0 0.0
    %2488 = vmatpush1.msra.mxu0 0.0
    %2489 = vmatprep.subr.mxu0 0.0
    %2490 = vmatpush1.msra.mxu0 0.0
    %2491 = vmatprep.subr.mxu0 0.0
    %2492 = vmatpush1.msra.mxu0 0.0
    %2493 = vmatprep.subr.mxu0 0.0
    %2494 = vmatpush1.msra.mxu0 0.0
    %2495 = vmatprep.subr.mxu0 0.0
    %2496 = vmatpush1.msra.mxu0 0.0
    %2497 = vmatprep.subr.mxu0 0.0
    %2498 = vmatpush1.msra.mxu0 0.0
    %2499 = vmatprep.subr.mxu0 0.0
    %2500 = vmatpush1.msra.mxu0 0.0
    %2501 = vmatprep.subr.mxu0 0.0
    %2502 = vmatpush1.msra.mxu0 0.0
    %2503 = vmatprep.subr.mxu0 0.0
    %2504 = vmatpush1.msra.mxu0 0.0
    %2505 = vmatprep.subr.mxu0 0.0
    %2506 = vmatpush1.msra.mxu0 0.0
    %2507 = vmatprep.subr.mxu0 0.0
    %2508 = vmatpush1.msra.mxu0 0.0
    %2509 = vmatprep.subr.mxu0 0.0
    %2510 = vmatpush1.msra.mxu0 0.0
    %2511 = vmatprep.subr.mxu0 0.0
    %2512 = vmatpush1.msra.mxu0 0.0
    %2513 = vmatprep.mubr.f32.mxu0 0.0
    %2514 = vmatmul.mubr.f32.gmra.mrb[0].mxu0 %v2447
    %v2515 = vpop.f32.mrb[0].mxu0
    %v2516 = vadd.f32 0.0, %v2515
    %v2517 = vpop.f32.mrb[0].mxu0
    %2518 = vdwg.mxu0
    %v2520 = vsel %vm1546, %v2151, 0
    %2522 = vmatprep.subr.mxu0 0.0
    %2523 = vmatpush1.msra.mxu0 %v142
    %2524 = vmatprep.subr.mxu0 0.0
    %2525 = vmatpush1.msra.mxu0 0.0
    %2526 = vmatprep.subr.mxu0 0.0
    %2527 = vmatpush1.msra.mxu0 0.0
    %2528 = vmatprep.subr.mxu0 0.0
    %2529 = vmatpush1.msra.mxu0 0.0
    %2530 = vmatprep.subr.mxu0 0.0
    %2531 = vmatpush1.msra.mxu0 0.0
    %2532 = vmatprep.subr.mxu0 0.0
    %2533 = vmatpush1.msra.mxu0 0.0
    %2534 = vmatprep.subr.mxu0 0.0
    %2535 = vmatpush1.msra.mxu0 0.0
    %2536 = vmatprep.subr.mxu0 0.0
    %2537 = vmatpush1.msra.mxu0 0.0
    %2538 = vmatprep.subr.mxu0 0.0
    %2539 = vmatpush1.msra.mxu0 0.0
    %2540 = vmatprep.subr.mxu0 0.0
    %2541 = vmatpush1.msra.mxu0 0.0
    %2542 = vmatprep.subr.mxu0 0.0
    %2543 = vmatpush1.msra.mxu0 0.0
    %2544 = vmatprep.subr.mxu0 0.0
    %2545 = vmatpush1.msra.mxu0 0.0
    %2546 = vmatprep.subr.mxu0 0.0
    %2547 = vmatpush1.msra.mxu0 0.0
    %2548 = vmatprep.subr.mxu0 0.0
    %2549 = vmatpush1.msra.mxu0 0.0
    %2550 = vmatprep.subr.mxu0 0.0
    %2551 = vmatpush1.msra.mxu0 0.0
    %2552 = vmatprep.subr.mxu0 0.0
    %2553 = vmatpush1.msra.mxu0 0.0
    %2554 = vmatprep.subr.mxu0 0.0
    %2555 = vmatpush1.msra.mxu0 0.0
    %2556 = vmatprep.subr.mxu0 0.0
    %2557 = vmatpush1.msra.mxu0 0.0
    %2558 = vmatprep.subr.mxu0 0.0
    %2559 = vmatpush1.msra.mxu0 0.0
    %2560 = vmatprep.subr.mxu0 0.0
    %2561 = vmatpush1.msra.mxu0 0.0
    %2562 = vmatprep.subr.mxu0 0.0
    %2563 = vmatpush1.msra.mxu0 0.0
    %2564 = vmatprep.subr.mxu0 0.0
    %2565 = vmatpush1.msra.mxu0 0.0
    %2566 = vmatprep.subr.mxu0 0.0
    %2567 = vmatpush1.msra.mxu0 0.0
    %2568 = vmatprep.subr.mxu0 0.0
    %2569 = vmatpush1.msra.mxu0 0.0
    %2570 = vmatprep.subr.mxu0 0.0
    %2571 = vmatpush1.msra.mxu0 0.0
    %2572 = vmatprep.subr.mxu0 0.0
    %2573 = vmatpush1.msra.mxu0 0.0
    %2574 = vmatprep.subr.mxu0 0.0
    %2575 = vmatpush1.msra.mxu0 0.0
    %2576 = vmatprep.subr.mxu0 0.0
    %2577 = vmatpush1.msra.mxu0 0.0
    %2578 = vmatprep.subr.mxu0 0.0
    %2579 = vmatpush1.msra.mxu0 0.0
    %2580 = vmatprep.subr.mxu0 0.0
    %2581 = vmatpush1.msra.mxu0 0.0
    %2582 = vmatprep.subr.mxu0 0.0
    %2583 = vmatpush1.msra.mxu0 0.0
    %2584 = vmatprep.subr.mxu0 0.0
    %2585 = vmatpush1.msra.mxu0 0.0
    %2586 = vmatprep.mubr.f32.mxu0 0.0
    %2587 = vmatmul.mubr.f32.gmra.mrb[0].mxu0 %v2520
    %v2588 = vpop.f32.mrb[0].mxu0
    %v2589 = vadd.f32 0.0, %v2588
    %v2590 = vpop.f32.mrb[0].mxu0
    %2591 = vdwg.mxu0
    %v2593 = vsel %vm1546, %v2224, 0
    %2595 = vmatprep.subr.mxu0 0.0
    %2596 = vmatpush1.msra.mxu0 %v143
    %2597 = vmatprep.subr.mxu0 0.0
    %2598 = vmatpush1.msra.mxu0 0.0
    %2599 = vmatprep.subr.mxu0 0.0
    %2600 = vmatpush1.msra.mxu0 0.0
    %2601 = vmatprep.subr.mxu0 0.0
    %2602 = vmatpush1.msra.mxu0 0.0
    %2603 = vmatprep.subr.mxu0 0.0
    %2604 = vmatpush1.msra.mxu0 0.0
    %2605 = vmatprep.subr.mxu0 0.0
    %2606 = vmatpush1.msra.mxu0 0.0
    %2607 = vmatprep.subr.mxu0 0.0
    %2608 = vmatpush1.msra.mxu0 0.0
    %2609 = vmatprep.subr.mxu0 0.0
    %2610 = vmatpush1.msra.mxu0 0.0
    %2611 = vmatprep.subr.mxu0 0.0
    %2612 = vmatpush1.msra.mxu0 0.0
    %2613 = vmatprep.subr.mxu0 0.0
    %2614 = vmatpush1.msra.mxu0 0.0
    %2615 = vmatprep.subr.mxu0 0.0
    %2616 = vmatpush1.msra.mxu0 0.0
    %2617 = vmatprep.subr.mxu0 0.0
    %2618 = vmatpush1.msra.mxu0 0.0
    %2619 = vmatprep.subr.mxu0 0.0
    %2620 = vmatpush1.msra.mxu0 0.0
    %2621 = vmatprep.subr.mxu0 0.0
    %2622 = vmatpush1.msra.mxu0 0.0
    %2623 = vmatprep.subr.mxu0 0.0
    %2624 = vmatpush1.msra.mxu0 0.0
    %2625 = vmatprep.subr.mxu0 0.0
    %2626 = vmatpush1.msra.mxu0 0.0
    %2627 = vmatprep.subr.mxu0 0.0
    %2628 = vmatpush1.msra.mxu0 0.0
    %2629 = vmatprep.subr.mxu0 0.0
    %2630 = vmatpush1.msra.mxu0 0.0
    %2631 = vmatprep.subr.mxu0 0.0
    %2632 = vmatpush1.msra.mxu0 0.0
    %2633 = vmatprep.subr.mxu0 0.0
    %2634 = vmatpush1.msra.mxu0 0.0
    %2635 = vmatprep.subr.mxu0 0.0
    %2636 = vmatpush1.msra.mxu0 0.0
    %2637 = vmatprep.subr.mxu0 0.0
    %2638 = vmatpush1.msra.mxu0 0.0
    %2639 = vmatprep.subr.mxu0 0.0
    %2640 = vmatpush1.msra.mxu0 0.0
    %2641 = vmatprep.subr.mxu0 0.0
    %2642 = vmatpush1.msra.mxu0 0.0
    %2643 = vmatprep.subr.mxu0 0.0
    %2644 = vmatpush1.msra.mxu0 0.0
    %2645 = vmatprep.subr.mxu0 0.0
    %2646 = vmatpush1.msra.mxu0 0.0
    %2647 = vmatprep.subr.mxu0 0.0
    %2648 = vmatpush1.msra.mxu0 0.0
    %2649 = vmatprep.subr.mxu0 0.0
    %2650 = vmatpush1.msra.mxu0 0.0
    %2651 = vmatprep.subr.mxu0 0.0
    %2652 = vmatpush1.msra.mxu0 0.0
    %2653 = vmatprep.subr.mxu0 0.0
    %2654 = vmatpush1.msra.mxu0 0.0
    %2655 = vmatprep.subr.mxu0 0.0
    %2656 = vmatpush1.msra.mxu0 0.0
    %2657 = vmatprep.subr.mxu0 0.0
    %2658 = vmatpush1.msra.mxu0 0.0
    %2659 = vmatprep.mubr.f32.mxu0 0.0
    %2660 = vmatmul.mubr.f32.gmra.mrb[0].mxu0 %v2593
    %v2661 = vpop.f32.mrb[0].mxu0
    %v2662 = vadd.f32 0.0, %v2661
    %v2663 = vpop.f32.mrb[0].mxu0
    %2664 = vdwg.mxu0
    %v2666 = vsel %vm1546, %v2297, 0
    %2668 = vmatprep.subr.mxu0 0.0
    %2669 = vmatpush1.msra.mxu0 %v144
    %2670 = vmatprep.subr.mxu0 0.0
    %2671 = vmatpush1.msra.mxu0 0.0
    %2672 = vmatprep.subr.mxu0 0.0
    %2673 = vmatpush1.msra.mxu0 0.0
    %2674 = vmatprep.subr.mxu0 0.0
    %2675 = vmatpush1.msra.mxu0 0.0
    %2676 = vmatprep.subr.mxu0 0.0
    %2677 = vmatpush1.msra.mxu0 0.0
    %2678 = vmatprep.subr.mxu0 0.0
    %2679 = vmatpush1.msra.mxu0 0.0
    %2680 = vmatprep.subr.mxu0 0.0
    %2681 = vmatpush1.msra.mxu0 0.0
    %2682 = vmatprep.subr.mxu0 0.0
    %2683 = vmatpush1.msra.mxu0 0.0
    %2684 = vmatprep.subr.mxu0 0.0
    %2685 = vmatpush1.msra.mxu0 0.0
    %2686 = vmatprep.subr.mxu0 0.0
    %2687 = vmatpush1.msra.mxu0 0.0
    %2688 = vmatprep.subr.mxu0 0.0
    %2689 = vmatpush1.msra.mxu0 0.0
    %2690 = vmatprep.subr.mxu0 0.0
    %2691 = vmatpush1.msra.mxu0 0.0
    %2692 = vmatprep.subr.mxu0 0.0
    %2693 = vmatpush1.msra.mxu0 0.0
    %2694 = vmatprep.subr.mxu0 0.0
    %2695 = vmatpush1.msra.mxu0 0.0
    %2696 = vmatprep.subr.mxu0 0.0
    %2697 = vmatpush1.msra.mxu0 0.0
    %2698 = vmatprep.subr.mxu0 0.0
    %2699 = vmatpush1.msra.mxu0 0.0
    %2700 = vmatprep.subr.mxu0 0.0
    %2701 = vmatpush1.msra.mxu0 0.0
    %2702 = vmatprep.subr.mxu0 0.0
    %2703 = vmatpush1.msra.mxu0 0.0
    %2704 = vmatprep.subr.mxu0 0.0
    %2705 = vmatpush1.msra.mxu0 0.0
    %2706 = vmatprep.subr.mxu0 0.0
    %2707 = vmatpush1.msra.mxu0 0.0
    %2708 = vmatprep.subr.mxu0 0.0
    %2709 = vmatpush1.msra.mxu0 0.0
    %2710 = vmatprep.subr.mxu0 0.0
    %2711 = vmatpush1.msra.mxu0 0.0
    %2712 = vmatprep.subr.mxu0 0.0
    %2713 = vmatpush1.msra.mxu0 0.0
    %2714 = vmatprep.subr.mxu0 0.0
    %2715 = vmatpush1.msra.mxu0 0.0
    %2716 = vmatprep.subr.mxu0 0.0
    %2717 = vmatpush1.msra.mxu0 0.0
    %2718 = vmatprep.subr.mxu0 0.0
    %2719 = vmatpush1.msra.mxu0 0.0
    %2720 = vmatprep.subr.mxu0 0.0
    %2721 = vmatpush1.msra.mxu0 0.0
    %2722 = vmatprep.subr.mxu0 0.0
    %2723 = vmatpush1.msra.mxu0 0.0
    %2724 = vmatprep.subr.mxu0 0.0
    %2725 = vmatpush1.msra.mxu0 0.0
    %2726 = vmatprep.subr.mxu0 0.0
    %2727 = vmatpush1.msra.mxu0 0.0
    %2728 = vmatprep.subr.mxu0 0.0
    %2729 = vmatpush1.msra.mxu0 0.0
    %2730 = vmatprep.subr.mxu0 0.0
    %2731 = vmatpush1.msra.mxu0 0.0
    %2732 = vmatprep.mubr.f32.mxu0 0.0
    %2733 = vmatmul.mubr.f32.gmra.mrb[0].mxu0 %v2666
    %v2734 = vpop.f32.mrb[0].mxu0
    %v2735 = vadd.f32 0.0, %v2734
    %v2736 = vpop.f32.mrb[0].mxu0
    %2737 = vdwg.mxu0
    %v2739 = vsel %vm1546, %v2370, 0
    %2741 = vmatprep.subr.mxu0 0.0
    %2742 = vmatpush1.msra.mxu0 %v145
    %2743 = vmatprep.subr.mxu0 0.0
    %2744 = vmatpush1.msra.mxu0 0.0
    %2745 = vmatprep.subr.mxu0 0.0
    %2746 = vmatpush1.msra.mxu0 0.0
    %2747 = vmatprep.subr.mxu0 0.0
    %2748 = vmatpush1.msra.mxu0 0.0
    %2749 = vmatprep.subr.mxu0 0.0
    %2750 = vmatpush1.msra.mxu0 0.0
    %2751 = vmatprep.subr.mxu0 0.0
    %2752 = vmatpush1.msra.mxu0 0.0
    %2753 = vmatprep.subr.mxu0 0.0
    %2754 = vmatpush1.msra.mxu0 0.0
    %2755 = vmatprep.subr.mxu0 0.0
    %2756 = vmatpush1.msra.mxu0 0.0
    %2757 = vmatprep.subr.mxu0 0.0
    %2758 = vmatpush1.msra.mxu0 0.0
    %2759 = vmatprep.subr.mxu0 0.0
    %2760 = vmatpush1.msra.mxu0 0.0
    %2761 = vmatprep.subr.mxu0 0.0
    %2762 = vmatpush1.msra.mxu0 0.0
    %2763 = vmatprep.subr.mxu0 0.0
    %2764 = vmatpush1.msra.mxu0 0.0
    %2765 = vmatprep.subr.mxu0 0.0
    %2766 = vmatpush1.msra.mxu0 0.0
    %2767 = vmatprep.subr.mxu0 0.0
    %2768 = vmatpush1.msra.mxu0 0.0
    %2769 = vmatprep.subr.mxu0 0.0
    %2770 = vmatpush1.msra.mxu0 0.0
    %2771 = vmatprep.subr.mxu0 0.0
    %2772 = vmatpush1.msra.mxu0 0.0
    %2773 = vmatprep.subr.mxu0 0.0
    %2774 = vmatpush1.msra.mxu0 0.0
    %2775 = vmatprep.subr.mxu0 0.0
    %2776 = vmatpush1.msra.mxu0 0.0
    %2777 = vmatprep.subr.mxu0 0.0
    %2778 = vmatpush1.msra.mxu0 0.0
    %2779 = vmatprep.subr.mxu0 0.0
    %2780 = vmatpush1.msra.mxu0 0.0
    %2781 = vmatprep.subr.mxu0 0.0
    %2782 = vmatpush1.msra.mxu0 0.0
    %2783 = vmatprep.subr.mxu0 0.0
    %2784 = vmatpush1.msra.mxu0 0.0
    %2785 = vmatprep.subr.mxu0 0.0
    %2786 = vmatpush1.msra.mxu0 0.0
    %2787 = vmatprep.subr.mxu0 0.0
    %2788 = vmatpush1.msra.mxu0 0.0
    %2789 = vmatprep.subr.mxu0 0.0
    %2790 = vmatpush1.msra.mxu0 0.0
    %2791 = vmatprep.subr.mxu0 0.0
    %2792 = vmatpush1.msra.mxu0 0.0
    %2793 = vmatprep.subr.mxu0 0.0
    %2794 = vmatpush1.msra.mxu0 0.0
    %2795 = vmatprep.subr.mxu0 0.0
    %2796 = vmatpush1.msra.mxu0 0.0
    %2797 = vmatprep.subr.mxu0 0.0
    %2798 = vmatpush1.msra.mxu0 0.0
    %2799 = vmatprep.subr.mxu0 0.0
    %2800 = vmatpush1.msra.mxu0 0.0
    %2801 = vmatprep.subr.mxu0 0.0
    %2802 = vmatpush1.msra.mxu0 0.0
    %2803 = vmatprep.subr.mxu0 0.0
    %2804 = vmatpush1.msra.mxu0 0.0
    %2805 = vmatprep.mubr.f32.mxu0 0.0
    %2806 = vmatmul.mubr.f32.gmra.mrb[0].mxu0 %v2739
    %v2807 = vpop.f32.mrb[0].mxu0
    %v2808 = vadd.f32 0.0, %v2807
    %v2809 = vpop.f32.mrb[0].mxu0
    %2810 = vdwg.mxu0
    %v2812 = vsel %vm1546, %v2443, 0
    %2814 = vmatprep.subr.mxu0 0.0
    %2815 = vmatpush1.msra.mxu0 %v146
    %2816 = vmatprep.subr.mxu0 0.0
    %2817 = vmatpush1.msra.mxu0 0.0
    %2818 = vmatprep.subr.mxu0 0.0
    %2819 = vmatpush1.msra.mxu0 0.0
    %2820 = vmatprep.subr.mxu0 0.0
    %2821 = vmatpush1.msra.mxu0 0.0
    %2822 = vmatprep.subr.mxu0 0.0
    %2823 = vmatpush1.msra.mxu0 0.0
    %2824 = vmatprep.subr.mxu0 0.0
    %2825 = vmatpush1.msra.mxu0 0.0
    %2826 = vmatprep.subr.mxu0 0.0
    %2827 = vmatpush1.msra.mxu0 0.0
    %2828 = vmatprep.subr.mxu0 0.0
    %2829 = vmatpush1.msra.mxu0 0.0
    %2830 = vmatprep.subr.mxu0 0.0
    %2831 = vmatpush1.msra.mxu0 0.0
    %2832 = vmatprep.subr.mxu0 0.0
    %2833 = vmatpush1.msra.mxu0 0.0
    %2834 = vmatprep.subr.mxu0 0.0
    %2835 = vmatpush1.msra.mxu0 0.0
    %2836 = vmatprep.subr.mxu0 0.0
    %2837 = vmatpush1.msra.mxu0 0.0
    %2838 = vmatprep.subr.mxu0 0.0
    %2839 = vmatpush1.msra.mxu0 0.0
    %2840 = vmatprep.subr.mxu0 0.0
    %2841 = vmatpush1.msra.mxu0 0.0
    %2842 = vmatprep.subr.mxu0 0.0
    %2843 = vmatpush1.msra.mxu0 0.0
    %2844 = vmatprep.subr.mxu0 0.0
    %2845 = vmatpush1.msra.mxu0 0.0
    %2846 = vmatprep.subr.mxu0 0.0
    %2847 = vmatpush1.msra.mxu0 0.0
    %2848 = vmatprep.subr.mxu0 0.0
    %2849 = vmatpush1.msra.mxu0 0.0
    %2850 = vmatprep.subr.mxu0 0.0
    %2851 = vmatpush1.msra.mxu0 0.0
    %2852 = vmatprep.subr.mxu0 0.0
    %2853 = vmatpush1.msra.mxu0 0.0
    %2854 = vmatprep.subr.mxu0 0.0
    %2855 = vmatpush1.msra.mxu0 0.0
    %2856 = vmatprep.subr.mxu0 0.0
    %2857 = vmatpush1.msra.mxu0 0.0
    %2858 = vmatprep.subr.mxu0 0.0
    %2859 = vmatpush1.msra.mxu0 0.0
    %2860 = vmatprep.subr.mxu0 0.0
    %2861 = vmatpush1.msra.mxu0 0.0
    %2862 = vmatprep.subr.mxu0 0.0
    %2863 = vmatpush1.msra.mxu0 0.0
    %2864 = vmatprep.subr.mxu0 0.0
    %2865 = vmatpush1.msra.mxu0 0.0
    %2866 = vmatprep.subr.mxu0 0.0
    %2867 = vmatpush1.msra.mxu0 0.0
    %2868 = vmatprep.subr.mxu0 0.0
    %2869 = vmatpush1.msra.mxu0 0.0
    %2870 = vmatprep.subr.mxu0 0.0
    %2871 = vmatpush1.msra.mxu0 0.0
    %2872 = vmatprep.subr.mxu0 0.0
    %2873 = vmatpush1.msra.mxu0 0.0
    %2874 = vmatprep.subr.mxu0 0.0
    %2875 = vmatpush1.msra.mxu0 0.0
    %2876 = vmatprep.subr.mxu0 0.0
    %2877 = vmatpush1.msra.mxu0 0.0
    %2878 = vmatprep.mubr.f32.mxu0 0.0
    %2879 = vmatmul.mubr.f32.gmra.mrb[0].mxu0 %v2812
    %v2880 = vpop.f32.mrb[0].mxu0
    %v2881 = vadd.f32 0.0, %v2880
    %v2882 = vpop.f32.mrb[0].mxu0
    %2883 = vdwg.mxu0
    %v2885 = vsel %vm1546, %v2516, 0
    %2887 = vmatprep.subr.mxu0 0.0
    %2888 = vmatpush1.msra.mxu0 %v147
    %2889 = vmatprep.subr.mxu0 0.0
    %2890 = vmatpush1.msra.mxu0 0.0
    %2891 = vmatprep.subr.mxu0 0.0
    %2892 = vmatpush1.msra.mxu0 0.0
    %2893 = vmatprep.subr.mxu0 0.0
    %2894 = vmatpush1.msra.mxu0 0.0
    %2895 = vmatprep.subr.mxu0 0.0
    %2896 = vmatpush1.msra.mxu0 0.0
    %2897 = vmatprep.subr.mxu0 0.0
    %2898 = vmatpush1.msra.mxu0 0.0
    %2899 = vmatprep.subr.mxu0 0.0
    %2900 = vmatpush1.msra.mxu0 0.0
    %2901 = vmatprep.subr.mxu0 0.0
    %2902 = vmatpush1.msra.mxu0 0.0
    %2903 = vmatprep.subr.mxu0 0.0
    %2904 = vmatpush1.msra.mxu0 0.0
    %2905 = vmatprep.subr.mxu0 0.0
    %2906 = vmatpush1.msra.mxu0 0.0
    %2907 = vmatprep.subr.mxu0 0.0
    %2908 = vmatpush1.msra.mxu0 0.0
    %2909 = vmatprep.subr.mxu0 0.0
    %2910 = vmatpush1.msra.mxu0 0.0
    %2911 = vmatprep.subr.mxu0 0.0
    %2912 = vmatpush1.msra.mxu0 0.0
    %2913 = vmatprep.subr.mxu0 0.0
    %2914 = vmatpush1.msra.mxu0 0.0
    %2915 = vmatprep.subr.mxu0 0.0
    %2916 = vmatpush1.msra.mxu0 0.0
    %2917 = vmatprep.subr.mxu0 0.0
    %2918 = vmatpush1.msra.mxu0 0.0
    %2919 = vmatprep.subr.mxu0 0.0
    %2920 = vmatpush1.msra.mxu0 0.0
    %2921 = vmatprep.subr.mxu0 0.0
    %2922 = vmatpush1.msra.mxu0 0.0
    %2923 = vmatprep.subr.mxu0 0.0
    %2924 = vmatpush1.msra.mxu0 0.0
    %2925 = vmatprep.subr.mxu0 0.0
    %2926 = vmatpush1.msra.mxu0 0.0
    %2927 = vmatprep.subr.mxu0 0.0
    %2928 = vmatpush1.msra.mxu0 0.0
    %2929 = vmatprep.subr.mxu0 0.0
    %2930 = vmatpush1.msra.mxu0 0.0
    %2931 = vmatprep.subr.mxu0 0.0
    %2932 = vmatpush1.msra.mxu0 0.0
    %2933 = vmatprep.subr.mxu0 0.0
    %2934 = vmatpush1.msra.mxu0 0.0
    %2935 = vmatprep.subr.mxu0 0.0
    %2936 = vmatpush1.msra.mxu0 0.0
    %2937 = vmatprep.subr.mxu0 0.0
    %2938 = vmatpush1.msra.mxu0 0.0
    %2939 = vmatprep.subr.mxu0 0.0
    %2940 = vmatpush1.msra.mxu0 0.0
    %2941 = vmatprep.subr.mxu0 0.0
    %2942 = vmatpush1.msra.mxu0 0.0
    %2943 = vmatprep.subr.mxu0 0.0
    %2944 = vmatpush1.msra.mxu0 0.0
    %2945 = vmatprep.subr.mxu0 0.0
    %2946 = vmatpush1.msra.mxu0 0.0
    %2947 = vmatprep.subr.mxu0 0.0
    %2948 = vmatpush1.msra.mxu0 0.0
    %2949 = vmatprep.subr.mxu0 0.0
    %2950 = vmatpush1.msra.mxu0 0.0
    %2951 = vmatprep.mubr.f32.mxu0 0.0
    %2952 = vmatmul.mubr.f32.gmra.mrb[0].mxu0 %v2885
    %v2953 = vpop.f32.mrb[0].mxu0
    %v2954 = vadd.f32 0.0, %v2953
    %v2955 = vpop.f32.mrb[0].mxu0
    %2956 = vdwg.mxu0
    %v2957 = vsel %vm154, %v2589, 0.0
    %v2958 = vsel %vm154, %v2662, 0.0
    %v2959 = vadd.f32 %v2957, %v2958
    %v2960 = vsel %vm154, %v2735, 0.0
    %v2961 = vadd.f32 %v2959, %v2960
    %v2962 = vsel %vm154, %v2808, 0.0
    %v2963 = vadd.f32 %v2961, %v2962
    %v2964 = vsel %vm154, %v2881, 0.0
    %v2965 = vadd.f32 %v2963, %v2964
    %v2966 = vsel %vm154, %v2954, 0.0
    %v2967 = vadd.f32 %v2965, %v2966
    %v2969 = vsel %vm1546, %v268, 0
    %v2972 = vsel %vm1546, %v718, 0
    %2974 = vmatprep.subr.mxu0 0.0
    %2975 = vmatpush1.xpose.msra.mxu0 %v2972
    %2976 = vmatprep.subr.mxu0 0.0
    %2977 = vmatpush1.xpose.msra.mxu0 0.0
    %2978 = vmatprep.subr.mxu0 0.0
    %2979 = vmatpush1.xpose.msra.mxu0 0.0
    %2980 = vmatprep.subr.mxu0 0.0
    %2981 = vmatpush1.xpose.msra.mxu0 0.0
    %2982 = vmatprep.subr.mxu0 0.0
    %2983 = vmatpush1.xpose.msra.mxu0 0.0
    %2984 = vmatprep.subr.mxu0 0.0
    %2985 = vmatpush1.xpose.msra.mxu0 0.0
    %2986 = vmatprep.subr.mxu0 0.0
    %2987 = vmatpush1.xpose.msra.mxu0 0.0
    %2988 = vmatprep.subr.mxu0 0.0
    %2989 = vmatpush1.xpose.msra.mxu0 0.0
    %2990 = vmatprep.subr.mxu0 0.0
    %2991 = vmatpush1.xpose.msra.mxu0 0.0
    %2992 = vmatprep.subr.mxu0 0.0
    %2993 = vmatpush1.xpose.msra.mxu0 0.0
    %2994 = vmatprep.subr.mxu0 0.0
    %2995 = vmatpush1.xpose.msra.mxu0 0.0
    %2996 = vmatprep.subr.mxu0 0.0
    %2997 = vmatpush1.xpose.msra.mxu0 0.0
    %2998 = vmatprep.subr.mxu0 0.0
    %2999 = vmatpush1.xpose.msra.mxu0 0.0
    %3000 = vmatprep.subr.mxu0 0.0
    %3001 = vmatpush1.xpose.msra.mxu0 0.0
    %3002 = vmatprep.subr.mxu0 0.0
    %3003 = vmatpush1.xpose.msra.mxu0 0.0
    %3004 = vmatprep.subr.mxu0 0.0
    %3005 = vmatpush1.xpose.msra.mxu0 0.0
    %3006 = vmatprep.subr.mxu0 0.0
    %3007 = vmatpush1.xpose.msra.mxu0 0.0
    %3008 = vmatprep.subr.mxu0 0.0
    %3009 = vmatpush1.xpose.msra.mxu0 0.0
    %3010 = vmatprep.subr.mxu0 0.0
    %3011 = vmatpush1.xpose.msra.mxu0 0.0
    %3012 = vmatprep.subr.mxu0 0.0
    %3013 = vmatpush1.xpose.msra.mxu0 0.0
    %3014 = vmatprep.subr.mxu0 0.0
    %3015 = vmatpush1.xpose.msra.mxu0 0.0
    %3016 = vmatprep.subr.mxu0 0.0
    %3017 = vmatpush1.xpose.msra.mxu0 0.0
    %3018 = vmatprep.subr.mxu0 0.0
    %3019 = vmatpush1.xpose.msra.mxu0 0.0
    %3020 = vmatprep.subr.mxu0 0.0
    %3021 = vmatpush1.xpose.msra.mxu0 0.0
    %3022 = vmatprep.subr.mxu0 0.0
    %3023 = vmatpush1.xpose.msra.mxu0 0.0
    %3024 = vmatprep.subr.mxu0 0.0
    %3025 = vmatpush1.xpose.msra.mxu0 0.0
    %3026 = vmatprep.subr.mxu0 0.0
    %3027 = vmatpush1.xpose.msra.mxu0 0.0
    %3028 = vmatprep.subr.mxu0 0.0
    %3029 = vmatpush1.xpose.msra.mxu0 0.0
    %3030 = vmatprep.subr.mxu0 0.0
    %3031 = vmatpush1.xpose.msra.mxu0 0.0
    %3032 = vmatprep.subr.mxu0 0.0
    %3033 = vmatpush1.xpose.msra.mxu0 0.0
    %3034 = vmatprep.subr.mxu0 0.0
    %3035 = vmatpush1.xpose.msra.mxu0 0.0
    %3036 = vmatprep.subr.mxu0 0.0
    %3037 = vmatpush1.xpose.msra.mxu0 0.0
    %3038 = vmatprep.mubr.f32.mxu0 0.0
    %3039 = vmatmul.mubr.f32.gmra.mrb[0].mxu0 %v2969
    %v3040 = vpop.f32.mrb[0].mxu0
    %v3041 = vadd.f32 0.0, %v3040
    %v3042 = vpop.f32.mrb[0].mxu0
    %3043 = vdwg.mxu0
    %v3045 = vsel %vm1546, %v343, 0
    %v3048 = vsel %vm1546, %v793, 0
    %3050 = vmatprep.subr.mxu0 0.0
    %3051 = vmatpush1.xpose.msra.mxu0 %v3048
    %3052 = vmatprep.subr.mxu0 0.0
    %3053 = vmatpush1.xpose.msra.mxu0 0.0
    %3054 = vmatprep.subr.mxu0 0.0
    %3055 = vmatpush1.xpose.msra.mxu0 0.0
    %3056 = vmatprep.subr.mxu0 0.0
    %3057 = vmatpush1.xpose.msra.mxu0 0.0
    %3058 = vmatprep.subr.mxu0 0.0
    %3059 = vmatpush1.xpose.msra.mxu0 0.0
    %3060 = vmatprep.subr.mxu0 0.0
    %3061 = vmatpush1.xpose.msra.mxu0 0.0
    %3062 = vmatprep.subr.mxu0 0.0
    %3063 = vmatpush1.xpose.msra.mxu0 0.0
    %3064 = vmatprep.subr.mxu0 0.0
    %3065 = vmatpush1.xpose.msra.mxu0 0.0
    %3066 = vmatprep.subr.mxu0 0.0
    %3067 = vmatpush1.xpose.msra.mxu0 0.0
    %3068 = vmatprep.subr.mxu0 0.0
    %3069 = vmatpush1.xpose.msra.mxu0 0.0
    %3070 = vmatprep.subr.mxu0 0.0
    %3071 = vmatpush1.xpose.msra.mxu0 0.0
    %3072 = vmatprep.subr.mxu0 0.0
    %3073 = vmatpush1.xpose.msra.mxu0 0.0
    %3074 = vmatprep.subr.mxu0 0.0
    %3075 = vmatpush1.xpose.msra.mxu0 0.0
    %3076 = vmatprep.subr.mxu0 0.0
    %3077 = vmatpush1.xpose.msra.mxu0 0.0
    %3078 = vmatprep.subr.mxu0 0.0
    %3079 = vmatpush1.xpose.msra.mxu0 0.0
    %3080 = vmatprep.subr.mxu0 0.0
    %3081 = vmatpush1.xpose.msra.mxu0 0.0
    %3082 = vmatprep.subr.mxu0 0.0
    %3083 = vmatpush1.xpose.msra.mxu0 0.0
    %3084 = vmatprep.subr.mxu0 0.0
    %3085 = vmatpush1.xpose.msra.mxu0 0.0
    %3086 = vmatprep.subr.mxu0 0.0
    %3087 = vmatpush1.xpose.msra.mxu0 0.0
    %3088 = vmatprep.subr.mxu0 0.0
    %3089 = vmatpush1.xpose.msra.mxu0 0.0
    %3090 = vmatprep.subr.mxu0 0.0
    %3091 = vmatpush1.xpose.msra.mxu0 0.0
    %3092 = vmatprep.subr.mxu0 0.0
    %3093 = vmatpush1.xpose.msra.mxu0 0.0
    %3094 = vmatprep.subr.mxu0 0.0
    %3095 = vmatpush1.xpose.msra.mxu0 0.0
    %3096 = vmatprep.subr.mxu0 0.0
    %3097 = vmatpush1.xpose.msra.mxu0 0.0
    %3098 = vmatprep.subr.mxu0 0.0
    %3099 = vmatpush1.xpose.msra.mxu0 0.0
    %3100 = vmatprep.subr.mxu0 0.0
    %3101 = vmatpush1.xpose.msra.mxu0 0.0
    %3102 = vmatprep.subr.mxu0 0.0
    %3103 = vmatpush1.xpose.msra.mxu0 0.0
    %3104 = vmatprep.subr.mxu0 0.0
    %3105 = vmatpush1.xpose.msra.mxu0 0.0
    %3106 = vmatprep.subr.mxu0 0.0
    %3107 = vmatpush1.xpose.msra.mxu0 0.0
    %3108 = vmatprep.subr.mxu0 0.0
    %3109 = vmatpush1.xpose.msra.mxu0 0.0
    %3110 = vmatprep.subr.mxu0 0.0
    %3111 = vmatpush1.xpose.msra.mxu0 0.0
    %3112 = vmatprep.subr.mxu0 0.0
    %3113 = vmatpush1.xpose.msra.mxu0 0.0
    %3114 = vmatprep.mubr.f32.mxu0 0.0
    %3115 = vmatmul.mubr.f32.gmra.mrb[0].mxu0 %v3045
    %v3116 = vpop.f32.mrb[0].mxu0
    %v3117 = vadd.f32 0.0, %v3116
    %v3118 = vpop.f32.mrb[0].mxu0
    %3119 = vdwg.mxu0
    %v3121 = vsel %vm1546, %v418, 0
    %v3124 = vsel %vm1546, %v868, 0
    %3126 = vmatprep.subr.mxu0 0.0
    %3127 = vmatpush1.xpose.msra.mxu0 %v3124
    %3128 = vmatprep.subr.mxu0 0.0
    %3129 = vmatpush1.xpose.msra.mxu0 0.0
    %3130 = vmatprep.subr.mxu0 0.0
    %3131 = vmatpush1.xpose.msra.mxu0 0.0
    %3132 = vmatprep.subr.mxu0 0.0
    %3133 = vmatpush1.xpose.msra.mxu0 0.0
    %3134 = vmatprep.subr.mxu0 0.0
    %3135 = vmatpush1.xpose.msra.mxu0 0.0
    %3136 = vmatprep.subr.mxu0 0.0
    %3137 = vmatpush1.xpose.msra.mxu0 0.0
    %3138 = vmatprep.subr.mxu0 0.0
    %3139 = vmatpush1.xpose.msra.mxu0 0.0
    %3140 = vmatprep.subr.mxu0 0.0
    %3141 = vmatpush1.xpose.msra.mxu0 0.0
    %3142 = vmatprep.subr.mxu0 0.0
    %3143 = vmatpush1.xpose.msra.mxu0 0.0
    %3144 = vmatprep.subr.mxu0 0.0
    %3145 = vmatpush1.xpose.msra.mxu0 0.0
    %3146 = vmatprep.subr.mxu0 0.0
    %3147 = vmatpush1.xpose.msra.mxu0 0.0
    %3148 = vmatprep.subr.mxu0 0.0
    %3149 = vmatpush1.xpose.msra.mxu0 0.0
    %3150 = vmatprep.subr.mxu0 0.0
    %3151 = vmatpush1.xpose.msra.mxu0 0.0
    %3152 = vmatprep.subr.mxu0 0.0
    %3153 = vmatpush1.xpose.msra.mxu0 0.0
    %3154 = vmatprep.subr.mxu0 0.0
    %3155 = vmatpush1.xpose.msra.mxu0 0.0
    %3156 = vmatprep.subr.mxu0 0.0
    %3157 = vmatpush1.xpose.msra.mxu0 0.0
    %3158 = vmatprep.subr.mxu0 0.0
    %3159 = vmatpush1.xpose.msra.mxu0 0.0
    %3160 = vmatprep.subr.mxu0 0.0
    %3161 = vmatpush1.xpose.msra.mxu0 0.0
    %3162 = vmatprep.subr.mxu0 0.0
    %3163 = vmatpush1.xpose.msra.mxu0 0.0
    %3164 = vmatprep.subr.mxu0 0.0
    %3165 = vmatpush1.xpose.msra.mxu0 0.0
    %3166 = vmatprep.subr.mxu0 0.0
    %3167 = vmatpush1.xpose.msra.mxu0 0.0
    %3168 = vmatprep.subr.mxu0 0.0
    %3169 = vmatpush1.xpose.msra.mxu0 0.0
    %3170 = vmatprep.subr.mxu0 0.0
    %3171 = vmatpush1.xpose.msra.mxu0 0.0
    %3172 = vmatprep.subr.mxu0 0.0
    %3173 = vmatpush1.xpose.msra.mxu0 0.0
    %3174 = vmatprep.subr.mxu0 0.0
    %3175 = vmatpush1.xpose.msra.mxu0 0.0
    %3176 = vmatprep.subr.mxu0 0.0
    %3177 = vmatpush1.xpose.msra.mxu0 0.0
    %3178 = vmatprep.subr.mxu0 0.0
    %3179 = vmatpush1.xpose.msra.mxu0 0.0
    %3180 = vmatprep.subr.mxu0 0.0
    %3181 = vmatpush1.xpose.msra.mxu0 0.0
    %3182 = vmatprep.subr.mxu0 0.0
    %3183 = vmatpush1.xpose.msra.mxu0 0.0
    %3184 = vmatprep.subr.mxu0 0.0
    %3185 = vmatpush1.xpose.msra.mxu0 0.0
    %3186 = vmatprep.subr.mxu0 0.0
    %3187 = vmatpush1.xpose.msra.mxu0 0.0
    %3188 = vmatprep.subr.mxu0 0.0
    %3189 = vmatpush1.xpose.msra.mxu0 0.0
    %3190 = vmatprep.mubr.f32.mxu0 0.0
    %3191 = vmatmul.mubr.f32.gmra.mrb[0].mxu0 %v3121
    %v3192 = vpop.f32.mrb[0].mxu0
    %v3193 = vadd.f32 0.0, %v3192
    %v3194 = vpop.f32.mrb[0].mxu0
    %3195 = vdwg.mxu0
    %v3197 = vsel %vm1546, %v493, 0
    %v3200 = vsel %vm1546, %v943, 0
    %3202 = vmatprep.subr.mxu0 0.0
    %3203 = vmatpush1.xpose.msra.mxu0 %v3200
    %3204 = vmatprep.subr.mxu0 0.0
    %3205 = vmatpush1.xpose.msra.mxu0 0.0
    %3206 = vmatprep.subr.mxu0 0.0
    %3207 = vmatpush1.xpose.msra.mxu0 0.0
    %3208 = vmatprep.subr.mxu0 0.0
    %3209 = vmatpush1.xpose.msra.mxu0 0.0
    %3210 = vmatprep.subr.mxu0 0.0
    %3211 = vmatpush1.xpose.msra.mxu0 0.0
    %3212 = vmatprep.subr.mxu0 0.0
    %3213 = vmatpush1.xpose.msra.mxu0 0.0
    %3214 = vmatprep.subr.mxu0 0.0
    %3215 = vmatpush1.xpose.msra.mxu0 0.0
    %3216 = vmatprep.subr.mxu0 0.0
    %3217 = vmatpush1.xpose.msra.mxu0 0.0
    %3218 = vmatprep.subr.mxu0 0.0
    %3219 = vmatpush1.xpose.msra.mxu0 0.0
    %3220 = vmatprep.subr.mxu0 0.0
    %3221 = vmatpush1.xpose.msra.mxu0 0.0
    %3222 = vmatprep.subr.mxu0 0.0
    %3223 = vmatpush1.xpose.msra.mxu0 0.0
    %3224 = vmatprep.subr.mxu0 0.0
    %3225 = vmatpush1.xpose.msra.mxu0 0.0
    %3226 = vmatprep.subr.mxu0 0.0
    %3227 = vmatpush1.xpose.msra.mxu0 0.0
    %3228 = vmatprep.subr.mxu0 0.0
    %3229 = vmatpush1.xpose.msra.mxu0 0.0
    %3230 = vmatprep.subr.mxu0 0.0
    %3231 = vmatpush1.xpose.msra.mxu0 0.0
    %3232 = vmatprep.subr.mxu0 0.0
    %3233 = vmatpush1.xpose.msra.mxu0 0.0
    %3234 = vmatprep.subr.mxu0 0.0
    %3235 = vmatpush1.xpose.msra.mxu0 0.0
    %3236 = vmatprep.subr.mxu0 0.0
    %3237 = vmatpush1.xpose.msra.mxu0 0.0
    %3238 = vmatprep.subr.mxu0 0.0
    %3239 = vmatpush1.xpose.msra.mxu0 0.0
    %3240 = vmatprep.subr.mxu0 0.0
    %3241 = vmatpush1.xpose.msra.mxu0 0.0
    %3242 = vmatprep.subr.mxu0 0.0
    %3243 = vmatpush1.xpose.msra.mxu0 0.0
    %3244 = vmatprep.subr.mxu0 0.0
    %3245 = vmatpush1.xpose.msra.mxu0 0.0
    %3246 = vmatprep.subr.mxu0 0.0
    %3247 = vmatpush1.xpose.msra.mxu0 0.0
    %3248 = vmatprep.subr.mxu0 0.0
    %3249 = vmatpush1.xpose.msra.mxu0 0.0
    %3250 = vmatprep.subr.mxu0 0.0
    %3251 = vmatpush1.xpose.msra.mxu0 0.0
    %3252 = vmatprep.subr.mxu0 0.0
    %3253 = vmatpush1.xpose.msra.mxu0 0.0
    %3254 = vmatprep.subr.mxu0 0.0
    %3255 = vmatpush1.xpose.msra.mxu0 0.0
    %3256 = vmatprep.subr.mxu0 0.0
    %3257 = vmatpush1.xpose.msra.mxu0 0.0
    %3258 = vmatprep.subr.mxu0 0.0
    %3259 = vmatpush1.xpose.msra.mxu0 0.0
    %3260 = vmatprep.subr.mxu0 0.0
    %3261 = vmatpush1.xpose.msra.mxu0 0.0
    %3262 = vmatprep.subr.mxu0 0.0
    %3263 = vmatpush1.xpose.msra.mxu0 0.0
    %3264 = vmatprep.subr.mxu0 0.0
    %3265 = vmatpush1.xpose.msra.mxu0 0.0
    %3266 = vmatprep.mubr.f32.mxu0 0.0
    %3267 = vmatmul.mubr.f32.gmra.mrb[0].mxu0 %v3197
    %v3268 = vpop.f32.mrb[0].mxu0
    %v3269 = vadd.f32 0.0, %v3268
    %v3270 = vpop.f32.mrb[0].mxu0
    %3271 = vdwg.mxu0
    %v3273 = vsel %vm1546, %v568, 0
    %v3276 = vsel %vm1546, %v1018, 0
    %3278 = vmatprep.subr.mxu0 0.0
    %3279 = vmatpush1.xpose.msra.mxu0 %v3276
    %3280 = vmatprep.subr.mxu0 0.0
    %3281 = vmatpush1.xpose.msra.mxu0 0.0
    %3282 = vmatprep.subr.mxu0 0.0
    %3283 = vmatpush1.xpose.msra.mxu0 0.0
    %3284 = vmatprep.subr.mxu0 0.0
    %3285 = vmatpush1.xpose.msra.mxu0 0.0
    %3286 = vmatprep.subr.mxu0 0.0
    %3287 = vmatpush1.xpose.msra.mxu0 0.0
    %3288 = vmatprep.subr.mxu0 0.0
    %3289 = vmatpush1.xpose.msra.mxu0 0.0
    %3290 = vmatprep.subr.mxu0 0.0
    %3291 = vmatpush1.xpose.msra.mxu0 0.0
    %3292 = vmatprep.subr.mxu0 0.0
    %3293 = vmatpush1.xpose.msra.mxu0 0.0
    %3294 = vmatprep.subr.mxu0 0.0
    %3295 = vmatpush1.xpose.msra.mxu0 0.0
    %3296 = vmatprep.subr.mxu0 0.0
    %3297 = vmatpush1.xpose.msra.mxu0 0.0
    %3298 = vmatprep.subr.mxu0 0.0
    %3299 = vmatpush1.xpose.msra.mxu0 0.0
    %3300 = vmatprep.subr.mxu0 0.0
    %3301 = vmatpush1.xpose.msra.mxu0 0.0
    %3302 = vmatprep.subr.mxu0 0.0
    %3303 = vmatpush1.xpose.msra.mxu0 0.0
    %3304 = vmatprep.subr.mxu0 0.0
    %3305 = vmatpush1.xpose.msra.mxu0 0.0
    %3306 = vmatprep.subr.mxu0 0.0
    %3307 = vmatpush1.xpose.msra.mxu0 0.0
    %3308 = vmatprep.subr.mxu0 0.0
    %3309 = vmatpush1.xpose.msra.mxu0 0.0
    %3310 = vmatprep.subr.mxu0 0.0
    %3311 = vmatpush1.xpose.msra.mxu0 0.0
    %3312 = vmatprep.subr.mxu0 0.0
    %3313 = vmatpush1.xpose.msra.mxu0 0.0
    %3314 = vmatprep.subr.mxu0 0.0
    %3315 = vmatpush1.xpose.msra.mxu0 0.0
    %3316 = vmatprep.subr.mxu0 0.0
    %3317 = vmatpush1.xpose.msra.mxu0 0.0
    %3318 = vmatprep.subr.mxu0 0.0
    %3319 = vmatpush1.xpose.msra.mxu0 0.0
    %3320 = vmatprep.subr.mxu0 0.0
    %3321 = vmatpush1.xpose.msra.mxu0 0.0
    %3322 = vmatprep.subr.mxu0 0.0
    %3323 = vmatpush1.xpose.msra.mxu0 0.0
    %3324 = vmatprep.subr.mxu0 0.0
    %3325 = vmatpush1.xpose.msra.mxu0 0.0
    %3326 = vmatprep.subr.mxu0 0.0
    %3327 = vmatpush1.xpose.msra.mxu0 0.0
    %3328 = vmatprep.subr.mxu0 0.0
    %3329 = vmatpush1.xpose.msra.mxu0 0.0
    %3330 = vmatprep.subr.mxu0 0.0
    %3331 = vmatpush1.xpose.msra.mxu0 0.0
    %3332 = vmatprep.subr.mxu0 0.0
    %3333 = vmatpush1.xpose.msra.mxu0 0.0
    %3334 = vmatprep.subr.mxu0 0.0
    %3335 = vmatpush1.xpose.msra.mxu0 0.0
    %3336 = vmatprep.subr.mxu0 0.0
    %3337 = vmatpush1.xpose.msra.mxu0 0.0
    %3338 = vmatprep.subr.mxu0 0.0
    %3339 = vmatpush1.xpose.msra.mxu0 0.0
    %3340 = vmatprep.subr.mxu0 0.0
    %3341 = vmatpush1.xpose.msra.mxu0 0.0
    %3342 = vmatprep.mubr.f32.mxu0 0.0
    %3343 = vmatmul.mubr.f32.gmra.mrb[0].mxu0 %v3273
    %v3344 = vpop.f32.mrb[0].mxu0
    %v3345 = vadd.f32 0.0, %v3344
    %v3346 = vpop.f32.mrb[0].mxu0
    %3347 = vdwg.mxu0
    %v3349 = vsel %vm1546, %v643, 0
    %v3352 = vsel %vm1546, %v1093, 0
    %3354 = vmatprep.subr.mxu0 0.0
    %3355 = vmatpush1.xpose.msra.mxu0 %v3352
    %3356 = vmatprep.subr.mxu0 0.0
    %3357 = vmatpush1.xpose.msra.mxu0 0.0
    %3358 = vmatprep.subr.mxu0 0.0
    %3359 = vmatpush1.xpose.msra.mxu0 0.0
    %3360 = vmatprep.subr.mxu0 0.0
    %3361 = vmatpush1.xpose.msra.mxu0 0.0
    %3362 = vmatprep.subr.mxu0 0.0
    %3363 = vmatpush1.xpose.msra.mxu0 0.0
    %3364 = vmatprep.subr.mxu0 0.0
    %3365 = vmatpush1.xpose.msra.mxu0 0.0
    %3366 = vmatprep.subr.mxu0 0.0
    %3367 = vmatpush1.xpose.msra.mxu0 0.0
    %3368 = vmatprep.subr.mxu0 0.0
    %3369 = vmatpush1.xpose.msra.mxu0 0.0
    %3370 = vmatprep.subr.mxu0 0.0
    %3371 = vmatpush1.xpose.msra.mxu0 0.0
    %3372 = vmatprep.subr.mxu0 0.0
    %3373 = vmatpush1.xpose.msra.mxu0 0.0
    %3374 = vmatprep.subr.mxu0 0.0
    %3375 = vmatpush1.xpose.msra.mxu0 0.0
    %3376 = vmatprep.subr.mxu0 0.0
    %3377 = vmatpush1.xpose.msra.mxu0 0.0
    %3378 = vmatprep.subr.mxu0 0.0
    %3379 = vmatpush1.xpose.msra.mxu0 0.0
    %3380 = vmatprep.subr.mxu0 0.0
    %3381 = vmatpush1.xpose.msra.mxu0 0.0
    %3382 = vmatprep.subr.mxu0 0.0
    %3383 = vmatpush1.xpose.msra.mxu0 0.0
    %3384 = vmatprep.subr.mxu0 0.0
    %3385 = vmatpush1.xpose.msra.mxu0 0.0
    %3386 = vmatprep.subr.mxu0 0.0
    %3387 = vmatpush1.xpose.msra.mxu0 0.0
    %3388 = vmatprep.subr.mxu0 0.0
    %3389 = vmatpush1.xpose.msra.mxu0 0.0
    %3390 = vmatprep.subr.mxu0 0.0
    %3391 = vmatpush1.xpose.msra.mxu0 0.0
    %3392 = vmatprep.subr.mxu0 0.0
    %3393 = vmatpush1.xpose.msra.mxu0 0.0
    %3394 = vmatprep.subr.mxu0 0.0
    %3395 = vmatpush1.xpose.msra.mxu0 0.0
    %3396 = vmatprep.subr.mxu0 0.0
    %3397 = vmatpush1.xpose.msra.mxu0 0.0
    %3398 = vmatprep.subr.mxu0 0.0
    %3399 = vmatpush1.xpose.msra.mxu0 0.0
    %3400 = vmatprep.subr.mxu0 0.0
    %3401 = vmatpush1.xpose.msra.mxu0 0.0
    %3402 = vmatprep.subr.mxu0 0.0
    %3403 = vmatpush1.xpose.msra.mxu0 0.0
    %3404 = vmatprep.subr.mxu0 0.0
    %3405 = vmatpush1.xpose.msra.mxu0 0.0
    %3406 = vmatprep.subr.mxu0 0.0
    %3407 = vmatpush1.xpose.msra.mxu0 0.0
    %3408 = vmatprep.subr.mxu0 0.0
    %3409 = vmatpush1.xpose.msra.mxu0 0.0
    %3410 = vmatprep.subr.mxu0 0.0
    %3411 = vmatpush1.xpose.msra.mxu0 0.0
    %3412 = vmatprep.subr.mxu0 0.0
    %3413 = vmatpush1.xpose.msra.mxu0 0.0
    %3414 = vmatprep.subr.mxu0 0.0
    %3415 = vmatpush1.xpose.msra.mxu0 0.0
    %3416 = vmatprep.subr.mxu0 0.0
    %3417 = vmatpush1.xpose.msra.mxu0 0.0
    %3418 = vmatprep.mubr.f32.mxu0 0.0
    %3419 = vmatmul.mubr.f32.gmra.mrb[0].mxu0 %v3349
    %v3420 = vpop.f32.mrb[0].mxu0
    %v3421 = vadd.f32 0.0, %v3420
    %v3422 = vpop.f32.mrb[0].mxu0
    %3423 = vdwg.mxu0
    %v3424 = vmul.f32 %v3041, 0.35355338
    %v3425 = vmul.f32 %v3117, 0.35355338
    %v3426 = vmul.f32 %v3193, 0.35355338
    %v3427 = vmul.f32 %v3269, 0.35355338
    %v3428 = vmul.f32 %v3345, 0.35355338
    %v3429 = vmul.f32 %v3421, 0.35355338
    %v3430 = vadd.f32 %v3424, %v153
    %v3431 = vadd.f32 %v3425, %v153
    %v3432 = vadd.f32 %v3426, %v153
    %v3433 = vadd.f32 %v3427, %v153
    %v3434 = vadd.f32 %v3428, %v153
    %v3435 = vadd.f32 %v3429, %v153
    %v3436 = vsel %vm1546, %v3430, -inf
    %3437 = vmax.xlane.f32.xlu0 %v3436
    %v3438 = vpop.xlane.xlu0 %3437
    %v3439 = vsel %vm1546, %v3431, -inf
    %3440 = vmax.xlane.f32.xlu0 %v3439
    %v3441 = vpop.xlane.xlu0 %3440
    %v3442 = vsel %vm1546, %v3432, -inf
    %3443 = vmax.xlane.f32.xlu0 %v3442
    %v3444 = vpop.xlane.xlu0 %3443
    %v3445 = vsel %vm1546, %v3433, -inf
    %3446 = vmax.xlane.f32.xlu0 %v3445
    %v3447 = vpop.xlane.xlu0 %3446
    %v3448 = vsel %vm1546, %v3434, -inf
    %3449 = vmax.xlane.f32.xlu0 %v3448
    %v3450 = vpop.xlane.xlu0 %3449
    %v3451 = vsel %vm1546, %v3435, -inf
    %3452 = vmax.xlane.f32.xlu0 %v3451
    %v3453 = vpop.xlane.xlu0 %3452
    %v3454 = vsub.f32 %v3430, %v3438
    %v3455 = vsub.f32 %v3431, %v3441
    %v3456 = vsub.f32 %v3432, %v3444
    %v3457 = vsub.f32 %v3433, %v3447
    %v3458 = vsub.f32 %v3434, %v3450
    %v3459 = vsub.f32 %v3435, %v3453
    %v3460 = vmul.f32 %v3454, 1.442695
    %v3461 = vpow.pop %v3460
    %v3462 = vmul.f32 %v3455, 1.442695
    %v3463 = vpow.pop %v3462
    %v3464 = vmul.f32 %v3456, 1.442695
    %v3465 = vpow.pop %v3464
    %v3466 = vmul.f32 %v3457, 1.442695
    %v3467 = vpow.pop %v3466
    %v3468 = vmul.f32 %v3458, 1.442695
    %v3469 = vpow.pop %v3468
    %v3470 = vmul.f32 %v3459, 1.442695
    %v3471 = vpow.pop %v3470
    %v3472 = vsel %vm1546, %v3461, 0.0
    %3473 = vadd.xlane.f32.xlu0 %v3472
    %v3474 = vpop.xlane.xlu0 %3473
    %v3475 = vsel %vm1546, %v3463, 0.0
    %3476 = vadd.xlane.f32.xlu0 %v3475
    %v3477 = vpop.xlane.xlu0 %3476
    %v3478 = vsel %vm1546, %v3465, 0.0
    %3479 = vadd.xlane.f32.xlu0 %v3478
    %v3480 = vpop.xlane.xlu0 %3479
    %v3481 = vsel %vm1546, %v3467, 0.0
    %3482 = vadd.xlane.f32.xlu0 %v3481
    %v3483 = vpop.xlane.xlu0 %3482
    %v3484 = vsel %vm1546, %v3469, 0.0
    %3485 = vadd.xlane.f32.xlu0 %v3484
    %v3486 = vpop.xlane.xlu0 %3485
    %v3487 = vsel %vm1546, %v3471, 0.0
    %3488 = vadd.xlane.f32.xlu0 %v3487
    %v3489 = vpop.xlane.xlu0 %3488
    %v3490 = vrcp.pop %v3474
    %v3491 = vmul.f32 %v3461, %v3490
    %v3492 = vrcp.pop %v3477
    %v3493 = vmul.f32 %v3463, %v3492
    %v3494 = vrcp.pop %v3480
    %v3495 = vmul.f32 %v3465, %v3494
    %v3496 = vrcp.pop %v3483
    %v3497 = vmul.f32 %v3467, %v3496
    %v3498 = vrcp.pop %v3486
    %v3499 = vmul.f32 %v3469, %v3498
    %v3500 = vrcp.pop %v3489
    %v3501 = vmul.f32 %v3471, %v3500
    %v3503 = vsel %vm1546, %v3491, 0
    %3505 = vmatprep.subr.mxu0 0.0
    %3506 = vmatpush1.msra.mxu0 %v1168
    %3507 = vmatprep.subr.mxu0 0.0
    %3508 = vmatpush1.msra.mxu0 0.0
    %3509 = vmatprep.subr.mxu0 0.0
    %3510 = vmatpush1.msra.mxu0 0.0
    %3511 = vmatprep.subr.mxu0 0.0
    %3512 = vmatpush1.msra.mxu0 0.0
    %3513 = vmatprep.subr.mxu0 0.0
    %3514 = vmatpush1.msra.mxu0 0.0
    %3515 = vmatprep.subr.mxu0 0.0
    %3516 = vmatpush1.msra.mxu0 0.0
    %3517 = vmatprep.subr.mxu0 0.0
    %3518 = vmatpush1.msra.mxu0 0.0
    %3519 = vmatprep.subr.mxu0 0.0
    %3520 = vmatpush1.msra.mxu0 0.0
    %3521 = vmatprep.subr.mxu0 0.0
    %3522 = vmatpush1.msra.mxu0 0.0
    %3523 = vmatprep.subr.mxu0 0.0
    %3524 = vmatpush1.msra.mxu0 0.0
    %3525 = vmatprep.subr.mxu0 0.0
    %3526 = vmatpush1.msra.mxu0 0.0
    %3527 = vmatprep.subr.mxu0 0.0
    %3528 = vmatpush1.msra.mxu0 0.0
    %3529 = vmatprep.subr.mxu0 0.0
    %3530 = vmatpush1.msra.mxu0 0.0
    %3531 = vmatprep.subr.mxu0 0.0
    %3532 = vmatpush1.msra.mxu0 0.0
    %3533 = vmatprep.subr.mxu0 0.0
    %3534 = vmatpush1.msra.mxu0 0.0
    %3535 = vmatprep.subr.mxu0 0.0
    %3536 = vmatpush1.msra.mxu0 0.0
    %3537 = vmatprep.subr.mxu0 0.0
    %3538 = vmatpush1.msra.mxu0 0.0
    %3539 = vmatprep.subr.mxu0 0.0
    %3540 = vmatpush1.msra.mxu0 0.0
    %3541 = vmatprep.subr.mxu0 0.0
    %3542 = vmatpush1.msra.mxu0 0.0
    %3543 = vmatprep.subr.mxu0 0.0
    %3544 = vmatpush1.msra.mxu0 0.0
    %3545 = vmatprep.subr.mxu0 0.0
    %3546 = vmatpush1.msra.mxu0 0.0
    %3547 = vmatprep.subr.mxu0 0.0
    %3548 = vmatpush1.msra.mxu0 0.0
    %3549 = vmatprep.subr.mxu0 0.0
    %3550 = vmatpush1.msra.mxu0 0.0
    %3551 = vmatprep.subr.mxu0 0.0
    %3552 = vmatpush1.msra.mxu0 0.0
    %3553 = vmatprep.subr.mxu0 0.0
    %3554 = vmatpush1.msra.mxu0 0.0
    %3555 = vmatprep.subr.mxu0 0.0
    %3556 = vmatpush1.msra.mxu0 0.0
    %3557 = vmatprep.subr.mxu0 0.0
    %3558 = vmatpush1.msra.mxu0 0.0
    %3559 = vmatprep.subr.mxu0 0.0
    %3560 = vmatpush1.msra.mxu0 0.0
    %3561 = vmatprep.subr.mxu0 0.0
    %3562 = vmatpush1.msra.mxu0 0.0
    %3563 = vmatprep.subr.mxu0 0.0
    %3564 = vmatpush1.msra.mxu0 0.0
    %3565 = vmatprep.subr.mxu0 0.0
    %3566 = vmatpush1.msra.mxu0 0.0
    %3567 = vmatprep.subr.mxu0 0.0
    %3568 = vmatpush1.msra.mxu0 0.0
    %3569 = vmatprep.mubr.f32.mxu0 0.0
    %3570 = vmatmul.mubr.f32.gmra.mrb[0].mxu0 %v3503
    %v3571 = vpop.f32.mrb[0].mxu0
    %v3572 = vadd.f32 0.0, %v3571
    %v3573 = vpop.f32.mrb[0].mxu0
    %3574 = vdwg.mxu0
    %v3576 = vsel %vm1546, %v3493, 0
    %3578 = vmatprep.subr.mxu0 0.0
    %3579 = vmatpush1.msra.mxu0 %v1243
    %3580 = vmatprep.subr.mxu0 0.0
    %3581 = vmatpush1.msra.mxu0 0.0
    %3582 = vmatprep.subr.mxu0 0.0
    %3583 = vmatpush1.msra.mxu0 0.0
    %3584 = vmatprep.subr.mxu0 0.0
    %3585 = vmatpush1.msra.mxu0 0.0
    %3586 = vmatprep.subr.mxu0 0.0
    %3587 = vmatpush1.msra.mxu0 0.0
    %3588 = vmatprep.subr.mxu0 0.0
    %3589 = vmatpush1.msra.mxu0 0.0
    %3590 = vmatprep.subr.mxu0 0.0
    %3591 = vmatpush1.msra.mxu0 0.0
    %3592 = vmatprep.subr.mxu0 0.0
    %3593 = vmatpush1.msra.mxu0 0.0
    %3594 = vmatprep.subr.mxu0 0.0
    %3595 = vmatpush1.msra.mxu0 0.0
    %3596 = vmatprep.subr.mxu0 0.0
    %3597 = vmatpush1.msra.mxu0 0.0
    %3598 = vmatprep.subr.mxu0 0.0
    %3599 = vmatpush1.msra.mxu0 0.0
    %3600 = vmatprep.subr.mxu0 0.0
    %3601 = vmatpush1.msra.mxu0 0.0
    %3602 = vmatprep.subr.mxu0 0.0
    %3603 = vmatpush1.msra.mxu0 0.0
    %3604 = vmatprep.subr.mxu0 0.0
    %3605 = vmatpush1.msra.mxu0 0.0
    %3606 = vmatprep.subr.mxu0 0.0
    %3607 = vmatpush1.msra.mxu0 0.0
    %3608 = vmatprep.subr.mxu0 0.0
    %3609 = vmatpush1.msra.mxu0 0.0
    %3610 = vmatprep.subr.mxu0 0.0
    %3611 = vmatpush1.msra.mxu0 0.0
    %3612 = vmatprep.subr.mxu0 0.0
    %3613 = vmatpush1.msra.mxu0 0.0
    %3614 = vmatprep.subr.mxu0 0.0
    %3615 = vmatpush1.msra.mxu0 0.0
    %3616 = vmatprep.subr.mxu0 0.0
    %3617 = vmatpush1.msra.mxu0 0.0
    %3618 = vmatprep.subr.mxu0 0.0
    %3619 = vmatpush1.msra.mxu0 0.0
    %3620 = vmatprep.subr.mxu0 0.0
    %3621 = vmatpush1.msra.mxu0 0.0
    %3622 = vmatprep.subr.mxu0 0.0
    %3623 = vmatpush1.msra.mxu0 0.0
    %3624 = vmatprep.subr.mxu0 0.0
    %3625 = vmatpush1.msra.mxu0 0.0
    %3626 = vmatprep.subr.mxu0 0.0
    %3627 = vmatpush1.msra.mxu0 0.0
    %3628 = vmatprep.subr.mxu0 0.0
    %3629 = vmatpush1.msra.mxu0 0.0
    %3630 = vmatprep.subr.mxu0 0.0
    %3631 = vmatpush1.msra.mxu0 0.0
    %3632 = vmatprep.subr.mxu0 0.0
    %3633 = vmatpush1.msra.mxu0 0.0
    %3634 = vmatprep.subr.mxu0 0.0
    %3635 = vmatpush1.msra.mxu0 0.0
    %3636 = vmatprep.subr.mxu0 0.0
    %3637 = vmatpush1.msra.mxu0 0.0
    %3638 = vmatprep.subr.mxu0 0.0
    %3639 = vmatpush1.msra.mxu0 0.0
    %3640 = vmatprep.subr.mxu0 0.0
    %3641 = vmatpush1.msra.mxu0 0.0
    %3642 = vmatprep.mubr.f32.mxu0 0.0
    %3643 = vmatmul.mubr.f32.gmra.mrb[0].mxu0 %v3576
    %v3644 = vpop.f32.mrb[0].mxu0
    %v3645 = vadd.f32 0.0, %v3644
    %v3646 = vpop.f32.mrb[0].mxu0
    %3647 = vdwg.mxu0
    %v3649 = vsel %vm1546, %v3495, 0
    %3651 = vmatprep.subr.mxu0 0.0
    %3652 = vmatpush1.msra.mxu0 %v1318
    %3653 = vmatprep.subr.mxu0 0.0
    %3654 = vmatpush1.msra.mxu0 0.0
    %3655 = vmatprep.subr.mxu0 0.0
    %3656 = vmatpush1.msra.mxu0 0.0
    %3657 = vmatprep.subr.mxu0 0.0
    %3658 = vmatpush1.msra.mxu0 0.0
    %3659 = vmatprep.subr.mxu0 0.0
    %3660 = vmatpush1.msra.mxu0 0.0
    %3661 = vmatprep.subr.mxu0 0.0
    %3662 = vmatpush1.msra.mxu0 0.0
    %3663 = vmatprep.subr.mxu0 0.0
    %3664 = vmatpush1.msra.mxu0 0.0
    %3665 = vmatprep.subr.mxu0 0.0
    %3666 = vmatpush1.msra.mxu0 0.0
    %3667 = vmatprep.subr.mxu0 0.0
    %3668 = vmatpush1.msra.mxu0 0.0
    %3669 = vmatprep.subr.mxu0 0.0
    %3670 = vmatpush1.msra.mxu0 0.0
    %3671 = vmatprep.subr.mxu0 0.0
    %3672 = vmatpush1.msra.mxu0 0.0
    %3673 = vmatprep.subr.mxu0 0.0
    %3674 = vmatpush1.msra.mxu0 0.0
    %3675 = vmatprep.subr.mxu0 0.0
    %3676 = vmatpush1.msra.mxu0 0.0
    %3677 = vmatprep.subr.mxu0 0.0
    %3678 = vmatpush1.msra.mxu0 0.0
    %3679 = vmatprep.subr.mxu0 0.0
    %3680 = vmatpush1.msra.mxu0 0.0
    %3681 = vmatprep.subr.mxu0 0.0
    %3682 = vmatpush1.msra.mxu0 0.0
    %3683 = vmatprep.subr.mxu0 0.0
    %3684 = vmatpush1.msra.mxu0 0.0
    %3685 = vmatprep.subr.mxu0 0.0
    %3686 = vmatpush1.msra.mxu0 0.0
    %3687 = vmatprep.subr.mxu0 0.0
    %3688 = vmatpush1.msra.mxu0 0.0
    %3689 = vmatprep.subr.mxu0 0.0
    %3690 = vmatpush1.msra.mxu0 0.0
    %3691 = vmatprep.subr.mxu0 0.0
    %3692 = vmatpush1.msra.mxu0 0.0
    %3693 = vmatprep.subr.mxu0 0.0
    %3694 = vmatpush1.msra.mxu0 0.0
    %3695 = vmatprep.subr.mxu0 0.0
    %3696 = vmatpush1.msra.mxu0 0.0
    %3697 = vmatprep.subr.mxu0 0.0
    %3698 = vmatpush1.msra.mxu0 0.0
    %3699 = vmatprep.subr.mxu0 0.0
    %3700 = vmatpush1.msra.mxu0 0.0
    %3701 = vmatprep.subr.mxu0 0.0
    %3702 = vmatpush1.msra.mxu0 0.0
    %3703 = vmatprep.subr.mxu0 0.0
    %3704 = vmatpush1.msra.mxu0 0.0
    %3705 = vmatprep.subr.mxu0 0.0
    %3706 = vmatpush1.msra.mxu0 0.0
    %3707 = vmatprep.subr.mxu0 0.0
    %3708 = vmatpush1.msra.mxu0 0.0
    %3709 = vmatprep.subr.mxu0 0.0
    %3710 = vmatpush1.msra.mxu0 0.0
    %3711 = vmatprep.subr.mxu0 0.0
    %3712 = vmatpush1.msra.mxu0 0.0
    %3713 = vmatprep.subr.mxu0 0.0
    %3714 = vmatpush1.msra.mxu0 0.0
    %3715 = vmatprep.mubr.f32.mxu0 0.0
    %3716 = vmatmul.mubr.f32.gmra.mrb[0].mxu0 %v3649
    %v3717 = vpop.f32.mrb[0].mxu0
    %v3718 = vadd.f32 0.0, %v3717
    %v3719 = vpop.f32.mrb[0].mxu0
    %3720 = vdwg.mxu0
    %v3722 = vsel %vm1546, %v3497, 0
    %3724 = vmatprep.subr.mxu0 0.0
    %3725 = vmatpush1.msra.mxu0 %v1393
    %3726 = vmatprep.subr.mxu0 0.0
    %3727 = vmatpush1.msra.mxu0 0.0
    %3728 = vmatprep.subr.mxu0 0.0
    %3729 = vmatpush1.msra.mxu0 0.0
    %3730 = vmatprep.subr.mxu0 0.0
    %3731 = vmatpush1.msra.mxu0 0.0
    %3732 = vmatprep.subr.mxu0 0.0
    %3733 = vmatpush1.msra.mxu0 0.0
    %3734 = vmatprep.subr.mxu0 0.0
    %3735 = vmatpush1.msra.mxu0 0.0
    %3736 = vmatprep.subr.mxu0 0.0
    %3737 = vmatpush1.msra.mxu0 0.0
    %3738 = vmatprep.subr.mxu0 0.0
    %3739 = vmatpush1.msra.mxu0 0.0
    %3740 = vmatprep.subr.mxu0 0.0
    %3741 = vmatpush1.msra.mxu0 0.0
    %3742 = vmatprep.subr.mxu0 0.0
    %3743 = vmatpush1.msra.mxu0 0.0
    %3744 = vmatprep.subr.mxu0 0.0
    %3745 = vmatpush1.msra.mxu0 0.0
    %3746 = vmatprep.subr.mxu0 0.0
    %3747 = vmatpush1.msra.mxu0 0.0
    %3748 = vmatprep.subr.mxu0 0.0
    %3749 = vmatpush1.msra.mxu0 0.0
    %3750 = vmatprep.subr.mxu0 0.0
    %3751 = vmatpush1.msra.mxu0 0.0
    %3752 = vmatprep.subr.mxu0 0.0
    %3753 = vmatpush1.msra.mxu0 0.0
    %3754 = vmatprep.subr.mxu0 0.0
    %3755 = vmatpush1.msra.mxu0 0.0
    %3756 = vmatprep.subr.mxu0 0.0
    %3757 = vmatpush1.msra.mxu0 0.0
    %3758 = vmatprep.subr.mxu0 0.0
    %3759 = vmatpush1.msra.mxu0 0.0
    %3760 = vmatprep.subr.mxu0 0.0
    %3761 = vmatpush1.msra.mxu0 0.0
    %3762 = vmatprep.subr.mxu0 0.0
    %3763 = vmatpush1.msra.mxu0 0.0
    %3764 = vmatprep.subr.mxu0 0.0
    %3765 = vmatpush1.msra.mxu0 0.0
    %3766 = vmatprep.subr.mxu0 0.0
    %3767 = vmatpush1.msra.mxu0 0.0
    %3768 = vmatprep.subr.mxu0 0.0
    %3769 = vmatpush1.msra.mxu0 0.0
    %3770 = vmatprep.subr.mxu0 0.0
    %3771 = vmatpush1.msra.mxu0 0.0
    %3772 = vmatprep.subr.mxu0 0.0
    %3773 = vmatpush1.msra.mxu0 0.0
    %3774 = vmatprep.subr.mxu0 0.0
    %3775 = vmatpush1.msra.mxu0 0.0
    %3776 = vmatprep.subr.mxu0 0.0
    %3777 = vmatpush1.msra.mxu0 0.0
    %3778 = vmatprep.subr.mxu0 0.0
    %3779 = vmatpush1.msra.mxu0 0.0
    %3780 = vmatprep.subr.mxu0 0.0
    %3781 = vmatpush1.msra.mxu0 0.0
    %3782 = vmatprep.subr.mxu0 0.0
    %3783 = vmatpush1.msra.mxu0 0.0
    %3784 = vmatprep.subr.mxu0 0.0
    %3785 = vmatpush1.msra.mxu0 0.0
    %3786 = vmatprep.subr.mxu0 0.0
    %3787 = vmatpush1.msra.mxu0 0.0
    %3788 = vmatprep.mubr.f32.mxu0 0.0
    %3789 = vmatmul.mubr.f32.gmra.mrb[0].mxu0 %v3722
    %v3790 = vpop.f32.mrb[0].mxu0
    %v3791 = vadd.f32 0.0, %v3790
    %v3792 = vpop.f32.mrb[0].mxu0
    %3793 = vdwg.mxu0
    %v3795 = vsel %vm1546, %v3499, 0
    %3797 = vmatprep.subr.mxu0 0.0
    %3798 = vmatpush1.msra.mxu0 %v1468
    %3799 = vmatprep.subr.mxu0 0.0
    %3800 = vmatpush1.msra.mxu0 0.0
    %3801 = vmatprep.subr.mxu0 0.0
    %3802 = vmatpush1.msra.mxu0 0.0
    %3803 = vmatprep.subr.mxu0 0.0
    %3804 = vmatpush1.msra.mxu0 0.0
    %3805 = vmatprep.subr.mxu0 0.0
    %3806 = vmatpush1.msra.mxu0 0.0
    %3807 = vmatprep.subr.mxu0 0.0
    %3808 = vmatpush1.msra.mxu0 0.0
    %3809 = vmatprep.subr.mxu0 0.0
    %3810 = vmatpush1.msra.mxu0 0.0
    %3811 = vmatprep.subr.mxu0 0.0
    %3812 = vmatpush1.msra.mxu0 0.0
    %3813 = vmatprep.subr.mxu0 0.0
    %3814 = vmatpush1.msra.mxu0 0.0
    %3815 = vmatprep.subr.mxu0 0.0
    %3816 = vmatpush1.msra.mxu0 0.0
    %3817 = vmatprep.subr.mxu0 0.0
    %3818 = vmatpush1.msra.mxu0 0.0
    %3819 = vmatprep.subr.mxu0 0.0
    %3820 = vmatpush1.msra.mxu0 0.0
    %3821 = vmatprep.subr.mxu0 0.0
    %3822 = vmatpush1.msra.mxu0 0.0
    %3823 = vmatprep.subr.mxu0 0.0
    %3824 = vmatpush1.msra.mxu0 0.0
    %3825 = vmatprep.subr.mxu0 0.0
    %3826 = vmatpush1.msra.mxu0 0.0
    %3827 = vmatprep.subr.mxu0 0.0
    %3828 = vmatpush1.msra.mxu0 0.0
    %3829 = vmatprep.subr.mxu0 0.0
    %3830 = vmatpush1.msra.mxu0 0.0
    %3831 = vmatprep.subr.mxu0 0.0
    %3832 = vmatpush1.msra.mxu0 0.0
    %3833 = vmatprep.subr.mxu0 0.0
    %3834 = vmatpush1.msra.mxu0 0.0
    %3835 = vmatprep.subr.mxu0 0.0
    %3836 = vmatpush1.msra.mxu0 0.0
    %3837 = vmatprep.subr.mxu0 0.0
    %3838 = vmatpush1.msra.mxu0 0.0
    %3839 = vmatprep.subr.mxu0 0.0
    %3840 = vmatpush1.msra.mxu0 0.0
    %3841 = vmatprep.subr.mxu0 0.0
    %3842 = vmatpush1.msra.mxu0 0.0
    %3843 = vmatprep.subr.mxu0 0.0
    %3844 = vmatpush1.msra.mxu0 0.0
    %3845 = vmatprep.subr.mxu0 0.0
    %3846 = vmatpush1.msra.mxu0 0.0
    %3847 = vmatprep.subr.mxu0 0.0
    %3848 = vmatpush1.msra.mxu0 0.0
    %3849 = vmatprep.subr.mxu0 0.0
    %3850 = vmatpush1.msra.mxu0 0.0
    %3851 = vmatprep.subr.mxu0 0.0
    %3852 = vmatpush1.msra.mxu0 0.0
    %3853 = vmatprep.subr.mxu0 0.0
    %3854 = vmatpush1.msra.mxu0 0.0
    %3855 = vmatprep.subr.mxu0 0.0
    %3856 = vmatpush1.msra.mxu0 0.0
    %3857 = vmatprep.subr.mxu0 0.0
    %3858 = vmatpush1.msra.mxu0 0.0
    %3859 = vmatprep.subr.mxu0 0.0
    %3860 = vmatpush1.msra.mxu0 0.0
    %3861 = vmatprep.mubr.f32.mxu0 0.0
    %3862 = vmatmul.mubr.f32.gmra.mrb[0].mxu0 %v3795
    %v3863 = vpop.f32.mrb[0].mxu0
    %v3864 = vadd.f32 0.0, %v3863
    %v3865 = vpop.f32.mrb[0].mxu0
    %3866 = vdwg.mxu0
    %v3868 = vsel %vm1546, %v3501, 0
    %3870 = vmatprep.subr.mxu0 0.0
    %3871 = vmatpush1.msra.mxu0 %v1543
    %3872 = vmatprep.subr.mxu0 0.0
    %3873 = vmatpush1.msra.mxu0 0.0
    %3874 = vmatprep.subr.mxu0 0.0
    %3875 = vmatpush1.msra.mxu0 0.0
    %3876 = vmatprep.subr.mxu0 0.0
    %3877 = vmatpush1.msra.mxu0 0.0
    %3878 = vmatprep.subr.mxu0 0.0
    %3879 = vmatpush1.msra.mxu0 0.0
    %3880 = vmatprep.subr.mxu0 0.0
    %3881 = vmatpush1.msra.mxu0 0.0
    %3882 = vmatprep.subr.mxu0 0.0
    %3883 = vmatpush1.msra.mxu0 0.0
    %3884 = vmatprep.subr.mxu0 0.0
    %3885 = vmatpush1.msra.mxu0 0.0
    %3886 = vmatprep.subr.mxu0 0.0
    %3887 = vmatpush1.msra.mxu0 0.0
    %3888 = vmatprep.subr.mxu0 0.0
    %3889 = vmatpush1.msra.mxu0 0.0
    %3890 = vmatprep.subr.mxu0 0.0
    %3891 = vmatpush1.msra.mxu0 0.0
    %3892 = vmatprep.subr.mxu0 0.0
    %3893 = vmatpush1.msra.mxu0 0.0
    %3894 = vmatprep.subr.mxu0 0.0
    %3895 = vmatpush1.msra.mxu0 0.0
    %3896 = vmatprep.subr.mxu0 0.0
    %3897 = vmatpush1.msra.mxu0 0.0
    %3898 = vmatprep.subr.mxu0 0.0
    %3899 = vmatpush1.msra.mxu0 0.0
    %3900 = vmatprep.subr.mxu0 0.0
    %3901 = vmatpush1.msra.mxu0 0.0
    %3902 = vmatprep.subr.mxu0 0.0
    %3903 = vmatpush1.msra.mxu0 0.0
    %3904 = vmatprep.subr.mxu0 0.0
    %3905 = vmatpush1.msra.mxu0 0.0
    %3906 = vmatprep.subr.mxu0 0.0
    %3907 = vmatpush1.msra.mxu0 0.0
    %3908 = vmatprep.subr.mxu0 0.0
    %3909 = vmatpush1.msra.mxu0 0.0
    %3910 = vmatprep.subr.mxu0 0.0
    %3911 = vmatpush1.msra.mxu0 0.0
    %3912 = vmatprep.subr.mxu0 0.0
    %3913 = vmatpush1.msra.mxu0 0.0
    %3914 = vmatprep.subr.mxu0 0.0
    %3915 = vmatpush1.msra.mxu0 0.0
    %3916 = vmatprep.subr.mxu0 0.0
    %3917 = vmatpush1.msra.mxu0 0.0
    %3918 = vmatprep.subr.mxu0 0.0
    %3919 = vmatpush1.msra.mxu0 0.0
    %3920 = vmatprep.subr.mxu0 0.0
    %3921 = vmatpush1.msra.mxu0 0.0
    %3922 = vmatprep.subr.mxu0 0.0
    %3923 = vmatpush1.msra.mxu0 0.0
    %3924 = vmatprep.subr.mxu0 0.0
    %3925 = vmatpush1.msra.mxu0 0.0
    %3926 = vmatprep.subr.mxu0 0.0
    %3927 = vmatpush1.msra.mxu0 0.0
    %3928 = vmatprep.subr.mxu0 0.0
    %3929 = vmatpush1.msra.mxu0 0.0
    %3930 = vmatprep.subr.mxu0 0.0
    %3931 = vmatpush1.msra.mxu0 0.0
    %3932 = vmatprep.subr.mxu0 0.0
    %3933 = vmatpush1.msra.mxu0 0.0
    %3934 = vmatprep.mubr.f32.mxu0 0.0
    %3935 = vmatmul.mubr.f32.gmra.mrb[0].mxu0 %v3868
    %v3936 = vpop.f32.mrb[0].mxu0
    %v3937 = vadd.f32 0.0, %v3936
    %v3938 = vpop.f32.mrb[0].mxu0
    %3939 = vdwg.mxu0
    %v3941 = vsel %vm1546, %v3572, 0
    %3943 = vmatprep.subr.mxu0 0.0
    %3944 = vmatpush1.msra.mxu0 %v142
    %3945 = vmatprep.subr.mxu0 0.0
    %3946 = vmatpush1.msra.mxu0 0.0
    %3947 = vmatprep.subr.mxu0 0.0
    %3948 = vmatpush1.msra.mxu0 0.0
    %3949 = vmatprep.subr.mxu0 0.0
    %3950 = vmatpush1.msra.mxu0 0.0
    %3951 = vmatprep.subr.mxu0 0.0
    %3952 = vmatpush1.msra.mxu0 0.0
    %3953 = vmatprep.subr.mxu0 0.0
    %3954 = vmatpush1.msra.mxu0 0.0
    %3955 = vmatprep.subr.mxu0 0.0
    %3956 = vmatpush1.msra.mxu0 0.0
    %3957 = vmatprep.subr.mxu0 0.0
    %3958 = vmatpush1.msra.mxu0 0.0
    %3959 = vmatprep.subr.mxu0 0.0
    %3960 = vmatpush1.msra.mxu0 0.0
    %3961 = vmatprep.subr.mxu0 0.0
    %3962 = vmatpush1.msra.mxu0 0.0
    %3963 = vmatprep.subr.mxu0 0.0
    %3964 = vmatpush1.msra.mxu0 0.0
    %3965 = vmatprep.subr.mxu0 0.0
    %3966 = vmatpush1.msra.mxu0 0.0
    %3967 = vmatprep.subr.mxu0 0.0
    %3968 = vmatpush1.msra.mxu0 0.0
    %3969 = vmatprep.subr.mxu0 0.0
    %3970 = vmatpush1.msra.mxu0 0.0
    %3971 = vmatprep.subr.mxu0 0.0
    %3972 = vmatpush1.msra.mxu0 0.0
    %3973 = vmatprep.subr.mxu0 0.0
    %3974 = vmatpush1.msra.mxu0 0.0
    %3975 = vmatprep.subr.mxu0 0.0
    %3976 = vmatpush1.msra.mxu0 0.0
    %3977 = vmatprep.subr.mxu0 0.0
    %3978 = vmatpush1.msra.mxu0 0.0
    %3979 = vmatprep.subr.mxu0 0.0
    %3980 = vmatpush1.msra.mxu0 0.0
    %3981 = vmatprep.subr.mxu0 0.0
    %3982 = vmatpush1.msra.mxu0 0.0
    %3983 = vmatprep.subr.mxu0 0.0
    %3984 = vmatpush1.msra.mxu0 0.0
    %3985 = vmatprep.subr.mxu0 0.0
    %3986 = vmatpush1.msra.mxu0 0.0
    %3987 = vmatprep.subr.mxu0 0.0
    %3988 = vmatpush1.msra.mxu0 0.0
    %3989 = vmatprep.subr.mxu0 0.0
    %3990 = vmatpush1.msra.mxu0 0.0
    %3991 = vmatprep.subr.mxu0 0.0
    %3992 = vmatpush1.msra.mxu0 0.0
    %3993 = vmatprep.subr.mxu0 0.0
    %3994 = vmatpush1.msra.mxu0 0.0
    %3995 = vmatprep.subr.mxu0 0.0
    %3996 = vmatpush1.msra.mxu0 0.0
    %3997 = vmatprep.subr.mxu0 0.0
    %3998 = vmatpush1.msra.mxu0 0.0
    %3999 = vmatprep.subr.mxu0 0.0
    %4000 = vmatpush1.msra.mxu0 0.0
    %4001 = vmatprep.subr.mxu0 0.0
    %4002 = vmatpush1.msra.mxu0 0.0
    %4003 = vmatprep.subr.mxu0 0.0
    %4004 = vmatpush1.msra.mxu0 0.0
    %4005 = vmatprep.subr.mxu0 0.0
    %4006 = vmatpush1.msra.mxu0 0.0
    %4007 = vmatprep.mubr.f32.mxu0 0.0
    %4008 = vmatmul.mubr.f32.gmra.mrb[0].mxu0 %v3941
    %v4009 = vpop.f32.mrb[0].mxu0
    %v4010 = vadd.f32 0.0, %v4009
    %v4011 = vpop.f32.mrb[0].mxu0
    %4012 = vdwg.mxu0
    %v4014 = vsel %vm1546, %v3645, 0
    %4016 = vmatprep.subr.mxu0 0.0
    %4017 = vmatpush1.msra.mxu0 %v143
    %4018 = vmatprep.subr.mxu0 0.0
    %4019 = vmatpush1.msra.mxu0 0.0
    %4020 = vmatprep.subr.mxu0 0.0
    %4021 = vmatpush1.msra.mxu0 0.0
    %4022 = vmatprep.subr.mxu0 0.0
    %4023 = vmatpush1.msra.mxu0 0.0
    %4024 = vmatprep.subr.mxu0 0.0
    %4025 = vmatpush1.msra.mxu0 0.0
    %4026 = vmatprep.subr.mxu0 0.0
    %4027 = vmatpush1.msra.mxu0 0.0
    %4028 = vmatprep.subr.mxu0 0.0
    %4029 = vmatpush1.msra.mxu0 0.0
    %4030 = vmatprep.subr.mxu0 0.0
    %4031 = vmatpush1.msra.mxu0 0.0
    %4032 = vmatprep.subr.mxu0 0.0
    %4033 = vmatpush1.msra.mxu0 0.0
    %4034 = vmatprep.subr.mxu0 0.0
    %4035 = vmatpush1.msra.mxu0 0.0
    %4036 = vmatprep.subr.mxu0 0.0
    %4037 = vmatpush1.msra.mxu0 0.0
    %4038 = vmatprep.subr.mxu0 0.0
    %4039 = vmatpush1.msra.mxu0 0.0
    %4040 = vmatprep.subr.mxu0 0.0
    %4041 = vmatpush1.msra.mxu0 0.0
    %4042 = vmatprep.subr.mxu0 0.0
    %4043 = vmatpush1.msra.mxu0 0.0
    %4044 = vmatprep.subr.mxu0 0.0
    %4045 = vmatpush1.msra.mxu0 0.0
    %4046 = vmatprep.subr.mxu0 0.0
    %4047 = vmatpush1.msra.mxu0 0.0
    %4048 = vmatprep.subr.mxu0 0.0
    %4049 = vmatpush1.msra.mxu0 0.0
    %4050 = vmatprep.subr.mxu0 0.0
    %4051 = vmatpush1.msra.mxu0 0.0
    %4052 = vmatprep.subr.mxu0 0.0
    %4053 = vmatpush1.msra.mxu0 0.0
    %4054 = vmatprep.subr.mxu0 0.0
    %4055 = vmatpush1.msra.mxu0 0.0
    %4056 = vmatprep.subr.mxu0 0.0
    %4057 = vmatpush1.msra.mxu0 0.0
    %4058 = vmatprep.subr.mxu0 0.0
    %4059 = vmatpush1.msra.mxu0 0.0
    %4060 = vmatprep.subr.mxu0 0.0
    %4061 = vmatpush1.msra.mxu0 0.0
    %4062 = vmatprep.subr.mxu0 0.0
    %4063 = vmatpush1.msra.mxu0 0.0
    %4064 = vmatprep.subr.mxu0 0.0
    %4065 = vmatpush1.msra.mxu0 0.0
    %4066 = vmatprep.subr.mxu0 0.0
    %4067 = vmatpush1.msra.mxu0 0.0
    %4068 = vmatprep.subr.mxu0 0.0
    %4069 = vmatpush1.msra.mxu0 0.0
    %4070 = vmatprep.subr.mxu0 0.0
    %4071 = vmatpush1.msra.mxu0 0.0
    %4072 = vmatprep.subr.mxu0 0.0
    %4073 = vmatpush1.msra.mxu0 0.0
    %4074 = vmatprep.subr.mxu0 0.0
    %4075 = vmatpush1.msra.mxu0 0.0
    %4076 = vmatprep.subr.mxu0 0.0
    %4077 = vmatpush1.msra.mxu0 0.0
    %4078 = vmatprep.subr.mxu0 0.0
    %4079 = vmatpush1.msra.mxu0 0.0
    %4080 = vmatprep.mubr.f32.mxu0 0.0
    %4081 = vmatmul.mubr.f32.gmra.mrb[0].mxu0 %v4014
    %v4082 = vpop.f32.mrb[0].mxu0
    %v4083 = vadd.f32 0.0, %v4082
    %v4084 = vpop.f32.mrb[0].mxu0
    %4085 = vdwg.mxu0
    %v4087 = vsel %vm1546, %v3718, 0
    %4089 = vmatprep.subr.mxu0 0.0
    %4090 = vmatpush1.msra.mxu0 %v144
    %4091 = vmatprep.subr.mxu0 0.0
    %4092 = vmatpush1.msra.mxu0 0.0
    %4093 = vmatprep.subr.mxu0 0.0
    %4094 = vmatpush1.msra.mxu0 0.0
    %4095 = vmatprep.subr.mxu0 0.0
    %4096 = vmatpush1.msra.mxu0 0.0
    %4097 = vmatprep.subr.mxu0 0.0
    %4098 = vmatpush1.msra.mxu0 0.0
    %4099 = vmatprep.subr.mxu0 0.0
    %4100 = vmatpush1.msra.mxu0 0.0
    %4101 = vmatprep.subr.mxu0 0.0
    %4102 = vmatpush1.msra.mxu0 0.0
    %4103 = vmatprep.subr.mxu0 0.0
    %4104 = vmatpush1.msra.mxu0 0.0
    %4105 = vmatprep.subr.mxu0 0.0
    %4106 = vmatpush1.msra.mxu0 0.0
    %4107 = vmatprep.subr.mxu0 0.0
    %4108 = vmatpush1.msra.mxu0 0.0
    %4109 = vmatprep.subr.mxu0 0.0
    %4110 = vmatpush1.msra.mxu0 0.0
    %4111 = vmatprep.subr.mxu0 0.0
    %4112 = vmatpush1.msra.mxu0 0.0
    %4113 = vmatprep.subr.mxu0 0.0
    %4114 = vmatpush1.msra.mxu0 0.0
    %4115 = vmatprep.subr.mxu0 0.0
    %4116 = vmatpush1.msra.mxu0 0.0
    %4117 = vmatprep.subr.mxu0 0.0
    %4118 = vmatpush1.msra.mxu0 0.0
    %4119 = vmatprep.subr.mxu0 0.0
    %4120 = vmatpush1.msra.mxu0 0.0
    %4121 = vmatprep.subr.mxu0 0.0
    %4122 = vmatpush1.msra.mxu0 0.0
    %4123 = vmatprep.subr.mxu0 0.0
    %4124 = vmatpush1.msra.mxu0 0.0
    %4125 = vmatprep.subr.mxu0 0.0
    %4126 = vmatpush1.msra.mxu0 0.0
    %4127 = vmatprep.subr.mxu0 0.0
    %4128 = vmatpush1.msra.mxu0 0.0
    %4129 = vmatprep.subr.mxu0 0.0
    %4130 = vmatpush1.msra.mxu0 0.0
    %4131 = vmatprep.subr.mxu0 0.0
    %4132 = vmatpush1.msra.mxu0 0.0
    %4133 = vmatprep.subr.mxu0 0.0
    %4134 = vmatpush1.msra.mxu0 0.0
    %4135 = vmatprep.subr.mxu0 0.0
    %4136 = vmatpush1.msra.mxu0 0.0
    %4137 = vmatprep.subr.mxu0 0.0
    %4138 = vmatpush1.msra.mxu0 0.0
    %4139 = vmatprep.subr.mxu0 0.0
    %4140 = vmatpush1.msra.mxu0 0.0
    %4141 = vmatprep.subr.mxu0 0.0
    %4142 = vmatpush1.msra.mxu0 0.0
    %4143 = vmatprep.subr.mxu0 0.0
    %4144 = vmatpush1.msra.mxu0 0.0
    %4145 = vmatprep.subr.mxu0 0.0
    %4146 = vmatpush1.msra.mxu0 0.0
    %4147 = vmatprep.subr.mxu0 0.0
    %4148 = vmatpush1.msra.mxu0 0.0
    %4149 = vmatprep.subr.mxu0 0.0
    %4150 = vmatpush1.msra.mxu0 0.0
    %4151 = vmatprep.subr.mxu0 0.0
    %4152 = vmatpush1.msra.mxu0 0.0
    %4153 = vmatprep.mubr.f32.mxu0 0.0
    %4154 = vmatmul.mubr.f32.gmra.mrb[0].mxu0 %v4087
    %v4155 = vpop.f32.mrb[0].mxu0
    %v4156 = vadd.f32 0.0, %v4155
    %v4157 = vpop.f32.mrb[0].mxu0
    %4158 = vdwg.mxu0
    %v4160 = vsel %vm1546, %v3791, 0
    %4162 = vmatprep.subr.mxu0 0.0
    %4163 = vmatpush1.msra.mxu0 %v145
    %4164 = vmatprep.subr.mxu0 0.0
    %4165 = vmatpush1.msra.mxu0 0.0
    %4166 = vmatprep.subr.mxu0 0.0
    %4167 = vmatpush1.msra.mxu0 0.0
    %4168 = vmatprep.subr.mxu0 0.0
    %4169 = vmatpush1.msra.mxu0 0.0
    %4170 = vmatprep.subr.mxu0 0.0
    %4171 = vmatpush1.msra.mxu0 0.0
    %4172 = vmatprep.subr.mxu0 0.0
    %4173 = vmatpush1.msra.mxu0 0.0
    %4174 = vmatprep.subr.mxu0 0.0
    %4175 = vmatpush1.msra.mxu0 0.0
    %4176 = vmatprep.subr.mxu0 0.0
    %4177 = vmatpush1.msra.mxu0 0.0
    %4178 = vmatprep.subr.mxu0 0.0
    %4179 = vmatpush1.msra.mxu0 0.0
    %4180 = vmatprep.subr.mxu0 0.0
    %4181 = vmatpush1.msra.mxu0 0.0
    %4182 = vmatprep.subr.mxu0 0.0
    %4183 = vmatpush1.msra.mxu0 0.0
    %4184 = vmatprep.subr.mxu0 0.0
    %4185 = vmatpush1.msra.mxu0 0.0
    %4186 = vmatprep.subr.mxu0 0.0
    %4187 = vmatpush1.msra.mxu0 0.0
    %4188 = vmatprep.subr.mxu0 0.0
    %4189 = vmatpush1.msra.mxu0 0.0
    %4190 = vmatprep.subr.mxu0 0.0
    %4191 = vmatpush1.msra.mxu0 0.0
    %4192 = vmatprep.subr.mxu0 0.0
    %4193 = vmatpush1.msra.mxu0 0.0
    %4194 = vmatprep.subr.mxu0 0.0
    %4195 = vmatpush1.msra.mxu0 0.0
    %4196 = vmatprep.subr.mxu0 0.0
    %4197 = vmatpush1.msra.mxu0 0.0
    %4198 = vmatprep.subr.mxu0 0.0
    %4199 = vmatpush1.msra.mxu0 0.0
    %4200 = vmatprep.subr.mxu0 0.0
    %4201 = vmatpush1.msra.mxu0 0.0
    %4202 = vmatprep.subr.mxu0 0.0
    %4203 = vmatpush1.msra.mxu0 0.0
    %4204 = vmatprep.subr.mxu0 0.0
    %4205 = vmatpush1.msra.mxu0 0.0
    %4206 = vmatprep.subr.mxu0 0.0
    %4207 = vmatpush1.msra.mxu0 0.0
    %4208 = vmatprep.subr.mxu0 0.0
    %4209 = vmatpush1.msra.mxu0 0.0
    %4210 = vmatprep.subr.mxu0 0.0
    %4211 = vmatpush1.msra.mxu0 0.0
    %4212 = vmatprep.subr.mxu0 0.0
    %4213 = vmatpush1.msra.mxu0 0.0
    %4214 = vmatprep.subr.mxu0 0.0
    %4215 = vmatpush1.msra.mxu0 0.0
    %4216 = vmatprep.subr.mxu0 0.0
    %4217 = vmatpush1.msra.mxu0 0.0
    %4218 = vmatprep.subr.mxu0 0.0
    %4219 = vmatpush1.msra.mxu0 0.0
    %4220 = vmatprep.subr.mxu0 0.0
    %4221 = vmatpush1.msra.mxu0 0.0
    %4222 = vmatprep.subr.mxu0 0.0
    %4223 = vmatpush1.msra.mxu0 0.0
    %4224 = vmatprep.subr.mxu0 0.0
    %4225 = vmatpush1.msra.mxu0 0.0
    %4226 = vmatprep.mubr.f32.mxu0 0.0
    %4227 = vmatmul.mubr.f32.gmra.mrb[0].mxu0 %v4160
    %v4228 = vpop.f32.mrb[0].mxu0
    %v4229 = vadd.f32 0.0, %v4228
    %v4230 = vpop.f32.mrb[0].mxu0
    %4231 = vdwg.mxu0
    %v4233 = vsel %vm1546, %v3864, 0
    %4235 = vmatprep.subr.mxu0 0.0
    %4236 = vmatpush1.msra.mxu0 %v146
    %4237 = vmatprep.subr.mxu0 0.0
    %4238 = vmatpush1.msra.mxu0 0.0
    %4239 = vmatprep.subr.mxu0 0.0
    %4240 = vmatpush1.msra.mxu0 0.0
    %4241 = vmatprep.subr.mxu0 0.0
    %4242 = vmatpush1.msra.mxu0 0.0
    %4243 = vmatprep.subr.mxu0 0.0
    %4244 = vmatpush1.msra.mxu0 0.0
    %4245 = vmatprep.subr.mxu0 0.0
    %4246 = vmatpush1.msra.mxu0 0.0
    %4247 = vmatprep.subr.mxu0 0.0
    %4248 = vmatpush1.msra.mxu0 0.0
    %4249 = vmatprep.subr.mxu0 0.0
    %4250 = vmatpush1.msra.mxu0 0.0
    %4251 = vmatprep.subr.mxu0 0.0
    %4252 = vmatpush1.msra.mxu0 0.0
    %4253 = vmatprep.subr.mxu0 0.0
    %4254 = vmatpush1.msra.mxu0 0.0
    %4255 = vmatprep.subr.mxu0 0.0
    %4256 = vmatpush1.msra.mxu0 0.0
    %4257 = vmatprep.subr.mxu0 0.0
    %4258 = vmatpush1.msra.mxu0 0.0
    %4259 = vmatprep.subr.mxu0 0.0
    %4260 = vmatpush1.msra.mxu0 0.0
    %4261 = vmatprep.subr.mxu0 0.0
    %4262 = vmatpush1.msra.mxu0 0.0
    %4263 = vmatprep.subr.mxu0 0.0
    %4264 = vmatpush1.msra.mxu0 0.0
    %4265 = vmatprep.subr.mxu0 0.0
    %4266 = vmatpush1.msra.mxu0 0.0
    %4267 = vmatprep.subr.mxu0 0.0
    %4268 = vmatpush1.msra.mxu0 0.0
    %4269 = vmatprep.subr.mxu0 0.0
    %4270 = vmatpush1.msra.mxu0 0.0
    %4271 = vmatprep.subr.mxu0 0.0
    %4272 = vmatpush1.msra.mxu0 0.0
    %4273 = vmatprep.subr.mxu0 0.0
    %4274 = vmatpush1.msra.mxu0 0.0
    %4275 = vmatprep.subr.mxu0 0.0
    %4276 = vmatpush1.msra.mxu0 0.0
    %4277 = vmatprep.subr.mxu0 0.0
    %4278 = vmatpush1.msra.mxu0 0.0
    %4279 = vmatprep.subr.mxu0 0.0
    %4280 = vmatpush1.msra.mxu0 0.0
    %4281 = vmatprep.subr.mxu0 0.0
    %4282 = vmatpush1.msra.mxu0 0.0
    %4283 = vmatprep.subr.mxu0 0.0
    %4284 = vmatpush1.msra.mxu0 0.0
    %4285 = vmatprep.subr.mxu0 0.0
    %4286 = vmatpush1.msra.mxu0 0.0
    %4287 = vmatprep.subr.mxu0 0.0
    %4288 = vmatpush1.msra.mxu0 0.0
    %4289 = vmatprep.subr.mxu0 0.0
    %4290 = vmatpush1.msra.mxu0 0.0
    %4291 = vmatprep.subr.mxu0 0.0
    %4292 = vmatpush1.msra.mxu0 0.0
    %4293 = vmatprep.subr.mxu0 0.0
    %4294 = vmatpush1.msra.mxu0 0.0
    %4295 = vmatprep.subr.mxu0 0.0
    %4296 = vmatpush1.msra.mxu0 0.0
    %4297 = vmatprep.subr.mxu0 0.0
    %4298 = vmatpush1.msra.mxu0 0.0
    %4299 = vmatprep.mubr.f32.mxu0 0.0
    %4300 = vmatmul.mubr.f32.gmra.mrb[0].mxu0 %v4233
    %v4301 = vpop.f32.mrb[0].mxu0
    %v4302 = vadd.f32 0.0, %v4301
    %v4303 = vpop.f32.mrb[0].mxu0
    %4304 = vdwg.mxu0
    %v4306 = vsel %vm1546, %v3937, 0
    %4308 = vmatprep.subr.mxu0 0.0
    %4309 = vmatpush1.msra.mxu0 %v147
    %4310 = vmatprep.subr.mxu0 0.0
    %4311 = vmatpush1.msra.mxu0 0.0
    %4312 = vmatprep.subr.mxu0 0.0
    %4313 = vmatpush1.msra.mxu0 0.0
    %4314 = vmatprep.subr.mxu0 0.0
    %4315 = vmatpush1.msra.mxu0 0.0
    %4316 = vmatprep.subr.mxu0 0.0
    %4317 = vmatpush1.msra.mxu0 0.0
    %4318 = vmatprep.subr.mxu0 0.0
    %4319 = vmatpush1.msra.mxu0 0.0
    %4320 = vmatprep.subr.mxu0 0.0
    %4321 = vmatpush1.msra.mxu0 0.0
    %4322 = vmatprep.subr.mxu0 0.0
    %4323 = vmatpush1.msra.mxu0 0.0
    %4324 = vmatprep.subr.mxu0 0.0
    %4325 = vmatpush1.msra.mxu0 0.0
    %4326 = vmatprep.subr.mxu0 0.0
    %4327 = vmatpush1.msra.mxu0 0.0
    %4328 = vmatprep.subr.mxu0 0.0
    %4329 = vmatpush1.msra.mxu0 0.0
    %4330 = vmatprep.subr.mxu0 0.0
    %4331 = vmatpush1.msra.mxu0 0.0
    %4332 = vmatprep.subr.mxu0 0.0
    %4333 = vmatpush1.msra.mxu0 0.0
    %4334 = vmatprep.subr.mxu0 0.0
    %4335 = vmatpush1.msra.mxu0 0.0
    %4336 = vmatprep.subr.mxu0 0.0
    %4337 = vmatpush1.msra.mxu0 0.0
    %4338 = vmatprep.subr.mxu0 0.0
    %4339 = vmatpush1.msra.mxu0 0.0
    %4340 = vmatprep.subr.mxu0 0.0
    %4341 = vmatpush1.msra.mxu0 0.0
    %4342 = vmatprep.subr.mxu0 0.0
    %4343 = vmatpush1.msra.mxu0 0.0
    %4344 = vmatprep.subr.mxu0 0.0
    %4345 = vmatpush1.msra.mxu0 0.0
    %4346 = vmatprep.subr.mxu0 0.0
    %4347 = vmatpush1.msra.mxu0 0.0
    %4348 = vmatprep.subr.mxu0 0.0
    %4349 = vmatpush1.msra.mxu0 0.0
    %4350 = vmatprep.subr.mxu0 0.0
    %4351 = vmatpush1.msra.mxu0 0.0
    %4352 = vmatprep.subr.mxu0 0.0
    %4353 = vmatpush1.msra.mxu0 0.0
    %4354 = vmatprep.subr.mxu0 0.0
    %4355 = vmatpush1.msra.mxu0 0.0
    %4356 = vmatprep.subr.mxu0 0.0
    %4357 = vmatpush1.msra.mxu0 0.0
    %4358 = vmatprep.subr.mxu0 0.0
    %4359 = vmatpush1.msra.mxu0 0.0
    %4360 = vmatprep.subr.mxu0 0.0
    %4361 = vmatpush1.msra.mxu0 0.0
    %4362 = vmatprep.subr.mxu0 0.0
    %4363 = vmatpush1.msra.mxu0 0.0
    %4364 = vmatprep.subr.mxu0 0.0
    %4365 = vmatpush1.msra.mxu0 0.0
    %4366 = vmatprep.subr.mxu0 0.0
    %4367 = vmatpush1.msra.mxu0 0.0
    %4368 = vmatprep.subr.mxu0 0.0
    %4369 = vmatpush1.msra.mxu0 0.0
    %4370 = vmatprep.subr.mxu0 0.0
    %4371 = vmatpush1.msra.mxu0 0.0
    %4372 = vmatprep.mubr.f32.mxu0 0.0
    %4373 = vmatmul.mubr.f32.gmra.mrb[0].mxu0 %v4306
    %v4374 = vpop.f32.mrb[0].mxu0
    %v4375 = vadd.f32 0.0, %v4374
    %v4376 = vpop.f32.mrb[0].mxu0
    %4377 = vdwg.mxu0
    %v4378 = vsel %vm154, %v4010, 0.0
    %v4379 = vsel %vm154, %v4083, 0.0
    %v4380 = vadd.f32 %v4378, %v4379
    %v4381 = vsel %vm154, %v4156, 0.0
    %v4382 = vadd.f32 %v4380, %v4381
    %v4383 = vsel %vm154, %v4229, 0.0
    %v4384 = vadd.f32 %v4382, %v4383
    %v4385 = vsel %vm154, %v4302, 0.0
    %v4386 = vadd.f32 %v4384, %v4385
    %v4387 = vsel %vm154, %v4375, 0.0
    %v4388 = vadd.f32 %v4386, %v4387
    %v4389 = vadd.f32 %v30, %v2967
    %v4390 = vadd.f32 %v31, %v4388
    %v4391 = vld [vmem:[%s5] sm:$0x1]
    %v4393 = vlaneseq
    %v4394 = vshrl.u32 %v4393, 7
    %v4395 = vsub.s32 0, %v4394
    %v4396 = vrot.slane %v4391, %v4395
    %v4398 = vadd.f32 %v4389, %v4396
    %v4399 = vadd.f32 %v4390, %v4396
    %v4400 = vsel %vm154, %v4398, 0.0
    %4401 = vadd.xlane.f32.xlu0 %v4400
    %v4402 = vpop.xlane.xlu0 %4401
    %v4403 = vsel %vm154, %v4399, 0.0
    %4404 = vadd.xlane.f32.xlu0 %v4403
    %v4405 = vpop.xlane.xlu0 %4404
    %v4406 = vmul.f32 %v4402, %v161
    %v4407 = vmul.f32 %v4405, %v161
    %v4408 = vsub.f32 %v4398, %v4406
    %v4409 = vsub.f32 %v4399, %v4407
    %v4410 = vmul.f32 %v4408, %v4408
    %v4411 = vmul.f32 %v4409, %v4409
    %v4412 = vsel %vm154, %v4410, 0.0
    %4413 = vadd.xlane.f32.xlu0 %v4412
    %v4414 = vpop.xlane.xlu0 %4413
    %v4415 = vsel %vm154, %v4411, 0.0
    %4416 = vadd.xlane.f32.xlu0 %v4415
    %v4417 = vpop.xlane.xlu0 %4416
    %v4418 = vmul.f32 %v4414, %v161
    %v4419 = vmul.f32 %v4417, %v161
    %v4420 = vadd.f32 %v4418, 1e-05
    %v4421 = vadd.f32 %v4419, 1e-05
    %v4422 = vrsqrt.pop %v4420
    %v4423 = vrsqrt.pop %v4421
    %v4424 = vmul.f32 %v4408, %v4422
    %v4425 = vmul.f32 %v4409, %v4423
    %v4427 = vlaneseq
    %v4428 = vshrl.u32 %v4427, 7
    %v4429 = vsub.s32 0, %v4428
    %v4430 = vrot.slane %v33, %v4429
    %v4432 = vmul.f32 %v4424, %v4430
    %v4433 = vmul.f32 %v4425, %v4430
    %v4434 = vld [vmem:[%s6] sm:$0xff]
    %v4435 = vld [vmem:[%s6 + $0x8] sm:$0xff]
    %v4436 = vld [vmem:[%s6 + $0x10] sm:$0xff]
    %v4437 = vld [vmem:[%s6 + $0x18] sm:$0xff]
    %v4438 = vld [vmem:[%s6 + $0x20] sm:$0xff]
    %v4439 = vld [vmem:[%s6 + $0x28] sm:$0xff]
    %v4440 = vld [vmem:[%s6 + $0x30] sm:$0xff]
    %v4441 = vld [vmem:[%s6 + $0x38] sm:$0xff]
    %v4442 = vld [vmem:[%s6 + $0x40] sm:$0xff]
    %v4443 = vld [vmem:[%s6 + $0x48] sm:$0xff]
    %v4444 = vld [vmem:[%s6 + $0x50] sm:$0xff]
    %v4445 = vld [vmem:[%s6 + $0x58] sm:$0xff]
    %v4447 = vsel %vm154, %v4432, 0
    %v4450 = vsel %vm154, %v4433, 0
    %4452 = vmatprep.subr.mxu0 %v4435
    %4453 = vmatpush1.msra.mxu0 %v4434
    %4454 = vmatprep.subr.mxu0 %v4437
    %4455 = vmatpush1.msra.mxu0 %v4436
    %4456 = vmatprep.subr.mxu0 %v4439
    %4457 = vmatpush1.msra.mxu0 %v4438
    %4458 = vmatprep.subr.mxu0 %v4441
    %4459 = vmatpush1.msra.mxu0 %v4440
    %4460 = vmatprep.subr.mxu0 %v4443
    %4461 = vmatpush1.msra.mxu0 %v4442
    %4462 = vmatprep.subr.mxu0 %v4445
    %4463 = vmatpush1.msra.mxu0 %v4444
    %4464 = vmatprep.subr.mxu0 0.0
    %4465 = vmatpush1.msra.mxu0 0.0
    %4466 = vmatprep.subr.mxu0 0.0
    %4467 = vmatpush1.msra.mxu0 0.0
    %4468 = vmatprep.subr.mxu0 0.0
    %4469 = vmatpush1.msra.mxu0 0.0
    %4470 = vmatprep.subr.mxu0 0.0
    %4471 = vmatpush1.msra.mxu0 0.0
    %4472 = vmatprep.subr.mxu0 0.0
    %4473 = vmatpush1.msra.mxu0 0.0
    %4474 = vmatprep.subr.mxu0 0.0
    %4475 = vmatpush1.msra.mxu0 0.0
    %4476 = vmatprep.subr.mxu0 0.0
    %4477 = vmatpush1.msra.mxu0 0.0
    %4478 = vmatprep.subr.mxu0 0.0
    %4479 = vmatpush1.msra.mxu0 0.0
    %4480 = vmatprep.subr.mxu0 0.0
    %4481 = vmatpush1.msra.mxu0 0.0
    %4482 = vmatprep.subr.mxu0 0.0
    %4483 = vmatpush1.msra.mxu0 0.0
    %4484 = vmatprep.subr.mxu0 0.0
    %4485 = vmatpush1.msra.mxu0 0.0
    %4486 = vmatprep.subr.mxu0 0.0
    %4487 = vmatpush1.msra.mxu0 0.0
    %4488 = vmatprep.subr.mxu0 0.0
    %4489 = vmatpush1.msra.mxu0 0.0
    %4490 = vmatprep.subr.mxu0 0.0
    %4491 = vmatpush1.msra.mxu0 0.0
    %4492 = vmatprep.subr.mxu0 0.0
    %4493 = vmatpush1.msra.mxu0 0.0
    %4494 = vmatprep.subr.mxu0 0.0
    %4495 = vmatpush1.msra.mxu0 0.0
    %4496 = vmatprep.subr.mxu0 0.0
    %4497 = vmatpush1.msra.mxu0 0.0
    %4498 = vmatprep.subr.mxu0 0.0
    %4499 = vmatpush1.msra.mxu0 0.0
    %4500 = vmatprep.subr.mxu0 0.0
    %4501 = vmatpush1.msra.mxu0 0.0
    %4502 = vmatprep.subr.mxu0 0.0
    %4503 = vmatpush1.msra.mxu0 0.0
    %4504 = vmatprep.subr.mxu0 0.0
    %4505 = vmatpush1.msra.mxu0 0.0
    %4506 = vmatprep.subr.mxu0 0.0
    %4507 = vmatpush1.msra.mxu0 0.0
    %4508 = vmatprep.subr.mxu0 0.0
    %4509 = vmatpush1.msra.mxu0 0.0
    %4510 = vmatprep.subr.mxu0 0.0
    %4511 = vmatpush1.msra.mxu0 0.0
    %4512 = vmatprep.subr.mxu0 0.0
    %4513 = vmatpush1.msra.mxu0 0.0
    %4514 = vmatprep.subr.mxu0 0.0
    %4515 = vmatpush1.msra.mxu0 0.0
    %4516 = vmatprep.mubr.f32.mxu0 0.0
    %4517 = vmatmul.mubr.f32.gmra.mrb[0].mxu0 %v4447
    %v4518 = vpop.f32.mrb[0].mxu0
    %v4519 = vadd.f32 0.0, %v4518
    %v4520 = vpop.f32.mrb[0].mxu0
    %v4521 = vadd.f32 0.0, %v4520
    %4522 = vmatprep.mubr.f32.mxu0 0.0
    %4523 = vmatmul.mubr.f32.gmra.mrb[0].mxu0 %v4450
    %v4524 = vpop.f32.mrb[0].mxu0
    %v4525 = vadd.f32 0.0, %v4524
    %v4526 = vpop.f32.mrb[0].mxu0
    %v4527 = vadd.f32 0.0, %v4526
    %4528 = vdwg.mxu0
    %v4529 = vmul.f32 %v4519, 0.5
    %v4530 = vmul.f32 %v4521, 0.5
    %v4531 = vmul.f32 %v4525, 0.5
    %v4532 = vmul.f32 %v4527, 0.5
    %v4533 = vmul.f32 %v4519, 0.70710677
    %v4534 = vmul.f32 %v4521, 0.70710677
    %v4535 = vmul.f32 %v4525, 0.70710677
    %v4536 = vmul.f32 %v4527, 0.70710677
    %v4537 = verf.f32.pop %v4533
    %v4538 = verf.f32.pop %v4534
    %v4539 = verf.f32.pop %v4535
    %v4540 = verf.f32.pop %v4536
    %v4541 = vadd.f32 %v4537, 1.0
    %v4542 = vadd.f32 %v4538, 1.0
    %v4543 = vadd.f32 %v4539, 1.0
    %v4544 = vadd.f32 %v4540, 1.0
    %v4545 = vmul.f32 %v4529, %v4541
    %v4546 = vmul.f32 %v4530, %v4542
    %v4547 = vmul.f32 %v4531, %v4543
    %v4548 = vmul.f32 %v4532, %v4544
    %v4549 = vld [vmem:[%s7] sm:$0xff]
    %v4550 = vld [vmem:[%s7 + $0x8] sm:$0xff]
    %v4551 = vld [vmem:[%s7 + $0x10] sm:$0xff]
    %v4552 = vld [vmem:[%s7 + $0x18] sm:$0xff]
    %v4553 = vld [vmem:[%s7 + $0x20] sm:$0xff]
    %v4554 = vld [vmem:[%s7 + $0x28] sm:$0xff]
    %v4555 = vld [vmem:[%s7 + $0x30] sm:$0xff]
    %v4556 = vld [vmem:[%s7 + $0x38] sm:$0xff]
    %v4557 = vld [vmem:[%s7 + $0x40] sm:$0xff]
    %v4558 = vld [vmem:[%s7 + $0x48] sm:$0xff]
    %v4559 = vld [vmem:[%s7 + $0x50] sm:$0xff]
    %v4560 = vld [vmem:[%s7 + $0x58] sm:$0xff]
    %v4561 = vld [vmem:[%s7 + $0x60] sm:$0xff]
    %v4562 = vld [vmem:[%s7 + $0x68] sm:$0xff]
    %v4563 = vld [vmem:[%s7 + $0x70] sm:$0xff]
    %v4564 = vld [vmem:[%s7 + $0x78] sm:$0xff]
    %v4565 = vld [vmem:[%s7 + $0x80] sm:$0xff]
    %v4566 = vld [vmem:[%s7 + $0x88] sm:$0xff]
    %v4567 = vld [vmem:[%s7 + $0x90] sm:$0xff]
    %v4568 = vld [vmem:[%s7 + $0x98] sm:$0xff]
    %v4569 = vld [vmem:[%s7 + $0xa0] sm:$0xff]
    %v4570 = vld [vmem:[%s7 + $0xa8] sm:$0xff]
    %v4571 = vld [vmem:[%s7 + $0xb0] sm:$0xff]
    %v4572 = vld [vmem:[%s7 + $0xb8] sm:$0xff]
    %vm4573 = vcmask 523264
    %v4575 = vsel %vm4573, %v4546, 0
    %v4578 = vsel %vm4573, %v4548, 0
    %4580 = vmatprep.subr.mxu0 0.0
    %4581 = vmatpush1.msra.mxu0 %v4549
    %4582 = vmatprep.subr.mxu0 0.0
    %4583 = vmatpush1.msra.mxu0 %v4550
    %4584 = vmatprep.subr.mxu0 0.0
    %4585 = vmatpush1.msra.mxu0 %v4551
    %4586 = vmatprep.subr.mxu0 0.0
    %4587 = vmatpush1.msra.mxu0 %v4552
    %4588 = vmatprep.subr.mxu0 0.0
    %4589 = vmatpush1.msra.mxu0 %v4553
    %4590 = vmatprep.subr.mxu0 0.0
    %4591 = vmatpush1.msra.mxu0 %v4554
    %4592 = vmatprep.subr.mxu0 0.0
    %4593 = vmatpush1.msra.mxu0 %v4555
    %4594 = vmatprep.subr.mxu0 0.0
    %4595 = vmatpush1.msra.mxu0 %v4556
    %4596 = vmatprep.subr.mxu0 0.0
    %4597 = vmatpush1.msra.mxu0 %v4557
    %4598 = vmatprep.subr.mxu0 0.0
    %4599 = vmatpush1.msra.mxu0 %v4558
    %4600 = vmatprep.subr.mxu0 0.0
    %4601 = vmatpush1.msra.mxu0 %v4559
    %4602 = vmatprep.subr.mxu0 0.0
    %4603 = vmatpush1.msra.mxu0 %v4560
    %4604 = vmatprep.subr.mxu0 0.0
    %4605 = vmatpush1.msra.mxu0 %v4561
    %4606 = vmatprep.subr.mxu0 0.0
    %4607 = vmatpush1.msra.mxu0 %v4562
    %4608 = vmatprep.subr.mxu0 0.0
    %4609 = vmatpush1.msra.mxu0 %v4563
    %4610 = vmatprep.subr.mxu0 0.0
    %4611 = vmatpush1.msra.mxu0 %v4564
    %4612 = vmatprep.subr.mxu0 0.0
    %4613 = vmatpush1.msra.mxu0 %v4565
    %4614 = vmatprep.subr.mxu0 0.0
    %4615 = vmatpush1.msra.mxu0 %v4566
    %4616 = vmatprep.subr.mxu0 0.0
    %4617 = vmatpush1.msra.mxu0 %v4567
    %4618 = vmatprep.subr.mxu0 0.0
    %4619 = vmatpush1.msra.mxu0 %v4568
    %4620 = vmatprep.subr.mxu0 0.0
    %4621 = vmatpush1.msra.mxu0 %v4569
    %4622 = vmatprep.subr.mxu0 0.0
    %4623 = vmatpush1.msra.mxu0 %v4570
    %4624 = vmatprep.subr.mxu0 0.0
    %4625 = vmatpush1.msra.mxu0 %v4571
    %4626 = vmatprep.subr.mxu0 0.0
    %4627 = vmatpush1.msra.mxu0 %v4572
    %4628 = vmatprep.subr.mxu0 0.0
    %4629 = vmatpush1.msra.mxu0 0.0
    %4630 = vmatprep.subr.mxu0 0.0
    %4631 = vmatpush1.msra.mxu0 0.0
    %4632 = vmatprep.subr.mxu0 0.0
    %4633 = vmatpush1.msra.mxu0 0.0
    %4634 = vmatprep.subr.mxu0 0.0
    %4635 = vmatpush1.msra.mxu0 0.0
    %4636 = vmatprep.subr.mxu0 0.0
    %4637 = vmatpush1.msra.mxu0 0.0
    %4638 = vmatprep.subr.mxu0 0.0
    %4639 = vmatpush1.msra.mxu0 0.0
    %4640 = vmatprep.subr.mxu0 0.0
    %4641 = vmatpush1.msra.mxu0 0.0
    %4642 = vmatprep.subr.mxu0 0.0
    %4643 = vmatpush1.msra.mxu0 0.0
    %4644 = vmatprep.mubr.f32.mxu0 %v4575
    %4645 = vmatmul.mubr.f32.gmra.mrb[0].mxu0 %v4545
    %v4646 = vpop.f32.mrb[0].mxu0
    %v4647 = vadd.f32 0.0, %v4646
    %v4648 = vpop.f32.mrb[0].mxu0
    %4649 = vmatprep.mubr.f32.mxu0 %v4578
    %4650 = vmatmul.mubr.f32.gmra.mrb[0].mxu0 %v4547
    %v4651 = vpop.f32.mrb[0].mxu0
    %v4652 = vadd.f32 0.0, %v4651
    %v4653 = vpop.f32.mrb[0].mxu0
    %4654 = vdwg.mxu0
    %v4655 = vadd.f32 %v4398, %v4647
    %v4656 = vadd.f32 %v4399, %v4652
    %4657 = vst.msk [vmem:[#allocation2] sm:$0xff] %vm154, %v4655
    %4658 = vst.msk [vmem:[#allocation2 + $0x8] sm:$0xff] %vm154, %v4656
    // Predicated region
    $region34: #{tpu_custom_call.1} parent=1 // pred_check
      _
    $region35: #{tpu_custom_call.1} parent=1 // pred_check_branch
      %4660 = sbr.rel (0) target = $region37
    $region36: #{tpu_custom_call.1} parent=1 // pred_region
      %s4662 = ssub.s32 256, 256
      %4663 = vsyncadd [#allocation3], %s4662
      %s4664 = sshll.u32 [#allocation2], 4
      %s4665 = int_to_ptr.vmem [resolvable:$true] %s4664
      %4670 = dma.vmem_to_hbm [thread:$0]  %s4665, 256, %s8, [#allocation3], 128, 128, 8
    $region37: #{tpu_custom_call.1} parent=1 // pred_fallthru
      _
    // Predicated region
    $region38: #{tpu_custom_call.1} parent=1 // pred_check
      _
    $region39: #{tpu_custom_call.1} parent=1 // pred_check_branch
      %4672 = sbr.rel (0) target = $region41
    $region40: #{tpu_custom_call.1} parent=1 // pred_region
      %4673 = dma.done [#allocation3], 256
    $region41: #{tpu_custom_call.1} parent=1 // pred_fallthru
      _
    %4674 = vsyncpa [#allocation3], 1

</llo_original>
